<compile_context>
chip_gen: v5e
topology: v5e:2x2
jax: 0.10.0
libtpu: 0.0.40
codegen_flags: <defaults>
</compile_context>

<pallas_src>
import math

import jax
import jax.numpy as jnp
from jax import lax
from jax.experimental import pallas as pl
from jax.experimental.pallas import tpu as pltpu  # noqa: F401  (kept for TPU-specific tuning hooks)

# ----------------------------- configuration -------------------------------
B = 2            # batch
S = 16           # seq_len
V = 50           # vocab (synthetic sentence encoder = embedding lookup)
E = 32           # embedding_size (bi-LSTM hidden = E//2 per direction)
H = 64           # hidden_size
N_SPANS = 8      # spans_num
R_REL = 6        # number of reference relation pairs
NER_LABELS = 5
RE_LABELS = 4
NER_NEG_ID = 0
RE_NEG_ID = 0
MAX_SPAN_WIDTH = 5
WIDTH_EMB_DIM = 64
NUM_WIDTH_EMB = MAX_SPAN_WIDTH * 5
SPANS_PER_WORD = 0.6

SPAN_EMB_DIM = 2 * E + WIDTH_EMB_DIM + E          # endpoint(x,y)+width  + attentive
PAIR_REPR_IN = 3 * H + WIDTH_EMB_DIM              # [h_i, h_j, h_i*h_j, dist_emb]
PAIR_REPR_DIM = H // 4

LSTM_H = E // 2
LANE = 128                     # pad small class dims to a full vreg lane width
NEG_FILL = -1e30               # finite mask fill (true -inf would NaN fully-masked rows)


# ------------------------------ Pallas kernels ------------------------------
def _bilstm_kernel(xc_ref, wih_ref, whh_ref, b_ref, o_ref):
    """Fused bidirectional LSTM, one launch.

    xc_ref : (S*B, 2E) time-major rows [x_t | x_{S-1-t}] (bwd input pre-reversed).
    wih_ref: (2E, 8h) block weight, gate layout [i_f,i_b,f_f,f_b,g_f,g_b,o_f,o_b].
    whh_ref: (2h, 8h) block-diagonal recurrent weight (rows [h_f | h_b]).
    o_ref  : (S, B, 2h) fwd hidden in lanes 0:h, bwd hidden in lanes h:2h.

    The non-recurrent input projection is hoisted out of the serial chain as a single
    lane-dense matmul; the loop only carries one (B,2h)x(2h,8h) matmul per step."""
    S_, B_, H2 = o_ref.shape
    hh = H2 // 2
    pre = (jnp.dot(xc_ref[...], wih_ref[...], preferred_element_type=jnp.float32)
           + b_ref[...])                                   # (S*B, 8h) gate pre-activations
    whh = whh_ref[...]
    h = jnp.zeros((B_, 2 * hh), jnp.float32)               # [h_f | h_b]
    c = jnp.zeros((B_, 2 * hh), jnp.float32)               # [c_f | c_b]
    for t in range(S_):                                    # static unroll: chain visible to LLO
        g = pre[t * B_:(t + 1) * B_] + jnp.dot(h, whh, preferred_element_type=jnp.float32)
        sg = jax.nn.sigmoid(g)                             # one EUP pass over all 8h lanes
        i = sg[:, 0:2 * hh]
        f = sg[:, 2 * hh:4 * hh]
        o = sg[:, 6 * hh:8 * hh]
        gg = jnp.tanh(g[:, 4 * hh:6 * hh])
        c = f * c + i * gg
        h = o * jnp.tanh(c)
        o_ref[t, :, 0:hh] = h[:, 0:hh]                     # fwd hidden at time t
        o_ref[S_ - 1 - t, :, hh:2 * hh] = h[:, hh:2 * hh]  # bwd hidden at time S-1-t


def _masked_xent_sum(logits_padded, num_classes, tw):
    """sequence_cross_entropy_with_logits(average='sum') on class-padded logits.
    tw[m, c] = row_weight[m] * onehot(label[m])[c] (zero in padded classes)."""
    cls = lax.broadcasted_iota(jnp.int32, logits_padded.shape, 1)
    ml = jnp.where(cls < num_classes, logits_padded, NEG_FILL)
    m = jnp.max(ml, axis=-1, keepdims=True)
    lse = jnp.log(jnp.sum(jnp.exp(ml - m), axis=-1, keepdims=True)) + m
    return -jnp.sum(tw * (ml - lse))


def _ner_attn_kernel(emb_ref, attw_ref, stg_ref, eng_ref, sm_ref,
                     s_ref, e_ref, w_ref,
                     w1s_ref, w1e_ref, w1w_ref, w1a_ref, b1_ref,
                     w2_ref, b2_ref, wo_ref, bo_ref, tw_ref,
                     semb_ref, logits_ref, loss_ref):
    """SelfAttentiveSpanExtractor + span_layer FF + NER head + masked CE('sum'), fused.

    Batch is folded into rows (M = B*N spans, positions = B*S).  The attention score
    bias is dropped (softmax is shift-invariant).  span_emb is written once (lanes
    [start|end|width|att]) for the downstream pair path; the class dim is padded to
    128 lanes so the logits store is lane-dense."""
    emb = emb_ref[...]                                     # (B*S, E)
    bs = emb.shape[0]
    m_rows = sm_ref.shape[0]
    sm = sm_ref[...]                                       # (M, 1) span mask
    e_dim = emb.shape[1]
    w_dim = w_ref.shape[1]

    # --- attentive span extraction (no transposed embedding input needed) ---
    scores = lax.dot_general(attw_ref[...], emb, (((1,), (1,)), ((), ())),
                             preferred_element_type=jnp.float32)      # (1, B*S)
    pos = lax.broadcasted_iota(jnp.int32, (m_rows, bs), 1)
    in_span = (pos >= stg_ref[...]) & (pos <= eng_ref[...])           # global-position span mask
    att_logits = jnp.where(in_span, scores, NEG_FILL)
    mmax = jnp.max(att_logits, axis=-1, keepdims=True)
    p = jnp.exp(att_logits - mmax)
    wsoft = p / jnp.sum(p, axis=-1, keepdims=True)
    att = jnp.dot(wsoft, emb, preferred_element_type=jnp.float32) * sm    # (M, E)

    # masked endpoint / width components
    s_e = s_ref[...] * sm
    e_e = e_ref[...] * sm
    wd_e = w_ref[...] * sm

    # emit span_emb once for the pair path (static lane-slice stores)
    semb_ref[:, 0:e_dim] = s_e
    semb_ref[:, e_dim:2 * e_dim] = e_e
    semb_ref[:, 2 * e_dim:2 * e_dim + w_dim] = wd_e
    semb_ref[:, 2 * e_dim + w_dim:] = att

    # --- span_layer FF (layer-1 weight pre-split per segment: avoids in-kernel concat) ---
    h = (jnp.dot(s_e, w1s_ref[...], preferred_element_type=jnp.float32)
         + jnp.dot(e_e, w1e_ref[...], preferred_element_type=jnp.float32)
         + jnp.dot(wd_e, w1w_ref[...], preferred_element_type=jnp.float32)
         + jnp.dot(att, w1a_ref[...], preferred_element_type=jnp.float32)
         + b1_ref[...])
    h = jnp.maximum(h, 0.0)
    h = jnp.maximum(
        jnp.dot(h, w2_ref[...], preferred_element_type=jnp.float32) + b2_ref[...], 0.0)
    logits = jnp.dot(h, wo_ref[...], preferred_element_type=jnp.float32) + bo_ref[...]
    logits_ref[...] = logits
    loss = _masked_xent_sum(logits, NER_LABELS, tw_ref[...])
    loss_ref[...] = jnp.zeros(loss_ref.shape, jnp.float32) + loss      # lane-dense scalar row


def _pair_kernel(x_ref, wdr_ref, bdr_ref, pc_ref, dist_ref,
                 wr1p_ref, wr1c_ref, wr1x_ref, wr1d_ref, br1_ref,
                 wr2_ref, br2_ref, wo_ref, bo_ref, tw_ref,
                 logits_ref, loss_ref):
    """SpanPairPairedLayer + RE head + masked CE('sum') fused: dim_reduce ->
    stacked parent/child one-hot gather (single matmul, row split) ->
    [parent, child, parent*child, dist] via 4 split-weight matmuls (no in-kernel
    concat) -> repr FF (2x) -> padded logits + loss."""
    red = jnp.maximum(
        jnp.dot(x_ref[...], wdr_ref[...], preferred_element_type=jnp.float32) + bdr_ref[...], 0.0)
    pcred = jnp.dot(pc_ref[...], red, preferred_element_type=jnp.float32)   # (2M, H)
    m_rows = tw_ref.shape[0]
    parent = pcred[:m_rows]
    child = pcred[m_rows:]
    h = (jnp.dot(parent, wr1p_ref[...], preferred_element_type=jnp.float32)
         + jnp.dot(child, wr1c_ref[...], preferred_element_type=jnp.float32)
         + jnp.dot(parent * child, wr1x_ref[...], preferred_element_type=jnp.float32)
         + jnp.dot(dist_ref[...], wr1d_ref[...], preferred_element_type=jnp.float32)
         + br1_ref[...])
    h = jnp.maximum(h, 0.0)
    h = jnp.maximum(
        jnp.dot(h, wr2_ref[...], preferred_element_type=jnp.float32) + br2_ref[...], 0.0)
    logits = jnp.dot(h, wo_ref[...], preferred_element_type=jnp.float32) + bo_ref[...]
    logits_ref[...] = logits
    loss = _masked_xent_sum(logits, RE_LABELS, tw_ref[...])
    loss_ref[...] = jnp.zeros(loss_ref.shape, jnp.float32) + loss


# ------------------------------ kernel wrappers ------------------------------
def pallas_bilstm(embedding, params):
    """(B,S,E) -> (B,S,2h) contextual embedding via one fused Pallas kernel."""
    Bd, Sd, Ed = embedding.shape
    hh = Ed // 2
    x_tm = jnp.transpose(embedding, (1, 0, 2)).astype(jnp.float32)      # (S, B, E) time-major
    # rows [x_t | x_{S-1-t}]: lets the hoisted projection produce fwd and bwd gates together
    x_comb = jnp.concatenate([x_tm, x_tm[::-1]], axis=-1).reshape(Sd * Bd, 2 * Ed)
    ctx_tm = pl.pallas_call(
        _bilstm_kernel,
        out_shape=jax.ShapeDtypeStruct((Sd, Bd, 2 * hh), jnp.float32),
    )(x_comb, params["lstm_wih"], params["lstm_whh"], params["lstm_b"])
    return jnp.transpose(ctx_tm, (1, 0, 2))                             # (B, S, 2h)


def pallas_ner_attn_head(embedding, contextual, starts, ends, span_mask, ner_labels, params):
    """Fused attentive-span extractor + span FF + NER projection + CE('sum') loss.
    Returns (span_emb, span_logits, span_loss)."""
    Bd, Sd, Ed = embedding.shape
    Nd = starts.shape[1]
    M = Bd * Nd
    # endpoint components (gathers stay in XLA)
    start_emb = gather_rows(contextual, starts).reshape(M, -1).astype(jnp.float32)
    end_emb = gather_rows(contextual, ends).reshape(M, -1).astype(jnp.float32)
    widths = ends - starts
    width_emb = params["width_emb"][jnp.clip(widths, 0, NUM_WIDTH_EMB - 1)].reshape(M, -1)
    # global (batch-folded) span boundaries for the attention mask
    b_off = (jnp.arange(Bd, dtype=jnp.int32) * Sd)[:, None]
    stg = (starts.astype(jnp.int32) + b_off).reshape(M, 1)
    eng = (ends.astype(jnp.int32) + b_off).reshape(M, 1)
    sm = span_mask.reshape(M, 1).astype(jnp.float32)
    tw = jax.nn.one_hot(ner_labels.reshape(M), LANE, dtype=jnp.float32) * sm
    emb_flat = embedding.reshape(Bd * Sd, Ed).astype(jnp.float32)

    semb, logits_pad, loss_row = pl.pallas_call(
        _ner_attn_kernel,
        out_shape=(jax.ShapeDtypeStruct((M, SPAN_EMB_DIM), jnp.float32),
                   jax.ShapeDtypeStruct((M, LANE), jnp.float32),
                   jax.ShapeDtypeStruct((1, LANE), jnp.float32)),
    )(emb_flat, params["att_w_row"], stg, eng, sm,
      start_emb, end_emb, width_emb,
      params["w1_s"], params["w1_e"], params["w1_w"], params["w1_a"], params["b1_row"],
      params["w2"], params["b2_row"], params["ner_w_pad"], params["ner_b_pad"], tw)

    span_emb = semb.reshape(Bd, Nd, SPAN_EMB_DIM)
    span_logits = logits_pad[:, :NER_LABELS].reshape(Bd, Nd, NER_LABELS)
    return span_emb, span_logits, loss_row[0, 0]


def pallas_pair_head(span_emb_sel, parent_int, child_int, dist_emb, params,
                     pair_labels, pair_weights):
    """Fused SpanPairPairedLayer + RE projection + CE('sum') loss."""
    Bd, k, D = span_emb_sel.shape
    P = parent_int.shape[1]
    M = Bd * P
    x = span_emb_sel.reshape(Bd * k, D).astype(jnp.float32)
    # parent/child one-hot gather matrices stacked into one operand (single MXU pass)
    b_off = jnp.arange(Bd, dtype=jnp.int32)[:, None] * k
    po = jax.nn.one_hot((parent_int + b_off).reshape(M), Bd * k, dtype=jnp.float32)
    co = jax.nn.one_hot((child_int + b_off).reshape(M), Bd * k, dtype=jnp.float32)
    pc = jnp.concatenate([po, co], axis=0)                                # (2M, B*k)
    tw = (jax.nn.one_hot(pair_labels.reshape(M), LANE, dtype=jnp.float32)
          * pair_weights.reshape(M, 1).astype(jnp.float32))
    logits_pad, loss_row = pl.pallas_call(
        _pair_kernel,
        out_shape=(jax.ShapeDtypeStruct((M, LANE), jnp.float32),
                   jax.ShapeDtypeStruct((1, LANE), jnp.float32)),
    )(x, params["wdr"], params["bdr_row"], pc, dist_emb.reshape(M, -1).astype(jnp.float32),
      params["wr1_p"], params["wr1_c"], params["wr1_x"], params["wr1_d"], params["br1_row"],
      params["wr2"], params["br2_row"], params["re_w_pad"], params["re_b_pad"], tw)
    pair_logits = logits_pad[:, :RE_LABELS].reshape(Bd, P, RE_LABELS)
    return pair_logits, loss_row[0, 0]


# ------------------------------ glue helpers --------------------------------
def gather_rows(seq, idx):
    """seq: (B, L, D), idx: (B, K) -> (B, K, D)."""
    Bd, K = idx.shape
    D = seq.shape[-1]
    return jnp.take_along_axis(seq, jnp.broadcast_to(idx[:, :, None], (Bd, K, D)), axis=1)


# ------------------------------ forward pass ---------------------------------
def joint_ie_forward(params, tokens, mask, converted_spans, span_mask, ner_labels,
                     relation_indices, relation_mask, relation_labels):
    Bd, Sd = tokens.shape
    Nd = converted_spans.shape[1]

    # sentence encoder (synthetic): embedding lookup, masked (gather stays in XLA)
    embedding = params["embed"][tokens] * mask[..., None]

    # contextual layer: fused bi-LSTM kernel
    contextual = pallas_bilstm(embedding, params)

    starts = converted_spans[..., 0]
    ends = converted_spans[..., 1]

    # --- attentive span extractor + NER head + loss fused (eval: span_mask_subset == span_mask) ---
    span_emb, span_logits, span_loss = pallas_ner_attn_head(
        embedding, contextual, starts, ends, span_mask, ner_labels, params)

    span_prob = jax.nn.softmax(span_logits, axis=-1)
    span_pred = jnp.argmax(span_prob, axis=-1)
    span_prob_masked = span_prob + (1.0 - span_mask)[..., None]   # prob_mask(value=1.0)
    span_neg_logit = span_logits[:, :, NER_NEG_ID]
    span_len = ends - starts + 1
    # TODO(synk): CategoricalAccuracy / PrecisionRecallF1 stateful metrics not ported.

    # --- e2e span-pair construction (top-k / sort / scatter glue stays in XLA) ---
    k = max(min(int(math.floor(SPANS_PER_WORD * Sd)), Nd), 1)
    neg_prob = span_prob_masked[:, :, NER_NEG_ID]
    _, top_ind = jax.lax.top_k(-neg_prob, k)
    top_ind = jnp.sort(top_ind, axis=-1)
    top_ind_mask = top_ind < jnp.sum(span_mask, axis=-1, keepdims=True).astype(jnp.int32)

    batch_idx = jnp.arange(Bd)[:, None]
    converter = jnp.zeros((Bd, Nd), jnp.int32).at[batch_idx, top_ind].set(
        jnp.broadcast_to(jnp.arange(k, dtype=jnp.int32)[None, :], (Bd, k)))

    parent = jnp.repeat(top_ind[:, :, None], k, axis=2)
    child = jnp.repeat(top_ind[:, None, :], k, axis=1)
    span_pairs = jnp.stack([parent, child], -1).reshape(Bd, k * k, 2)
    pm = (jnp.repeat(top_ind_mask[:, :, None], k, axis=2)
          & jnp.repeat(top_ind_mask[:, None, :], k, axis=1))
    span_pair_mask = pm.reshape(Bd, k * k).astype(jnp.float32)
    P = k * k

    span_pairs_internal = jnp.take_along_axis(
        converter, span_pairs.reshape(Bd, P * 2), axis=1).reshape(Bd, P, 2)

    # metric side-quantities (mirrored, unused for loss)
    span_pair_neg_logit = jnp.take_along_axis(
        span_neg_logit, span_pairs.reshape(Bd, P * 2), axis=1).reshape(Bd, P, 2).sum(-1)
    span_pair_len = jnp.take_along_axis(
        span_len, span_pairs.reshape(Bd, P * 2), axis=1).reshape(Bd, P, 2).max(-1)

    span_emb_for_pair = gather_rows(span_emb, top_ind)            # (B, k, SPAN_EMB_DIM)

    parent_int = span_pairs_internal[..., 0]
    child_int = span_pairs_internal[..., 1]
    dist = jnp.clip(jnp.abs(parent_int - child_int), 0, NUM_WIDTH_EMB - 1)
    dist_emb = params["dist_emb"][dist]                           # (B, P, WIDTH_EMB_DIM)

    # label_span_pair: match generated pairs against reference pairs (vectorized)
    span_pair_labels = jnp.full((Bd, P), RE_NEG_ID, jnp.int32)
    for j in range(relation_indices.shape[1]):
        match = ((span_pairs[:, :, 0] == relation_indices[:, j:j + 1, 0])
                 & (span_pairs[:, :, 1] == relation_indices[:, j:j + 1, 1])
                 & (relation_mask[:, j:j + 1] > 0))
        span_pair_labels = jnp.where(match, relation_labels[:, j:j + 1], span_pair_labels)

    # --- RE head + loss (fused) ---
    span_pair_logits, span_pair_loss = pallas_pair_head(
        span_emb_for_pair, parent_int, child_int, dist_emb, params,
        span_pair_labels, span_pair_mask)
    span_pair_prob = jax.nn.softmax(span_pair_logits, axis=-1)
    span_pair_pred = jnp.argmax(span_pair_prob, axis=-1)

    loss = span_loss + span_pair_loss
    return {
        "loss": loss,
        "span_loss": span_loss,
        "span_pred": span_pred,
        "span_pair_loss": span_pair_loss,
        "span_pair_pred": span_pair_pred,
        "span_pair_neg_logit": span_pair_neg_logit,
        "span_pair_len": span_pair_len,
    }


# ------------------------------ parameter init --------------------------------
def _fuse_lstm_params(w_ih_f, w_hh_f, b_f, w_ih_b, w_hh_b, b_b):
    """Build the fused bi-LSTM weights.

    Gate layout in 8h lanes: [i_f, i_b, f_f, f_b, g_f, g_b, o_f, o_b] (each hh wide).
    wih rows: [x_t (E) | x_{S-1-t} (E)];  whh rows: [h_f (hh) | h_b (hh)] (block-diag)."""
    E_, H4 = w_ih_f.shape
    hh = H4 // 4
    wih = jnp.zeros((2 * E_, 8 * hh), jnp.float32)
    whh = jnp.zeros((2 * hh, 8 * hh), jnp.float32)
    bb = jnp.zeros((8 * hh,), jnp.float32)
    for gate in range(4):               # i, f, g, o
        col = 2 * gate * hh
        gf = slice(gate * hh, (gate + 1) * hh)
        wih = wih.at[:E_, col:col + hh].set(w_ih_f[:, gf])
        wih = wih.at[E_:, col + hh:col + 2 * hh].set(w_ih_b[:, gf])
        whh = whh.at[:hh, col:col + hh].set(w_hh_f[:, gf])
        whh = whh.at[hh:, col + hh:col + 2 * hh].set(w_hh_b[:, gf])
        bb = bb.at[col:col + hh].set(b_f[gf])
        bb = bb.at[col + hh:col + 2 * hh].set(b_b[gf])
    return wih, whh, bb.reshape(1, -1)


def init_params():
    key = jax.random.PRNGKey(42)
    ks = jax.random.split(key, 32)
    n = iter(range(32))

    def rnd(shape, scale=0.1):
        return jax.random.normal(ks[next(n)], shape, jnp.float32) * scale

    h = LSTM_H
    # raw LSTM weights (gate order i, f, g, o), then fused/reordered once here
    w_ih_f, w_hh_f, b_f = rnd((E, 4 * h)), rnd((h, 4 * h)), jnp.zeros((4 * h,), jnp.float32)
    w_ih_b, w_hh_b, b_b = rnd((E, 4 * h)), rnd((h, 4 * h)), jnp.zeros((4 * h,), jnp.float32)
    lstm_wih, lstm_whh, lstm_b = _fuse_lstm_params(w_ih_f, w_hh_f, b_f, w_ih_b, w_hh_b, b_b)

    att_w = rnd((E, 1))        # attention score bias dropped: softmax is shift-invariant
    w1, b1 = rnd((SPAN_EMB_DIM, H)), jnp.zeros((H,), jnp.float32)
    w2, b2 = rnd((H, H)), jnp.zeros((H,), jnp.float32)
    ner_w, ner_b = rnd((H, NER_LABELS)), jnp.zeros((NER_LABELS,), jnp.float32)
    wdr, bdr = rnd((SPAN_EMB_DIM, H)), jnp.zeros((H,), jnp.float32)
    wr1, br1 = rnd((PAIR_REPR_IN, PAIR_REPR_DIM)), jnp.zeros((PAIR_REPR_DIM,), jnp.float32)
    wr2, br2 = rnd((PAIR_REPR_DIM, PAIR_REPR_DIM)), jnp.zeros((PAIR_REPR_DIM,), jnp.float32)
    re_w, re_b = rnd((PAIR_REPR_DIM, RE_LABELS)), jnp.zeros((RE_LABELS,), jnp.float32)

    return {
        "embed": rnd((V, E)),
        "width_emb": rnd((NUM_WIDTH_EMB, WIDTH_EMB_DIM)),
        "dist_emb": rnd((NUM_WIDTH_EMB, WIDTH_EMB_DIM)),
        # fused bi-LSTM
        "lstm_wih": lstm_wih, "lstm_whh": lstm_whh, "lstm_b": lstm_b,
        # attention score vector as a (1, E) row
        "att_w_row": att_w.reshape(1, E),
        # span_layer layer-1 split by span_emb segment (start / end / width / att)
        "w1_s": w1[0:E], "w1_e": w1[E:2 * E],
        "w1_w": w1[2 * E:2 * E + WIDTH_EMB_DIM], "w1_a": w1[2 * E + WIDTH_EMB_DIM:],
        "b1_row": b1.reshape(1, -1),
        "w2": w2, "b2_row": b2.reshape(1, -1),
        # NER head pre-padded to 128 lanes
        "ner_w_pad": jnp.zeros((H, LANE), jnp.float32).at[:, :NER_LABELS].set(ner_w),
        "ner_b_pad": jnp.zeros((1, LANE), jnp.float32).at[0, :NER_LABELS].set(ner_b),
        # pair path: dim_reduce, repr layer-1 split ([parent|child|parent*child|dist]), RE head padded
        "wdr": wdr, "bdr_row": bdr.reshape(1, -1),
        "wr1_p": wr1[0:H], "wr1_c": wr1[H:2 * H], "wr1_x": wr1[2 * H:3 * H],
        "wr1_d": wr1[3 * H:], "br1_row": br1.reshape(1, -1),
        "wr2": wr2, "br2_row": br2.reshape(1, -1),
        "re_w_pad": jnp.zeros((PAIR_REPR_DIM, LANE), jnp.float32).at[:, :RE_LABELS].set(re_w),
        "re_b_pad": jnp.zeros((1, LANE), jnp.float32).at[0, :RE_LABELS].set(re_b),
    }


# ------------------------------ main -----------------------------------------
if __name__ == "__main__":
    params = init_params()

    key = jax.random.PRNGKey(0)
    k1, k2, k3, k4, k5, k6 = jax.random.split(key, 6)

    tokens = jax.random.randint(k1, (B, S), 0, V, dtype=jnp.int32)
    lengths = jnp.array([S, S - 2], jnp.int32)
    mask = (jnp.arange(S)[None, :] < lengths[:, None]).astype(jnp.float32)

    starts = jax.random.randint(k2, (B, N_SPANS), 0, S - MAX_SPAN_WIDTH, dtype=jnp.int32)
    widths = jax.random.randint(k3, (B, N_SPANS), 0, MAX_SPAN_WIDTH, dtype=jnp.int32)
    ends = jnp.clip(starts + widths, 0, S - 1)
    converted_spans = jnp.stack([starts, ends], axis=-1)

    n_valid_spans = jnp.array([N_SPANS, N_SPANS - 2], jnp.int32)
    span_mask = (jnp.arange(N_SPANS)[None, :] < n_valid_spans[:, None]).astype(jnp.float32)
    ner_labels = jax.random.randint(k4, (B, N_SPANS), 0, NER_LABELS, dtype=jnp.int32)

    relation_indices = jax.random.randint(k5, (B, R_REL, 2), 0, N_SPANS, dtype=jnp.int32)
    n_valid_rel = jnp.array([R_REL, R_REL - 2], jnp.int32)
    relation_mask = (jnp.arange(R_REL)[None, :] < n_valid_rel[:, None]).astype(jnp.float32)
    relation_labels = jax.random.randint(k6, (B, R_REL), 0, RE_LABELS, dtype=jnp.int32)

    fwd = jax.jit(joint_ie_forward)   # fold all glue ops + 3 pallas_calls into one program
    out = fwd(params, tokens, mask, converted_spans, span_mask, ner_labels,
              relation_indices, relation_mask, relation_labels)
    jax.block_until_ready(out["loss"])
    print("KERNEL_OK")
</pallas_src>

<mosaic_0001>
module attributes {stable_mosaic.version = 11 : i64} {
  func.func @_bilstm_kernel(%arg0: memref<32x64xf32, #tpu.memory_space<vmem>>, %arg1: memref<64x128xf32, #tpu.memory_space<vmem>>, %arg2: memref<32x128xf32, #tpu.memory_space<vmem>>, %arg3: memref<1x128xf32, #tpu.memory_space<vmem>>, %arg4: memref<16x2x32xf32, #tpu.memory_space<vmem>>) attributes {dimension_semantics = [], scalar_prefetch = 0 : i64, scratch_operands = 0 : i64, tpu.core_type = #tpu.core_type<tc>} {
    %c0 = arith.constant 0 : index
    %c0_0 = arith.constant 0 : index
    %0 = vector.load %arg0[%c0, %c0_0] : memref<32x64xf32, #tpu.memory_space<vmem>>, vector<32x64xf32>
    %c0_1 = arith.constant 0 : index
    %c0_2 = arith.constant 0 : index
    %1 = vector.load %arg1[%c0_1, %c0_2] : memref<64x128xf32, #tpu.memory_space<vmem>>, vector<64x128xf32>
    %cst = arith.constant dense<0.000000e+00> : vector<32x128xf32>
    %2 = tpu.matmul %0, %1, %cst {dimension_numbers = #tpu.dot_dimension_numbers<[1], [0], [0], [1], [0, 0, 1, 1], [], []>} : vector<32x64xf32>, vector<64x128xf32>, vector<32x128xf32> -> vector<32x128xf32>
    %c0_3 = arith.constant 0 : index
    %c0_4 = arith.constant 0 : index
    %3 = vector.load %arg3[%c0_3, %c0_4] : memref<1x128xf32, #tpu.memory_space<vmem>>, vector<1x128xf32>
    %4 = vector.broadcast %3 : vector<1x128xf32> to vector<32x128xf32>
    %5 = arith.addf %2, %4 : vector<32x128xf32>
    %c0_5 = arith.constant 0 : index
    %c0_6 = arith.constant 0 : index
    %6 = vector.load %arg2[%c0_5, %c0_6] : memref<32x128xf32, #tpu.memory_space<vmem>>, vector<32x128xf32>
    %cst_7 = arith.constant 0.000000e+00 : f32
    %7 = vector.broadcast %cst_7 : f32 to vector<2x32xf32>
    %cst_8 = arith.constant 0.000000e+00 : f32
    %8 = vector.broadcast %cst_8 : f32 to vector<2x32xf32>
    %9 = vector.extract_strided_slice %5 {offsets = [0, 0], sizes = [2, 128], strides = [1, 1]} : vector<32x128xf32> to vector<2x128xf32>
    %cst_9 = arith.constant dense<0.000000e+00> : vector<2x128xf32>
    %10 = tpu.matmul %7, %6, %cst_9 {dimension_numbers = #tpu.dot_dimension_numbers<[1], [0], [0], [1], [0, 0, 1, 1], [], []>} : vector<2x32xf32>, vector<32x128xf32>, vector<2x128xf32> -> vector<2x128xf32>
    %11 = arith.addf %9, %10 : vector<2x128xf32>
    %12 = arith.negf %11 : vector<2x128xf32>
    %13 = math.exp %12 : vector<2x128xf32>
    %cst_10 = arith.constant 1.000000e+00 : f32
    %14 = vector.broadcast %cst_10 : f32 to vector<2x128xf32>
    %15 = arith.addf %14, %13 : vector<2x128xf32>
    %16 = arith.divf %14, %15 : vector<2x128xf32>
    %17 = vector.extract_strided_slice %16 {offsets = [0, 0], sizes = [2, 32], strides = [1, 1]} : vector<2x128xf32> to vector<2x32xf32>
    %18 = vector.extract_strided_slice %16 {offsets = [0, 32], sizes = [2, 32], strides = [1, 1]} : vector<2x128xf32> to vector<2x32xf32>
    %19 = vector.extract_strided_slice %16 {offsets = [0, 96], sizes = [2, 32], strides = [1, 1]} : vector<2x128xf32> to vector<2x32xf32>
    %20 = vector.extract_strided_slice %11 {offsets = [0, 64], sizes = [2, 32], strides = [1, 1]} : vector<2x128xf32> to vector<2x32xf32>
    %21 = math.tanh %20 : vector<2x32xf32>
    %22 = arith.mulf %18, %8 : vector<2x32xf32>
    %23 = arith.mulf %17, %21 : vector<2x32xf32>
    %24 = arith.addf %22, %23 : vector<2x32xf32>
    %25 = math.tanh %24 : vector<2x32xf32>
    %26 = arith.mulf %19, %25 : vector<2x32xf32>
    %27 = vector.extract_strided_slice %26 {offsets = [0, 0], sizes = [2, 16], strides = [1, 1]} : vector<2x32xf32> to vector<2x16xf32>
    %c0_11 = arith.constant 0 : index
    %c0_12 = arith.constant 0 : index
    %c0_13 = arith.constant 0 : index
    %28 = vector.load %arg4[%c0_11, %c0_12, %c0_13] : memref<16x2x32xf32, #tpu.memory_space<vmem>>, vector<1x2x16xf32>
    %29 = vector.shape_cast %28 : vector<1x2x16xf32> to vector<2x16xf32>
    %30 = vector.shape_cast %27 : vector<2x16xf32> to vector<1x2x16xf32>
    tpu.vector_store %arg4[%c0_11, %c0_12, %c0_13], %30 {strides = array<i32>} : memref<16x2x32xf32, #tpu.memory_space<vmem>>, vector<1x2x16xf32>,
    %31 = vector.extract_strided_slice %26 {offsets = [0, 16], sizes = [2, 16], strides = [1, 1]} : vector<2x32xf32> to vector<2x16xf32>
    %c15 = arith.constant 15 : index
    %c0_14 = arith.constant 0 : index
    %c16 = arith.constant 16 : index
    %32 = vector.load %arg4[%c15, %c0_14, %c16] : memref<16x2x32xf32, #tpu.memory_space<vmem>>, vector<1x2x16xf32>
    %33 = vector.shape_cast %32 : vector<1x2x16xf32> to vector<2x16xf32>
    %34 = vector.shape_cast %31 : vector<2x16xf32> to vector<1x2x16xf32>
    tpu.vector_store %arg4[%c15, %c0_14, %c16], %34 {strides = array<i32>} : memref<16x2x32xf32, #tpu.memory_space<vmem>>, vector<1x2x16xf32>,
    %35 = vector.extract_strided_slice %5 {offsets = [2, 0], sizes = [2, 128], strides = [1, 1]} : vector<32x128xf32> to vector<2x128xf32>
    %cst_15 = arith.constant dense<0.000000e+00> : vector<2x128xf32>
    %36 = tpu.matmul %26, %6, %cst_15 {dimension_numbers = #tpu.dot_dimension_numbers<[1], [0], [0], [1], [0, 0, 1, 1], [], []>} : vector<2x32xf32>, vector<32x128xf32>, vector<2x128xf32> -> vector<2x128xf32>
    %37 = arith.addf %35, %36 : vector<2x128xf32>
    %38 = arith.negf %37 : vector<2x128xf32>
    %39 = math.exp %38 : vector<2x128xf32>
    %cst_16 = arith.constant 1.000000e+00 : f32
    %40 = vector.broadcast %cst_16 : f32 to vector<2x128xf32>
    %41 = arith.addf %40, %39 : vector<2x128xf32>
    %42 = arith.divf %40, %41 : vector<2x128xf32>
    %43 = vector.extract_strided_slice %42 {offsets = [0, 0], sizes = [2, 32], strides = [1, 1]} : vector<2x128xf32> to vector<2x32xf32>
    %44 = vector.extract_strided_slice %42 {offsets = [0, 32], sizes = [2, 32], strides = [1, 1]} : vector<2x128xf32> to vector<2x32xf32>
    %45 = vector.extract_strided_slice %42 {offsets = [0, 96], sizes = [2, 32], strides = [1, 1]} : vector<2x128xf32> to vector<2x32xf32>
    %46 = vector.extract_strided_slice %37 {offsets = [0, 64], sizes = [2, 32], strides = [1, 1]} : vector<2x128xf32> to vector<2x32xf32>
    %47 = math.tanh %46 : vector<2x32xf32>
    %48 = arith.mulf %44, %24 : vector<2x32xf32>
    %49 = arith.mulf %43, %47 : vector<2x32xf32>
    %50 = arith.addf %48, %49 : vector<2x32xf32>
    %51 = math.tanh %50 : vector<2x32xf32>
    %52 = arith.mulf %45, %51 : vector<2x32xf32>
    %53 = vector.extract_strided_slice %52 {offsets = [0, 0], sizes = [2, 16], strides = [1, 1]} : vector<2x32xf32> to vector<2x16xf32>
    %c1 = arith.constant 1 : index
    %c0_17 = arith.constant 0 : index
    %c0_18 = arith.constant 0 : index
    %54 = vector.load %arg4[%c1, %c0_17, %c0_18] : memref<16x2x32xf32, #tpu.memory_space<vmem>>, vector<1x2x16xf32>
    %55 = vector.shape_cast %54 : vector<1x2x16xf32> to vector<2x16xf32>
    %56 = vector.shape_cast %53 : vector<2x16xf32> to vector<1x2x16xf32>
    tpu.vector_store %arg4[%c1, %c0_17, %c0_18], %56 {strides = array<i32>} : memref<16x2x32xf32, #tpu.memory_space<vmem>>, vector<1x2x16xf32>,
    %57 = vector.extract_strided_slice %52 {offsets = [0, 16], sizes = [2, 16], strides = [1, 1]} : vector<2x32xf32> to vector<2x16xf32>
    %c14 = arith.constant 14 : index
    %c0_19 = arith.constant 0 : index
    %c16_20 = arith.constant 16 : index
    %58 = vector.load %arg4[%c14, %c0_19, %c16_20] : memref<16x2x32xf32, #tpu.memory_space<vmem>>, vector<1x2x16xf32>
    %59 = vector.shape_cast %58 : vector<1x2x16xf32> to vector<2x16xf32>
    %60 = vector.shape_cast %57 : vector<2x16xf32> to vector<1x2x16xf32>
    tpu.vector_store %arg4[%c14, %c0_19, %c16_20], %60 {strides = array<i32>} : memref<16x2x32xf32, #tpu.memory_space<vmem>>, vector<1x2x16xf32>,
    %61 = vector.extract_strided_slice %5 {offsets = [4, 0], sizes = [2, 128], strides = [1, 1]} : vector<32x128xf32> to vector<2x128xf32>
    %cst_21 = arith.constant dense<0.000000e+00> : vector<2x128xf32>
    %62 = tpu.matmul %52, %6, %cst_21 {dimension_numbers = #tpu.dot_dimension_numbers<[1], [0], [0], [1], [0, 0, 1, 1], [], []>} : vector<2x32xf32>, vector<32x128xf32>, vector<2x128xf32> -> vector<2x128xf32>
    %63 = arith.addf %61, %62 : vector<2x128xf32>
    %64 = arith.negf %63 : vector<2x128xf32>
    %65 = math.exp %64 : vector<2x128xf32>
    %cst_22 = arith.constant 1.000000e+00 : f32
    %66 = vector.broadcast %cst_22 : f32 to vector<2x128xf32>
    %67 = arith.addf %66, %65 : vector<2x128xf32>
    %68 = arith.divf %66, %67 : vector<2x128xf32>
    %69 = vector.extract_strided_slice %68 {offsets = [0, 0], sizes = [2, 32], strides = [1, 1]} : vector<2x128xf32> to vector<2x32xf32>
    %70 = vector.extract_strided_slice %68 {offsets = [0, 32], sizes = [2, 32], strides = [1, 1]} : vector<2x128xf32> to vector<2x32xf32>
    %71 = vector.extract_strided_slice %68 {offsets = [0, 96], sizes = [2, 32], strides = [1, 1]} : vector<2x128xf32> to vector<2x32xf32>
    %72 = vector.extract_strided_slice %63 {offsets = [0, 64], sizes = [2, 32], strides = [1, 1]} : vector<2x128xf32> to vector<2x32xf32>
    %73 = math.tanh %72 : vector<2x32xf32>
    %74 = arith.mulf %70, %50 : vector<2x32xf32>
    %75 = arith.mulf %69, %73 : vector<2x32xf32>
    %76 = arith.addf %74, %75 : vector<2x32xf32>
    %77 = math.tanh %76 : vector<2x32xf32>
    %78 = arith.mulf %71, %77 : vector<2x32xf32>
    %79 = vector.extract_strided_slice %78 {offsets = [0, 0], sizes = [2, 16], strides = [1, 1]} : vector<2x32xf32> to vector<2x16xf32>
    %c2 = arith.constant 2 : index
    %c0_23 = arith.constant 0 : index
    %c0_24 = arith.constant 0 : index
    %80 = vector.load %arg4[%c2, %c0_23, %c0_24] : memref<16x2x32xf32, #tpu.memory_space<vmem>>, vector<1x2x16xf32>
    %81 = vector.shape_cast %80 : vector<1x2x16xf32> to vector<2x16xf32>
    %82 = vector.shape_cast %79 : vector<2x16xf32> to vector<1x2x16xf32>
    tpu.vector_store %arg4[%c2, %c0_23, %c0_24], %82 {strides = array<i32>} : memref<16x2x32xf32, #tpu.memory_space<vmem>>, vector<1x2x16xf32>,
    %83 = vector.extract_strided_slice %78 {offsets = [0, 16], sizes = [2, 16], strides = [1, 1]} : vector<2x32xf32> to vector<2x16xf32>
    %c13 = arith.constant 13 : index
    %c0_25 = arith.constant 0 : index
    %c16_26 = arith.constant 16 : index
    %84 = vector.load %arg4[%c13, %c0_25, %c16_26] : memref<16x2x32xf32, #tpu.memory_space<vmem>>, vector<1x2x16xf32>
    %85 = vector.shape_cast %84 : vector<1x2x16xf32> to vector<2x16xf32>
    %86 = vector.shape_cast %83 : vector<2x16xf32> to vector<1x2x16xf32>
    tpu.vector_store %arg4[%c13, %c0_25, %c16_26], %86 {strides = array<i32>} : memref<16x2x32xf32, #tpu.memory_space<vmem>>, vector<1x2x16xf32>,
    %87 = vector.extract_strided_slice %5 {offsets = [6, 0], sizes = [2, 128], strides = [1, 1]} : vector<32x128xf32> to vector<2x128xf32>
    %cst_27 = arith.constant dense<0.000000e+00> : vector<2x128xf32>
    %88 = tpu.matmul %78, %6, %cst_27 {dimension_numbers = #tpu.dot_dimension_numbers<[1], [0], [0], [1], [0, 0, 1, 1], [], []>} : vector<2x32xf32>, vector<32x128xf32>, vector<2x128xf32> -> vector<2x128xf32>
    %89 = arith.addf %87, %88 : vector<2x128xf32>
    %90 = arith.negf %89 : vector<2x128xf32>
    %91 = math.exp %90 : vector<2x128xf32>
    %cst_28 = arith.constant 1.000000e+00 : f32
    %92 = vector.broadcast %cst_28 : f32 to vector<2x128xf32>
    %93 = arith.addf %92, %91 : vector<2x128xf32>
    %94 = arith.divf %92, %93 : vector<2x128xf32>
    %95 = vector.extract_strided_slice %94 {offsets = [0, 0], sizes = [2, 32], strides = [1, 1]} : vector<2x128xf32> to vector<2x32xf32>
    %96 = vector.extract_strided_slice %94 {offsets = [0, 32], sizes = [2, 32], strides = [1, 1]} : vector<2x128xf32> to vector<2x32xf32>
    %97 = vector.extract_strided_slice %94 {offsets = [0, 96], sizes = [2, 32], strides = [1, 1]} : vector<2x128xf32> to vector<2x32xf32>
    %98 = vector.extract_strided_slice %89 {offsets = [0, 64], sizes = [2, 32], strides = [1, 1]} : vector<2x128xf32> to vector<2x32xf32>
    %99 = math.tanh %98 : vector<2x32xf32>
    %100 = arith.mulf %96, %76 : vector<2x32xf32>
    %101 = arith.mulf %95, %99 : vector<2x32xf32>
    %102 = arith.addf %100, %101 : vector<2x32xf32>
    %103 = math.tanh %102 : vector<2x32xf32>
    %104 = arith.mulf %97, %103 : vector<2x32xf32>
    %105 = vector.extract_strided_slice %104 {offsets = [0, 0], sizes = [2, 16], strides = [1, 1]} : vector<2x32xf32> to vector<2x16xf32>
    %c3 = arith.constant 3 : index
    %c0_29 = arith.constant 0 : index
    %c0_30 = arith.constant 0 : index
    %106 = vector.load %arg4[%c3, %c0_29, %c0_30] : memref<16x2x32xf32, #tpu.memory_space<vmem>>, vector<1x2x16xf32>
    %107 = vector.shape_cast %106 : vector<1x2x16xf32> to vector<2x16xf32>
    %108 = vector.shape_cast %105 : vector<2x16xf32> to vector<1x2x16xf32>
    tpu.vector_store %arg4[%c3, %c0_29, %c0_30], %108 {strides = array<i32>} : memref<16x2x32xf32, #tpu.memory_space<vmem>>, vector<1x2x16xf32>,
    %109 = vector.extract_strided_slice %104 {offsets = [0, 16], sizes = [2, 16], strides = [1, 1]} : vector<2x32xf32> to vector<2x16xf32>
    %c12 = arith.constant 12 : index
    %c0_31 = arith.constant 0 : index
    %c16_32 = arith.constant 16 : index
    %110 = vector.load %arg4[%c12, %c0_31, %c16_32] : memref<16x2x32xf32, #tpu.memory_space<vmem>>, vector<1x2x16xf32>
    %111 = vector.shape_cast %110 : vector<1x2x16xf32> to vector<2x16xf32>
    %112 = vector.shape_cast %109 : vector<2x16xf32> to vector<1x2x16xf32>
    tpu.vector_store %arg4[%c12, %c0_31, %c16_32], %112 {strides = array<i32>} : memref<16x2x32xf32, #tpu.memory_space<vmem>>, vector<1x2x16xf32>,
    %113 = vector.extract_strided_slice %5 {offsets = [8, 0], sizes = [2, 128], strides = [1, 1]} : vector<32x128xf32> to vector<2x128xf32>
    %cst_33 = arith.constant dense<0.000000e+00> : vector<2x128xf32>
    %114 = tpu.matmul %104, %6, %cst_33 {dimension_numbers = #tpu.dot_dimension_numbers<[1], [0], [0], [1], [0, 0, 1, 1], [], []>} : vector<2x32xf32>, vector<32x128xf32>, vector<2x128xf32> -> vector<2x128xf32>
    %115 = arith.addf %113, %114 : vector<2x128xf32>
    %116 = arith.negf %115 : vector<2x128xf32>
    %117 = math.exp %116 : vector<2x128xf32>
    %cst_34 = arith.constant 1.000000e+00 : f32
    %118 = vector.broadcast %cst_34 : f32 to vector<2x128xf32>
    %119 = arith.addf %118, %117 : vector<2x128xf32>
    %120 = arith.divf %118, %119 : vector<2x128xf32>
    %121 = vector.extract_strided_slice %120 {offsets = [0, 0], sizes = [2, 32], strides = [1, 1]} : vector<2x128xf32> to vector<2x32xf32>
    %122 = vector.extract_strided_slice %120 {offsets = [0, 32], sizes = [2, 32], strides = [1, 1]} : vector<2x128xf32> to vector<2x32xf32>
    %123 = vector.extract_strided_slice %120 {offsets = [0, 96], sizes = [2, 32], strides = [1, 1]} : vector<2x128xf32> to vector<2x32xf32>
    %124 = vector.extract_strided_slice %115 {offsets = [0, 64], sizes = [2, 32], strides = [1, 1]} : vector<2x128xf32> to vector<2x32xf32>
    %125 = math.tanh %124 : vector<2x32xf32>
    %126 = arith.mulf %122, %102 : vector<2x32xf32>
    %127 = arith.mulf %121, %125 : vector<2x32xf32>
    %128 = arith.addf %126, %127 : vector<2x32xf32>
    %129 = math.tanh %128 : vector<2x32xf32>
    %130 = arith.mulf %123, %129 : vector<2x32xf32>
    %131 = vector.extract_strided_slice %130 {offsets = [0, 0], sizes = [2, 16], strides = [1, 1]} : vector<2x32xf32> to vector<2x16xf32>
    %c4 = arith.constant 4 : index
    %c0_35 = arith.constant 0 : index
    %c0_36 = arith.constant 0 : index
    %132 = vector.load %arg4[%c4, %c0_35, %c0_36] : memref<16x2x32xf32, #tpu.memory_space<vmem>>, vector<1x2x16xf32>
    %133 = vector.shape_cast %132 : vector<1x2x16xf32> to vector<2x16xf32>
    %134 = vector.shape_cast %131 : vector<2x16xf32> to vector<1x2x16xf32>
    tpu.vector_store %arg4[%c4, %c0_35, %c0_36], %134 {strides = array<i32>} : memref<16x2x32xf32, #tpu.memory_space<vmem>>, vector<1x2x16xf32>,
    %135 = vector.extract_strided_slice %130 {offsets = [0, 16], sizes = [2, 16], strides = [1, 1]} : vector<2x32xf32> to vector<2x16xf32>
    %c11 = arith.constant 11 : index
    %c0_37 = arith.constant 0 : index
    %c16_38 = arith.constant 16 : index
    %136 = vector.load %arg4[%c11, %c0_37, %c16_38] : memref<16x2x32xf32, #tpu.memory_space<vmem>>, vector<1x2x16xf32>
    %137 = vector.shape_cast %136 : vector<1x2x16xf32> to vector<2x16xf32>
    %138 = vector.shape_cast %135 : vector<2x16xf32> to vector<1x2x16xf32>
    tpu.vector_store %arg4[%c11, %c0_37, %c16_38], %138 {strides = array<i32>} : memref<16x2x32xf32, #tpu.memory_space<vmem>>, vector<1x2x16xf32>,
    %139 = vector.extract_strided_slice %5 {offsets = [10, 0], sizes = [2, 128], strides = [1, 1]} : vector<32x128xf32> to vector<2x128xf32>
    %cst_39 = arith.constant dense<0.000000e+00> : vector<2x128xf32>
    %140 = tpu.matmul %130, %6, %cst_39 {dimension_numbers = #tpu.dot_dimension_numbers<[1], [0], [0], [1], [0, 0, 1, 1], [], []>} : vector<2x32xf32>, vector<32x128xf32>, vector<2x128xf32> -> vector<2x128xf32>
    %141 = arith.addf %139, %140 : vector<2x128xf32>
    %142 = arith.negf %141 : vector<2x128xf32>
    %143 = math.exp %142 : vector<2x128xf32>
    %cst_40 = arith.constant 1.000000e+00 : f32
    %144 = vector.broadcast %cst_40 : f32 to vector<2x128xf32>
    %145 = arith.addf %144, %143 : vector<2x128xf32>
    %146 = arith.divf %144, %145 : vector<2x128xf32>
    %147 = vector.extract_strided_slice %146 {offsets = [0, 0], sizes = [2, 32], strides = [1, 1]} : vector<2x128xf32> to vector<2x32xf32>
    %148 = vector.extract_strided_slice %146 {offsets = [0, 32], sizes = [2, 32], strides = [1, 1]} : vector<2x128xf32> to vector<2x32xf32>
    %149 = vector.extract_strided_slice %146 {offsets = [0, 96], sizes = [2, 32], strides = [1, 1]} : vector<2x128xf32> to vector<2x32xf32>
    %150 = vector.extract_strided_slice %141 {offsets = [0, 64], sizes = [2, 32], strides = [1, 1]} : vector<2x128xf32> to vector<2x32xf32>
    %151 = math.tanh %150 : vector<2x32xf32>
    %152 = arith.mulf %148, %128 : vector<2x32xf32>
    %153 = arith.mulf %147, %151 : vector<2x32xf32>
    %154 = arith.addf %152, %153 : vector<2x32xf32>
    %155 = math.tanh %154 : vector<2x32xf32>
    %156 = arith.mulf %149, %155 : vector<2x32xf32>
    %157 = vector.extract_strided_slice %156 {offsets = [0, 0], sizes = [2, 16], strides = [1, 1]} : vector<2x32xf32> to vector<2x16xf32>
    %c5 = arith.constant 5 : index
    %c0_41 = arith.constant 0 : index
    %c0_42 = arith.constant 0 : index
    %158 = vector.load %arg4[%c5, %c0_41, %c0_42] : memref<16x2x32xf32, #tpu.memory_space<vmem>>, vector<1x2x16xf32>
    %159 = vector.shape_cast %158 : vector<1x2x16xf32> to vector<2x16xf32>
    %160 = vector.shape_cast %157 : vector<2x16xf32> to vector<1x2x16xf32>
    tpu.vector_store %arg4[%c5, %c0_41, %c0_42], %160 {strides = array<i32>} : memref<16x2x32xf32, #tpu.memory_space<vmem>>, vector<1x2x16xf32>,
    %161 = vector.extract_strided_slice %156 {offsets = [0, 16], sizes = [2, 16], strides = [1, 1]} : vector<2x32xf32> to vector<2x16xf32>
    %c10 = arith.constant 10 : index
    %c0_43 = arith.constant 0 : index
    %c16_44 = arith.constant 16 : index
    %162 = vector.load %arg4[%c10, %c0_43, %c16_44] : memref<16x2x32xf32, #tpu.memory_space<vmem>>, vector<1x2x16xf32>
    %163 = vector.shape_cast %162 : vector<1x2x16xf32> to vector<2x16xf32>
    %164 = vector.shape_cast %161 : vector<2x16xf32> to vector<1x2x16xf32>
    tpu.vector_store %arg4[%c10, %c0_43, %c16_44], %164 {strides = array<i32>} : memref<16x2x32xf32, #tpu.memory_space<vmem>>, vector<1x2x16xf32>,
    %165 = vector.extract_strided_slice %5 {offsets = [12, 0], sizes = [2, 128], strides = [1, 1]} : vector<32x128xf32> to vector<2x128xf32>
    %cst_45 = arith.constant dense<0.000000e+00> : vector<2x128xf32>
    %166 = tpu.matmul %156, %6, %cst_45 {dimension_numbers = #tpu.dot_dimension_numbers<[1], [0], [0], [1], [0, 0, 1, 1], [], []>} : vector<2x32xf32>, vector<32x128xf32>, vector<2x128xf32> -> vector<2x128xf32>
    %167 = arith.addf %165, %166 : vector<2x128xf32>
    %168 = arith.negf %167 : vector<2x128xf32>
    %169 = math.exp %168 : vector<2x128xf32>
    %cst_46 = arith.constant 1.000000e+00 : f32
    %170 = vector.broadcast %cst_46 : f32 to vector<2x128xf32>
    %171 = arith.addf %170, %169 : vector<2x128xf32>
    %172 = arith.divf %170, %171 : vector<2x128xf32>
    %173 = vector.extract_strided_slice %172 {offsets = [0, 0], sizes = [2, 32], strides = [1, 1]} : vector<2x128xf32> to vector<2x32xf32>
    %174 = vector.extract_strided_slice %172 {offsets = [0, 32], sizes = [2, 32], strides = [1, 1]} : vector<2x128xf32> to vector<2x32xf32>
    %175 = vector.extract_strided_slice %172 {offsets = [0, 96], sizes = [2, 32], strides = [1, 1]} : vector<2x128xf32> to vector<2x32xf32>
    %176 = vector.extract_strided_slice %167 {offsets = [0, 64], sizes = [2, 32], strides = [1, 1]} : vector<2x128xf32> to vector<2x32xf32>
    %177 = math.tanh %176 : vector<2x32xf32>
    %178 = arith.mulf %174, %154 : vector<2x32xf32>
    %179 = arith.mulf %173, %177 : vector<2x32xf32>
    %180 = arith.addf %178, %179 : vector<2x32xf32>
    %181 = math.tanh %180 : vector<2x32xf32>
    %182 = arith.mulf %175, %181 : vector<2x32xf32>
    %183 = vector.extract_strided_slice %182 {offsets = [0, 0], sizes = [2, 16], strides = [1, 1]} : vector<2x32xf32> to vector<2x16xf32>
    %c6 = arith.constant 6 : index
    %c0_47 = arith.constant 0 : index
    %c0_48 = arith.constant 0 : index
    %184 = vector.load %arg4[%c6, %c0_47, %c0_48] : memref<16x2x32xf32, #tpu.memory_space<vmem>>, vector<1x2x16xf32>
    %185 = vector.shape_cast %184 : vector<1x2x16xf32> to vector<2x16xf32>
    %186 = vector.shape_cast %183 : vector<2x16xf32> to vector<1x2x16xf32>
    tpu.vector_store %arg4[%c6, %c0_47, %c0_48], %186 {strides = array<i32>} : memref<16x2x32xf32, #tpu.memory_space<vmem>>, vector<1x2x16xf32>,
    %187 = vector.extract_strided_slice %182 {offsets = [0, 16], sizes = [2, 16], strides = [1, 1]} : vector<2x32xf32> to vector<2x16xf32>
    %c9 = arith.constant 9 : index
    %c0_49 = arith.constant 0 : index
    %c16_50 = arith.constant 16 : index
    %188 = vector.load %arg4[%c9, %c0_49, %c16_50] : memref<16x2x32xf32, #tpu.memory_space<vmem>>, vector<1x2x16xf32>
    %189 = vector.shape_cast %188 : vector<1x2x16xf32> to vector<2x16xf32>
    %190 = vector.shape_cast %187 : vector<2x16xf32> to vector<1x2x16xf32>
    tpu.vector_store %arg4[%c9, %c0_49, %c16_50], %190 {strides = array<i32>} : memref<16x2x32xf32, #tpu.memory_space<vmem>>, vector<1x2x16xf32>,
    %191 = vector.extract_strided_slice %5 {offsets = [14, 0], sizes = [2, 128], strides = [1, 1]} : vector<32x128xf32> to vector<2x128xf32>
    %cst_51 = arith.constant dense<0.000000e+00> : vector<2x128xf32>
    %192 = tpu.matmul %182, %6, %cst_51 {dimension_numbers = #tpu.dot_dimension_numbers<[1], [0], [0], [1], [0, 0, 1, 1], [], []>} : vector<2x32xf32>, vector<32x128xf32>, vector<2x128xf32> -> vector<2x128xf32>
    %193 = arith.addf %191, %192 : vector<2x128xf32>
    %194 = arith.negf %193 : vector<2x128xf32>
    %195 = math.exp %194 : vector<2x128xf32>
    %cst_52 = arith.constant 1.000000e+00 : f32
    %196 = vector.broadcast %cst_52 : f32 to vector<2x128xf32>
    %197 = arith.addf %196, %195 : vector<2x128xf32>
    %198 = arith.divf %196, %197 : vector<2x128xf32>
    %199 = vector.extract_strided_slice %198 {offsets = [0, 0], sizes = [2, 32], strides = [1, 1]} : vector<2x128xf32> to vector<2x32xf32>
    %200 = vector.extract_strided_slice %198 {offsets = [0, 32], sizes = [2, 32], strides = [1, 1]} : vector<2x128xf32> to vector<2x32xf32>
    %201 = vector.extract_strided_slice %198 {offsets = [0, 96], sizes = [2, 32], strides = [1, 1]} : vector<2x128xf32> to vector<2x32xf32>
    %202 = vector.extract_strided_slice %193 {offsets = [0, 64], sizes = [2, 32], strides = [1, 1]} : vector<2x128xf32> to vector<2x32xf32>
    %203 = math.tanh %202 : vector<2x32xf32>
    %204 = arith.mulf %200, %180 : vector<2x32xf32>
    %205 = arith.mulf %199, %203 : vector<2x32xf32>
    %206 = arith.addf %204, %205 : vector<2x32xf32>
    %207 = math.tanh %206 : vector<2x32xf32>
    %208 = arith.mulf %201, %207 : vector<2x32xf32>
    %209 = vector.extract_strided_slice %208 {offsets = [0, 0], sizes = [2, 16], strides = [1, 1]} : vector<2x32xf32> to vector<2x16xf32>
    %c7 = arith.constant 7 : index
    %c0_53 = arith.constant 0 : index
    %c0_54 = arith.constant 0 : index
    %210 = vector.load %arg4[%c7, %c0_53, %c0_54] : memref<16x2x32xf32, #tpu.memory_space<vmem>>, vector<1x2x16xf32>
    %211 = vector.shape_cast %210 : vector<1x2x16xf32> to vector<2x16xf32>
    %212 = vector.shape_cast %209 : vector<2x16xf32> to vector<1x2x16xf32>
    tpu.vector_store %arg4[%c7, %c0_53, %c0_54], %212 {strides = array<i32>} : memref<16x2x32xf32, #tpu.memory_space<vmem>>, vector<1x2x16xf32>,
    %213 = vector.extract_strided_slice %208 {offsets = [0, 16], sizes = [2, 16], strides = [1, 1]} : vector<2x32xf32> to vector<2x16xf32>
    %c8 = arith.constant 8 : index
    %c0_55 = arith.constant 0 : index
    %c16_56 = arith.constant 16 : index
    %214 = vector.load %arg4[%c8, %c0_55, %c16_56] : memref<16x2x32xf32, #tpu.memory_space<vmem>>, vector<1x2x16xf32>
    %215 = vector.shape_cast %214 : vector<1x2x16xf32> to vector<2x16xf32>
    %216 = vector.shape_cast %213 : vector<2x16xf32> to vector<1x2x16xf32>
    tpu.vector_store %arg4[%c8, %c0_55, %c16_56], %216 {strides = array<i32>} : memref<16x2x32xf32, #tpu.memory_space<vmem>>, vector<1x2x16xf32>,
    %217 = vector.extract_strided_slice %5 {offsets = [16, 0], sizes = [2, 128], strides = [1, 1]} : vector<32x128xf32> to vector<2x128xf32>
    %cst_57 = arith.constant dense<0.000000e+00> : vector<2x128xf32>
    %218 = tpu.matmul %208, %6, %cst_57 {dimension_numbers = #tpu.dot_dimension_numbers<[1], [0], [0], [1], [0, 0, 1, 1], [], []>} : vector<2x32xf32>, vector<32x128xf32>, vector<2x128xf32> -> vector<2x128xf32>
    %219 = arith.addf %217, %218 : vector<2x128xf32>
    %220 = arith.negf %219 : vector<2x128xf32>
    %221 = math.exp %220 : vector<2x128xf32>
    %cst_58 = arith.constant 1.000000e+00 : f32
    %222 = vector.broadcast %cst_58 : f32 to vector<2x128xf32>
    %223 = arith.addf %222, %221 : vector<2x128xf32>
    %224 = arith.divf %222, %223 : vector<2x128xf32>
    %225 = vector.extract_strided_slice %224 {offsets = [0, 0], sizes = [2, 32], strides = [1, 1]} : vector<2x128xf32> to vector<2x32xf32>
    %226 = vector.extract_strided_slice %224 {offsets = [0, 32], sizes = [2, 32], strides = [1, 1]} : vector<2x128xf32> to vector<2x32xf32>
    %227 = vector.extract_strided_slice %224 {offsets = [0, 96], sizes = [2, 32], strides = [1, 1]} : vector<2x128xf32> to vector<2x32xf32>
    %228 = vector.extract_strided_slice %219 {offsets = [0, 64], sizes = [2, 32], strides = [1, 1]} : vector<2x128xf32> to vector<2x32xf32>
    %229 = math.tanh %228 : vector<2x32xf32>
    %230 = arith.mulf %226, %206 : vector<2x32xf32>
    %231 = arith.mulf %225, %229 : vector<2x32xf32>
    %232 = arith.addf %230, %231 : vector<2x32xf32>
    %233 = math.tanh %232 : vector<2x32xf32>
    %234 = arith.mulf %227, %233 : vector<2x32xf32>
    %235 = vector.extract_strided_slice %234 {offsets = [0, 0], sizes = [2, 16], strides = [1, 1]} : vector<2x32xf32> to vector<2x16xf32>
    %c8_59 = arith.constant 8 : index
    %c0_60 = arith.constant 0 : index
    %c0_61 = arith.constant 0 : index
    %236 = vector.load %arg4[%c8_59, %c0_60, %c0_61] : memref<16x2x32xf32, #tpu.memory_space<vmem>>, vector<1x2x16xf32>
    %237 = vector.shape_cast %236 : vector<1x2x16xf32> to vector<2x16xf32>
    %238 = vector.shape_cast %235 : vector<2x16xf32> to vector<1x2x16xf32>
    tpu.vector_store %arg4[%c8_59, %c0_60, %c0_61], %238 {strides = array<i32>} : memref<16x2x32xf32, #tpu.memory_space<vmem>>, vector<1x2x16xf32>,
    %239 = vector.extract_strided_slice %234 {offsets = [0, 16], sizes = [2, 16], strides = [1, 1]} : vector<2x32xf32> to vector<2x16xf32>
    %c7_62 = arith.constant 7 : index
    %c0_63 = arith.constant 0 : index
    %c16_64 = arith.constant 16 : index
    %240 = vector.load %arg4[%c7_62, %c0_63, %c16_64] : memref<16x2x32xf32, #tpu.memory_space<vmem>>, vector<1x2x16xf32>
    %241 = vector.shape_cast %240 : vector<1x2x16xf32> to vector<2x16xf32>
    %242 = vector.shape_cast %239 : vector<2x16xf32> to vector<1x2x16xf32>
    tpu.vector_store %arg4[%c7_62, %c0_63, %c16_64], %242 {strides = array<i32>} : memref<16x2x32xf32, #tpu.memory_space<vmem>>, vector<1x2x16xf32>,
    %243 = vector.extract_strided_slice %5 {offsets = [18, 0], sizes = [2, 128], strides = [1, 1]} : vector<32x128xf32> to vector<2x128xf32>
    %cst_65 = arith.constant dense<0.000000e+00> : vector<2x128xf32>
    %244 = tpu.matmul %234, %6, %cst_65 {dimension_numbers = #tpu.dot_dimension_numbers<[1], [0], [0], [1], [0, 0, 1, 1], [], []>} : vector<2x32xf32>, vector<32x128xf32>, vector<2x128xf32> -> vector<2x128xf32>
    %245 = arith.addf %243, %244 : vector<2x128xf32>
    %246 = arith.negf %245 : vector<2x128xf32>
    %247 = math.exp %246 : vector<2x128xf32>
    %cst_66 = arith.constant 1.000000e+00 : f32
    %248 = vector.broadcast %cst_66 : f32 to vector<2x128xf32>
    %249 = arith.addf %248, %247 : vector<2x128xf32>
    %250 = arith.divf %248, %249 : vector<2x128xf32>
    %251 = vector.extract_strided_slice %250 {offsets = [0, 0], sizes = [2, 32], strides = [1, 1]} : vector<2x128xf32> to vector<2x32xf32>
    %252 = vector.extract_strided_slice %250 {offsets = [0, 32], sizes = [2, 32], strides = [1, 1]} : vector<2x128xf32> to vector<2x32xf32>
    %253 = vector.extract_strided_slice %250 {offsets = [0, 96], sizes = [2, 32], strides = [1, 1]} : vector<2x128xf32> to vector<2x32xf32>
    %254 = vector.extract_strided_slice %245 {offsets = [0, 64], sizes = [2, 32], strides = [1, 1]} : vector<2x128xf32> to vector<2x32xf32>
    %255 = math.tanh %254 : vector<2x32xf32>
    %256 = arith.mulf %252, %232 : vector<2x32xf32>
    %257 = arith.mulf %251, %255 : vector<2x32xf32>
    %258 = arith.addf %256, %257 : vector<2x32xf32>
    %259 = math.tanh %258 : vector<2x32xf32>
    %260 = arith.mulf %253, %259 : vector<2x32xf32>
    %261 = vector.extract_strided_slice %260 {offsets = [0, 0], sizes = [2, 16], strides = [1, 1]} : vector<2x32xf32> to vector<2x16xf32>
    %c9_67 = arith.constant 9 : index
    %c0_68 = arith.constant 0 : index
    %c0_69 = arith.constant 0 : index
    %262 = vector.load %arg4[%c9_67, %c0_68, %c0_69] : memref<16x2x32xf32, #tpu.memory_space<vmem>>, vector<1x2x16xf32>
    %263 = vector.shape_cast %262 : vector<1x2x16xf32> to vector<2x16xf32>
    %264 = vector.shape_cast %261 : vector<2x16xf32> to vector<1x2x16xf32>
    tpu.vector_store %arg4[%c9_67, %c0_68, %c0_69], %264 {strides = array<i32>} : memref<16x2x32xf32, #tpu.memory_space<vmem>>, vector<1x2x16xf32>,
    %265 = vector.extract_strided_slice %260 {offsets = [0, 16], sizes = [2, 16], strides = [1, 1]} : vector<2x32xf32> to vector<2x16xf32>
    %c6_70 = arith.constant 6 : index
    %c0_71 = arith.constant 0 : index
    %c16_72 = arith.constant 16 : index
    %266 = vector.load %arg4[%c6_70, %c0_71, %c16_72] : memref<16x2x32xf32, #tpu.memory_space<vmem>>, vector<1x2x16xf32>
    %267 = vector.shape_cast %266 : vector<1x2x16xf32> to vector<2x16xf32>
    %268 = vector.shape_cast %265 : vector<2x16xf32> to vector<1x2x16xf32>
    tpu.vector_store %arg4[%c6_70, %c0_71, %c16_72], %268 {strides = array<i32>} : memref<16x2x32xf32, #tpu.memory_space<vmem>>, vector<1x2x16xf32>,
    %269 = vector.extract_strided_slice %5 {offsets = [20, 0], sizes = [2, 128], strides = [1, 1]} : vector<32x128xf32> to vector<2x128xf32>
    %cst_73 = arith.constant dense<0.000000e+00> : vector<2x128xf32>
    %270 = tpu.matmul %260, %6, %cst_73 {dimension_numbers = #tpu.dot_dimension_numbers<[1], [0], [0], [1], [0, 0, 1, 1], [], []>} : vector<2x32xf32>, vector<32x128xf32>, vector<2x128xf32> -> vector<2x128xf32>
    %271 = arith.addf %269, %270 : vector<2x128xf32>
    %272 = arith.negf %271 : vector<2x128xf32>
    %273 = math.exp %272 : vector<2x128xf32>
    %cst_74 = arith.constant 1.000000e+00 : f32
    %274 = vector.broadcast %cst_74 : f32 to vector<2x128xf32>
    %275 = arith.addf %274, %273 : vector<2x128xf32>
    %276 = arith.divf %274, %275 : vector<2x128xf32>
    %277 = vector.extract_strided_slice %276 {offsets = [0, 0], sizes = [2, 32], strides = [1, 1]} : vector<2x128xf32> to vector<2x32xf32>
    %278 = vector.extract_strided_slice %276 {offsets = [0, 32], sizes = [2, 32], strides = [1, 1]} : vector<2x128xf32> to vector<2x32xf32>
    %279 = vector.extract_strided_slice %276 {offsets = [0, 96], sizes = [2, 32], strides = [1, 1]} : vector<2x128xf32> to vector<2x32xf32>
    %280 = vector.extract_strided_slice %271 {offsets = [0, 64], sizes = [2, 32], strides = [1, 1]} : vector<2x128xf32> to vector<2x32xf32>
    %281 = math.tanh %280 : vector<2x32xf32>
    %282 = arith.mulf %278, %258 : vector<2x32xf32>
    %283 = arith.mulf %277, %281 : vector<2x32xf32>
    %284 = arith.addf %282, %283 : vector<2x32xf32>
    %285 = math.tanh %284 : vector<2x32xf32>
    %286 = arith.mulf %279, %285 : vector<2x32xf32>
    %287 = vector.extract_strided_slice %286 {offsets = [0, 0], sizes = [2, 16], strides = [1, 1]} : vector<2x32xf32> to vector<2x16xf32>
    %c10_75 = arith.constant 10 : index
    %c0_76 = arith.constant 0 : index
    %c0_77 = arith.constant 0 : index
    %288 = vector.load %arg4[%c10_75, %c0_76, %c0_77] : memref<16x2x32xf32, #tpu.memory_space<vmem>>, vector<1x2x16xf32>
    %289 = vector.shape_cast %288 : vector<1x2x16xf32> to vector<2x16xf32>
    %290 = vector.shape_cast %287 : vector<2x16xf32> to vector<1x2x16xf32>
    tpu.vector_store %arg4[%c10_75, %c0_76, %c0_77], %290 {strides = array<i32>} : memref<16x2x32xf32, #tpu.memory_space<vmem>>, vector<1x2x16xf32>,
    %291 = vector.extract_strided_slice %286 {offsets = [0, 16], sizes = [2, 16], strides = [1, 1]} : vector<2x32xf32> to vector<2x16xf32>
    %c5_78 = arith.constant 5 : index
    %c0_79 = arith.constant 0 : index
    %c16_80 = arith.constant 16 : index
    %292 = vector.load %arg4[%c5_78, %c0_79, %c16_80] : memref<16x2x32xf32, #tpu.memory_space<vmem>>, vector<1x2x16xf32>
    %293 = vector.shape_cast %292 : vector<1x2x16xf32> to vector<2x16xf32>
    %294 = vector.shape_cast %291 : vector<2x16xf32> to vector<1x2x16xf32>
    tpu.vector_store %arg4[%c5_78, %c0_79, %c16_80], %294 {strides = array<i32>} : memref<16x2x32xf32, #tpu.memory_space<vmem>>, vector<1x2x16xf32>,
    %295 = vector.extract_strided_slice %5 {offsets = [22, 0], sizes = [2, 128], strides = [1, 1]} : vector<32x128xf32> to vector<2x128xf32>
    %cst_81 = arith.constant dense<0.000000e+00> : vector<2x128xf32>
    %296 = tpu.matmul %286, %6, %cst_81 {dimension_numbers = #tpu.dot_dimension_numbers<[1], [0], [0], [1], [0, 0, 1, 1], [], []>} : vector<2x32xf32>, vector<32x128xf32>, vector<2x128xf32> -> vector<2x128xf32>
    %297 = arith.addf %295, %296 : vector<2x128xf32>
    %298 = arith.negf %297 : vector<2x128xf32>
    %299 = math.exp %298 : vector<2x128xf32>
    %cst_82 = arith.constant 1.000000e+00 : f32
    %300 = vector.broadcast %cst_82 : f32 to vector<2x128xf32>
    %301 = arith.addf %300, %299 : vector<2x128xf32>
    %302 = arith.divf %300, %301 : vector<2x128xf32>
    %303 = vector.extract_strided_slice %302 {offsets = [0, 0], sizes = [2, 32], strides = [1, 1]} : vector<2x128xf32> to vector<2x32xf32>
    %304 = vector.extract_strided_slice %302 {offsets = [0, 32], sizes = [2, 32], strides = [1, 1]} : vector<2x128xf32> to vector<2x32xf32>
    %305 = vector.extract_strided_slice %302 {offsets = [0, 96], sizes = [2, 32], strides = [1, 1]} : vector<2x128xf32> to vector<2x32xf32>
    %306 = vector.extract_strided_slice %297 {offsets = [0, 64], sizes = [2, 32], strides = [1, 1]} : vector<2x128xf32> to vector<2x32xf32>
    %307 = math.tanh %306 : vector<2x32xf32>
    %308 = arith.mulf %304, %284 : vector<2x32xf32>
    %309 = arith.mulf %303, %307 : vector<2x32xf32>
    %310 = arith.addf %308, %309 : vector<2x32xf32>
    %311 = math.tanh %310 : vector<2x32xf32>
    %312 = arith.mulf %305, %311 : vector<2x32xf32>
    %313 = vector.extract_strided_slice %312 {offsets = [0, 0], sizes = [2, 16], strides = [1, 1]} : vector<2x32xf32> to vector<2x16xf32>
    %c11_83 = arith.constant 11 : index
    %c0_84 = arith.constant 0 : index
    %c0_85 = arith.constant 0 : index
    %314 = vector.load %arg4[%c11_83, %c0_84, %c0_85] : memref<16x2x32xf32, #tpu.memory_space<vmem>>, vector<1x2x16xf32>
    %315 = vector.shape_cast %314 : vector<1x2x16xf32> to vector<2x16xf32>
    %316 = vector.shape_cast %313 : vector<2x16xf32> to vector<1x2x16xf32>
    tpu.vector_store %arg4[%c11_83, %c0_84, %c0_85], %316 {strides = array<i32>} : memref<16x2x32xf32, #tpu.memory_space<vmem>>, vector<1x2x16xf32>,
    %317 = vector.extract_strided_slice %312 {offsets = [0, 16], sizes = [2, 16], strides = [1, 1]} : vector<2x32xf32> to vector<2x16xf32>
    %c4_86 = arith.constant 4 : index
    %c0_87 = arith.constant 0 : index
    %c16_88 = arith.constant 16 : index
    %318 = vector.load %arg4[%c4_86, %c0_87, %c16_88] : memref<16x2x32xf32, #tpu.memory_space<vmem>>, vector<1x2x16xf32>
    %319 = vector.shape_cast %318 : vector<1x2x16xf32> to vector<2x16xf32>
    %320 = vector.shape_cast %317 : vector<2x16xf32> to vector<1x2x16xf32>
    tpu.vector_store %arg4[%c4_86, %c0_87, %c16_88], %320 {strides = array<i32>} : memref<16x2x32xf32, #tpu.memory_space<vmem>>, vector<1x2x16xf32>,
    %321 = vector.extract_strided_slice %5 {offsets = [24, 0], sizes = [2, 128], strides = [1, 1]} : vector<32x128xf32> to vector<2x128xf32>
    %cst_89 = arith.constant dense<0.000000e+00> : vector<2x128xf32>
    %322 = tpu.matmul %312, %6, %cst_89 {dimension_numbers = #tpu.dot_dimension_numbers<[1], [0], [0], [1], [0, 0, 1, 1], [], []>} : vector<2x32xf32>, vector<32x128xf32>, vector<2x128xf32> -> vector<2x128xf32>
    %323 = arith.addf %321, %322 : vector<2x128xf32>
    %324 = arith.negf %323 : vector<2x128xf32>
    %325 = math.exp %324 : vector<2x128xf32>
    %cst_90 = arith.constant 1.000000e+00 : f32
    %326 = vector.broadcast %cst_90 : f32 to vector<2x128xf32>
    %327 = arith.addf %326, %325 : vector<2x128xf32>
    %328 = arith.divf %326, %327 : vector<2x128xf32>
    %329 = vector.extract_strided_slice %328 {offsets = [0, 0], sizes = [2, 32], strides = [1, 1]} : vector<2x128xf32> to vector<2x32xf32>
    %330 = vector.extract_strided_slice %328 {offsets = [0, 32], sizes = [2, 32], strides = [1, 1]} : vector<2x128xf32> to vector<2x32xf32>
    %331 = vector.extract_strided_slice %328 {offsets = [0, 96], sizes = [2, 32], strides = [1, 1]} : vector<2x128xf32> to vector<2x32xf32>
    %332 = vector.extract_strided_slice %323 {offsets = [0, 64], sizes = [2, 32], strides = [1, 1]} : vector<2x128xf32> to vector<2x32xf32>
    %333 = math.tanh %332 : vector<2x32xf32>
    %334 = arith.mulf %330, %310 : vector<2x32xf32>
    %335 = arith.mulf %329, %333 : vector<2x32xf32>
    %336 = arith.addf %334, %335 : vector<2x32xf32>
    %337 = math.tanh %336 : vector<2x32xf32>
    %338 = arith.mulf %331, %337 : vector<2x32xf32>
    %339 = vector.extract_strided_slice %338 {offsets = [0, 0], sizes = [2, 16], strides = [1, 1]} : vector<2x32xf32> to vector<2x16xf32>
    %c12_91 = arith.constant 12 : index
    %c0_92 = arith.constant 0 : index
    %c0_93 = arith.constant 0 : index
    %340 = vector.load %arg4[%c12_91, %c0_92, %c0_93] : memref<16x2x32xf32, #tpu.memory_space<vmem>>, vector<1x2x16xf32>
    %341 = vector.shape_cast %340 : vector<1x2x16xf32> to vector<2x16xf32>
    %342 = vector.shape_cast %339 : vector<2x16xf32> to vector<1x2x16xf32>
    tpu.vector_store %arg4[%c12_91, %c0_92, %c0_93], %342 {strides = array<i32>} : memref<16x2x32xf32, #tpu.memory_space<vmem>>, vector<1x2x16xf32>,
    %343 = vector.extract_strided_slice %338 {offsets = [0, 16], sizes = [2, 16], strides = [1, 1]} : vector<2x32xf32> to vector<2x16xf32>
    %c3_94 = arith.constant 3 : index
    %c0_95 = arith.constant 0 : index
    %c16_96 = arith.constant 16 : index
    %344 = vector.load %arg4[%c3_94, %c0_95, %c16_96] : memref<16x2x32xf32, #tpu.memory_space<vmem>>, vector<1x2x16xf32>
    %345 = vector.shape_cast %344 : vector<1x2x16xf32> to vector<2x16xf32>
    %346 = vector.shape_cast %343 : vector<2x16xf32> to vector<1x2x16xf32>
    tpu.vector_store %arg4[%c3_94, %c0_95, %c16_96], %346 {strides = array<i32>} : memref<16x2x32xf32, #tpu.memory_space<vmem>>, vector<1x2x16xf32>,
    %347 = vector.extract_strided_slice %5 {offsets = [26, 0], sizes = [2, 128], strides = [1, 1]} : vector<32x128xf32> to vector<2x128xf32>
    %cst_97 = arith.constant dense<0.000000e+00> : vector<2x128xf32>
    %348 = tpu.matmul %338, %6, %cst_97 {dimension_numbers = #tpu.dot_dimension_numbers<[1], [0], [0], [1], [0, 0, 1, 1], [], []>} : vector<2x32xf32>, vector<32x128xf32>, vector<2x128xf32> -> vector<2x128xf32>
    %349 = arith.addf %347, %348 : vector<2x128xf32>
    %350 = arith.negf %349 : vector<2x128xf32>
    %351 = math.exp %350 : vector<2x128xf32>
    %cst_98 = arith.constant 1.000000e+00 : f32
    %352 = vector.broadcast %cst_98 : f32 to vector<2x128xf32>
    %353 = arith.addf %352, %351 : vector<2x128xf32>
    %354 = arith.divf %352, %353 : vector<2x128xf32>
    %355 = vector.extract_strided_slice %354 {offsets = [0, 0], sizes = [2, 32], strides = [1, 1]} : vector<2x128xf32> to vector<2x32xf32>
    %356 = vector.extract_strided_slice %354 {offsets = [0, 32], sizes = [2, 32], strides = [1, 1]} : vector<2x128xf32> to vector<2x32xf32>
    %357 = vector.extract_strided_slice %354 {offsets = [0, 96], sizes = [2, 32], strides = [1, 1]} : vector<2x128xf32> to vector<2x32xf32>
    %358 = vector.extract_strided_slice %349 {offsets = [0, 64], sizes = [2, 32], strides = [1, 1]} : vector<2x128xf32> to vector<2x32xf32>
    %359 = math.tanh %358 : vector<2x32xf32>
    %360 = arith.mulf %356, %336 : vector<2x32xf32>
    %361 = arith.mulf %355, %359 : vector<2x32xf32>
    %362 = arith.addf %360, %361 : vector<2x32xf32>
    %363 = math.tanh %362 : vector<2x32xf32>
    %364 = arith.mulf %357, %363 : vector<2x32xf32>
    %365 = vector.extract_strided_slice %364 {offsets = [0, 0], sizes = [2, 16], strides = [1, 1]} : vector<2x32xf32> to vector<2x16xf32>
    %c13_99 = arith.constant 13 : index
    %c0_100 = arith.constant 0 : index
    %c0_101 = arith.constant 0 : index
    %366 = vector.load %arg4[%c13_99, %c0_100, %c0_101] : memref<16x2x32xf32, #tpu.memory_space<vmem>>, vector<1x2x16xf32>
    %367 = vector.shape_cast %366 : vector<1x2x16xf32> to vector<2x16xf32>
    %368 = vector.shape_cast %365 : vector<2x16xf32> to vector<1x2x16xf32>
    tpu.vector_store %arg4[%c13_99, %c0_100, %c0_101], %368 {strides = array<i32>} : memref<16x2x32xf32, #tpu.memory_space<vmem>>, vector<1x2x16xf32>,
    %369 = vector.extract_strided_slice %364 {offsets = [0, 16], sizes = [2, 16], strides = [1, 1]} : vector<2x32xf32> to vector<2x16xf32>
    %c2_102 = arith.constant 2 : index
    %c0_103 = arith.constant 0 : index
    %c16_104 = arith.constant 16 : index
    %370 = vector.load %arg4[%c2_102, %c0_103, %c16_104] : memref<16x2x32xf32, #tpu.memory_space<vmem>>, vector<1x2x16xf32>
    %371 = vector.shape_cast %370 : vector<1x2x16xf32> to vector<2x16xf32>
    %372 = vector.shape_cast %369 : vector<2x16xf32> to vector<1x2x16xf32>
    tpu.vector_store %arg4[%c2_102, %c0_103, %c16_104], %372 {strides = array<i32>} : memref<16x2x32xf32, #tpu.memory_space<vmem>>, vector<1x2x16xf32>,
    %373 = vector.extract_strided_slice %5 {offsets = [28, 0], sizes = [2, 128], strides = [1, 1]} : vector<32x128xf32> to vector<2x128xf32>
    %cst_105 = arith.constant dense<0.000000e+00> : vector<2x128xf32>
    %374 = tpu.matmul %364, %6, %cst_105 {dimension_numbers = #tpu.dot_dimension_numbers<[1], [0], [0], [1], [0, 0, 1, 1], [], []>} : vector<2x32xf32>, vector<32x128xf32>, vector<2x128xf32> -> vector<2x128xf32>
    %375 = arith.addf %373, %374 : vector<2x128xf32>
    %376 = arith.negf %375 : vector<2x128xf32>
    %377 = math.exp %376 : vector<2x128xf32>
    %cst_106 = arith.constant 1.000000e+00 : f32
    %378 = vector.broadcast %cst_106 : f32 to vector<2x128xf32>
    %379 = arith.addf %378, %377 : vector<2x128xf32>
    %380 = arith.divf %378, %379 : vector<2x128xf32>
    %381 = vector.extract_strided_slice %380 {offsets = [0, 0], sizes = [2, 32], strides = [1, 1]} : vector<2x128xf32> to vector<2x32xf32>
    %382 = vector.extract_strided_slice %380 {offsets = [0, 32], sizes = [2, 32], strides = [1, 1]} : vector<2x128xf32> to vector<2x32xf32>
    %383 = vector.extract_strided_slice %380 {offsets = [0, 96], sizes = [2, 32], strides = [1, 1]} : vector<2x128xf32> to vector<2x32xf32>
    %384 = vector.extract_strided_slice %375 {offsets = [0, 64], sizes = [2, 32], strides = [1, 1]} : vector<2x128xf32> to vector<2x32xf32>
    %385 = math.tanh %384 : vector<2x32xf32>
    %386 = arith.mulf %382, %362 : vector<2x32xf32>
    %387 = arith.mulf %381, %385 : vector<2x32xf32>
    %388 = arith.addf %386, %387 : vector<2x32xf32>
    %389 = math.tanh %388 : vector<2x32xf32>
    %390 = arith.mulf %383, %389 : vector<2x32xf32>
    %391 = vector.extract_strided_slice %390 {offsets = [0, 0], sizes = [2, 16], strides = [1, 1]} : vector<2x32xf32> to vector<2x16xf32>
    %c14_107 = arith.constant 14 : index
    %c0_108 = arith.constant 0 : index
    %c0_109 = arith.constant 0 : index
    %392 = vector.load %arg4[%c14_107, %c0_108, %c0_109] : memref<16x2x32xf32, #tpu.memory_space<vmem>>, vector<1x2x16xf32>
    %393 = vector.shape_cast %392 : vector<1x2x16xf32> to vector<2x16xf32>
    %394 = vector.shape_cast %391 : vector<2x16xf32> to vector<1x2x16xf32>
    tpu.vector_store %arg4[%c14_107, %c0_108, %c0_109], %394 {strides = array<i32>} : memref<16x2x32xf32, #tpu.memory_space<vmem>>, vector<1x2x16xf32>,
    %395 = vector.extract_strided_slice %390 {offsets = [0, 16], sizes = [2, 16], strides = [1, 1]} : vector<2x32xf32> to vector<2x16xf32>
    %c1_110 = arith.constant 1 : index
    %c0_111 = arith.constant 0 : index
    %c16_112 = arith.constant 16 : index
    %396 = vector.load %arg4[%c1_110, %c0_111, %c16_112] : memref<16x2x32xf32, #tpu.memory_space<vmem>>, vector<1x2x16xf32>
    %397 = vector.shape_cast %396 : vector<1x2x16xf32> to vector<2x16xf32>
    %398 = vector.shape_cast %395 : vector<2x16xf32> to vector<1x2x16xf32>
    tpu.vector_store %arg4[%c1_110, %c0_111, %c16_112], %398 {strides = array<i32>} : memref<16x2x32xf32, #tpu.memory_space<vmem>>, vector<1x2x16xf32>,
    %399 = vector.extract_strided_slice %5 {offsets = [30, 0], sizes = [2, 128], strides = [1, 1]} : vector<32x128xf32> to vector<2x128xf32>
    %cst_113 = arith.constant dense<0.000000e+00> : vector<2x128xf32>
    %400 = tpu.matmul %390, %6, %cst_113 {dimension_numbers = #tpu.dot_dimension_numbers<[1], [0], [0], [1], [0, 0, 1, 1], [], []>} : vector<2x32xf32>, vector<32x128xf32>, vector<2x128xf32> -> vector<2x128xf32>
    %401 = arith.addf %399, %400 : vector<2x128xf32>
    %402 = arith.negf %401 : vector<2x128xf32>
    %403 = math.exp %402 : vector<2x128xf32>
    %cst_114 = arith.constant 1.000000e+00 : f32
    %404 = vector.broadcast %cst_114 : f32 to vector<2x128xf32>
    %405 = arith.addf %404, %403 : vector<2x128xf32>
    %406 = arith.divf %404, %405 : vector<2x128xf32>
    %407 = vector.extract_strided_slice %406 {offsets = [0, 0], sizes = [2, 32], strides = [1, 1]} : vector<2x128xf32> to vector<2x32xf32>
    %408 = vector.extract_strided_slice %406 {offsets = [0, 32], sizes = [2, 32], strides = [1, 1]} : vector<2x128xf32> to vector<2x32xf32>
    %409 = vector.extract_strided_slice %406 {offsets = [0, 96], sizes = [2, 32], strides = [1, 1]} : vector<2x128xf32> to vector<2x32xf32>
    %410 = vector.extract_strided_slice %401 {offsets = [0, 64], sizes = [2, 32], strides = [1, 1]} : vector<2x128xf32> to vector<2x32xf32>
    %411 = math.tanh %410 : vector<2x32xf32>
    %412 = arith.mulf %408, %388 : vector<2x32xf32>
    %413 = arith.mulf %407, %411 : vector<2x32xf32>
    %414 = arith.addf %412, %413 : vector<2x32xf32>
    %415 = math.tanh %414 : vector<2x32xf32>
    %416 = arith.mulf %409, %415 : vector<2x32xf32>
    %417 = vector.extract_strided_slice %416 {offsets = [0, 0], sizes = [2, 16], strides = [1, 1]} : vector<2x32xf32> to vector<2x16xf32>
    %c15_115 = arith.constant 15 : index
    %c0_116 = arith.constant 0 : index
    %c0_117 = arith.constant 0 : index
    %418 = vector.load %arg4[%c15_115, %c0_116, %c0_117] : memref<16x2x32xf32, #tpu.memory_space<vmem>>, vector<1x2x16xf32>
    %419 = vector.shape_cast %418 : vector<1x2x16xf32> to vector<2x16xf32>
    %420 = vector.shape_cast %417 : vector<2x16xf32> to vector<1x2x16xf32>
    tpu.vector_store %arg4[%c15_115, %c0_116, %c0_117], %420 {strides = array<i32>} : memref<16x2x32xf32, #tpu.memory_space<vmem>>, vector<1x2x16xf32>,
    %421 = vector.extract_strided_slice %416 {offsets = [0, 16], sizes = [2, 16], strides = [1, 1]} : vector<2x32xf32> to vector<2x16xf32>
    %c0_118 = arith.constant 0 : index
    %c0_119 = arith.constant 0 : index
    %c16_120 = arith.constant 16 : index
    %422 = vector.load %arg4[%c0_118, %c0_119, %c16_120] : memref<16x2x32xf32, #tpu.memory_space<vmem>>, vector<1x2x16xf32>
    %423 = vector.shape_cast %422 : vector<1x2x16xf32> to vector<2x16xf32>
    %424 = vector.shape_cast %421 : vector<2x16xf32> to vector<1x2x16xf32>
    tpu.vector_store %arg4[%c0_118, %c0_119, %c16_120], %424 {strides = array<i32>} : memref<16x2x32xf32, #tpu.memory_space<vmem>>, vector<1x2x16xf32>,
    return
  }
}

module attributes {stable_mosaic.version = 11 : i64} {
  func.func @_ner_attn_kernel(%arg0: memref<32x32xf32, #tpu.memory_space<vmem>>, %arg1: memref<1x32xf32, #tpu.memory_space<vmem>>, %arg2: memref<16x1xi32, #tpu.memory_space<vmem>>, %arg3: memref<16x1xi32, #tpu.memory_space<vmem>>, %arg4: memref<16x1xf32, #tpu.memory_space<vmem>>, %arg5: memref<16x32xf32, #tpu.memory_space<vmem>>, %arg6: memref<16x32xf32, #tpu.memory_space<vmem>>, %arg7: memref<16x64xf32, #tpu.memory_space<vmem>>, %arg8: memref<32x64xf32, #tpu.memory_space<vmem>>, %arg9: memref<32x64xf32, #tpu.memory_space<vmem>>, %arg10: memref<64x64xf32, #tpu.memory_space<vmem>>, %arg11: memref<32x64xf32, #tpu.memory_space<vmem>>, %arg12: memref<1x64xf32, #tpu.memory_space<vmem>>, %arg13: memref<64x64xf32, #tpu.memory_space<vmem>>, %arg14: memref<1x64xf32, #tpu.memory_space<vmem>>, %arg15: memref<64x128xf32, #tpu.memory_space<vmem>>, %arg16: memref<1x128xf32, #tpu.memory_space<vmem>>, %arg17: memref<16x128xf32, #tpu.memory_space<vmem>>, %arg18: memref<16x160xf32, #tpu.memory_space<vmem>>, %arg19: memref<16x128xf32, #tpu.memory_space<vmem>>, %arg20: memref<1x128xf32, #tpu.memory_space<vmem>>) attributes {dimension_semantics = [], scalar_prefetch = 0 : i64, scratch_operands = 0 : i64, tpu.core_type = #tpu.core_type<tc>} {
    %c0 = arith.constant 0 : index
    %c0_0 = arith.constant 0 : index
    %0 = vector.load %arg0[%c0, %c0_0] : memref<32x32xf32, #tpu.memory_space<vmem>>, vector<32x32xf32>
    %c0_1 = arith.constant 0 : index
    %c0_2 = arith.constant 0 : index
    %1 = vector.load %arg4[%c0_1, %c0_2] : memref<16x1xf32, #tpu.memory_space<vmem>>, vector<16x1xf32>
    %c0_3 = arith.constant 0 : index
    %c0_4 = arith.constant 0 : index
    %2 = vector.load %arg1[%c0_3, %c0_4] : memref<1x32xf32, #tpu.memory_space<vmem>>, vector<1x32xf32>
    %cst = arith.constant dense<0.000000e+00> : vector<1x32xf32>
    %3 = tpu.matmul %2, %0, %cst {dimension_numbers = #tpu.dot_dimension_numbers<[1], [1], [0], [0], [0, 0, 1, 0], [], []>} : vector<1x32xf32>, vector<32x32xf32>, vector<1x32xf32> -> vector<1x32xf32>
    %4 = tpu.iota {dimensions = array<i32: 1>} : vector<16x32xi32>
    %c0_5 = arith.constant 0 : index
    %c0_6 = arith.constant 0 : index
    %5 = vector.load %arg2[%c0_5, %c0_6] : memref<16x1xi32, #tpu.memory_space<vmem>>, vector<16x1xi32>
    %6 = vector.broadcast %5 : vector<16x1xi32> to vector<16x32xi32>
    %7 = arith.cmpi sge, %4, %6 : vector<16x32xi32>
    %c0_7 = arith.constant 0 : index
    %c0_8 = arith.constant 0 : index
    %8 = vector.load %arg3[%c0_7, %c0_8] : memref<16x1xi32, #tpu.memory_space<vmem>>, vector<16x1xi32>
    %9 = vector.broadcast %8 : vector<16x1xi32> to vector<16x32xi32>
    %10 = arith.cmpi sle, %4, %9 : vector<16x32xi32>
    %11 = arith.andi %7, %10 : vector<16x32xi1>
    %cst_9 = arith.constant -1.000000e+30 : f32
    %12 = vector.shape_cast %3 : vector<1x32xf32> to vector<1x32xf32>
    %13 = vector.broadcast %12 : vector<1x32xf32> to vector<16x32xf32>
    %14 = vector.broadcast %cst_9 : f32 to vector<16x32xf32>
    %15 = arith.select %11, %13, %14 : vector<16x32xi1>, vector<16x32xf32>
    %cst_10 = arith.constant dense<0xFF800000> : vector<16xf32>
    %16 = vector.multi_reduction <maximumf>, %15, %cst_10 [1] : vector<16x32xf32> to vector<16xf32>
    %17 = vector.shape_cast %16 : vector<16xf32> to vector<16x1xf32>
    %18 = vector.broadcast %17 : vector<16x1xf32> to vector<16x32xf32>
    %19 = arith.subf %15, %18 : vector<16x32xf32>
    %20 = math.exp %19 : vector<16x32xf32>
    %cst_11 = arith.constant dense<0.000000e+00> : vector<16xf32>
    %21 = vector.multi_reduction <add>, %20, %cst_11 [1] : vector<16x32xf32> to vector<16xf32>
    %22 = vector.shape_cast %21 : vector<16xf32> to vector<16x1xf32>
    %23 = vector.broadcast %22 : vector<16x1xf32> to vector<16x32xf32>
    %24 = arith.divf %20, %23 : vector<16x32xf32>
    %cst_12 = arith.constant dense<0.000000e+00> : vector<16x32xf32>
    %25 = tpu.matmul %24, %0, %cst_12 {dimension_numbers = #tpu.dot_dimension_numbers<[1], [0], [0], [1], [0, 0, 1, 1], [], []>} : vector<16x32xf32>, vector<32x32xf32>, vector<16x32xf32> -> vector<16x32xf32>
    %26 = vector.broadcast %1 : vector<16x1xf32> to vector<16x32xf32>
    %27 = arith.mulf %25, %26 : vector<16x32xf32>
    %c0_13 = arith.constant 0 : index
    %c0_14 = arith.constant 0 : index
    %28 = vector.load %arg5[%c0_13, %c0_14] : memref<16x32xf32, #tpu.memory_space<vmem>>, vector<16x32xf32>
    %29 = vector.broadcast %1 : vector<16x1xf32> to vector<16x32xf32>
    %30 = arith.mulf %28, %29 : vector<16x32xf32>
    %c0_15 = arith.constant 0 : index
    %c0_16 = arith.constant 0 : index
    %31 = vector.load %arg6[%c0_15, %c0_16] : memref<16x32xf32, #tpu.memory_space<vmem>>, vector<16x32xf32>
    %32 = vector.broadcast %1 : vector<16x1xf32> to vector<16x32xf32>
    %33 = arith.mulf %31, %32 : vector<16x32xf32>
    %c0_17 = arith.constant 0 : index
    %c0_18 = arith.constant 0 : index
    %34 = vector.load %arg7[%c0_17, %c0_18] : memref<16x64xf32, #tpu.memory_space<vmem>>, vector<16x64xf32>
    %35 = vector.broadcast %1 : vector<16x1xf32> to vector<16x64xf32>
    %36 = arith.mulf %34, %35 : vector<16x64xf32>
    %c0_19 = arith.constant 0 : index
    %c0_20 = arith.constant 0 : index
    %37 = vector.load %arg18[%c0_19, %c0_20] : memref<16x160xf32, #tpu.memory_space<vmem>>, vector<16x32xf32>
    tpu.vector_store %arg18[%c0_19, %c0_20], %30 {strides = array<i32>} : memref<16x160xf32, #tpu.memory_space<vmem>>, vector<16x32xf32>,
    %c0_21 = arith.constant 0 : index
    %c32 = arith.constant 32 : index
    %38 = vector.load %arg18[%c0_21, %c32] : memref<16x160xf32, #tpu.memory_space<vmem>>, vector<16x32xf32>
    tpu.vector_store %arg18[%c0_21, %c32], %33 {strides = array<i32>} : memref<16x160xf32, #tpu.memory_space<vmem>>, vector<16x32xf32>,
    %c0_22 = arith.constant 0 : index
    %c64 = arith.constant 64 : index
    %39 = vector.load %arg18[%c0_22, %c64] : memref<16x160xf32, #tpu.memory_space<vmem>>, vector<16x64xf32>
    tpu.vector_store %arg18[%c0_22, %c64], %36 {strides = array<i32>} : memref<16x160xf32, #tpu.memory_space<vmem>>, vector<16x64xf32>,
    %c0_23 = arith.constant 0 : index
    %c128 = arith.constant 128 : index
    %40 = vector.load %arg18[%c0_23, %c128] : memref<16x160xf32, #tpu.memory_space<vmem>>, vector<16x32xf32>
    tpu.vector_store %arg18[%c0_23, %c128], %27 {strides = array<i32>} : memref<16x160xf32, #tpu.memory_space<vmem>>, vector<16x32xf32>,
    %c0_24 = arith.constant 0 : index
    %c0_25 = arith.constant 0 : index
    %41 = vector.load %arg8[%c0_24, %c0_25] : memref<32x64xf32, #tpu.memory_space<vmem>>, vector<32x64xf32>
    %cst_26 = arith.constant dense<0.000000e+00> : vector<16x64xf32>
    %42 = tpu.matmul %30, %41, %cst_26 {dimension_numbers = #tpu.dot_dimension_numbers<[1], [0], [0], [1], [0, 0, 1, 1], [], []>} : vector<16x32xf32>, vector<32x64xf32>, vector<16x64xf32> -> vector<16x64xf32>
    %c0_27 = arith.constant 0 : index
    %c0_28 = arith.constant 0 : index
    %43 = vector.load %arg9[%c0_27, %c0_28] : memref<32x64xf32, #tpu.memory_space<vmem>>, vector<32x64xf32>
    %cst_29 = arith.constant dense<0.000000e+00> : vector<16x64xf32>
    %44 = tpu.matmul %33, %43, %cst_29 {dimension_numbers = #tpu.dot_dimension_numbers<[1], [0], [0], [1], [0, 0, 1, 1], [], []>} : vector<16x32xf32>, vector<32x64xf32>, vector<16x64xf32> -> vector<16x64xf32>
    %45 = arith.addf %42, %44 : vector<16x64xf32>
    %c0_30 = arith.constant 0 : index
    %c0_31 = arith.constant 0 : index
    %46 = vector.load %arg10[%c0_30, %c0_31] : memref<64x64xf32, #tpu.memory_space<vmem>>, vector<64x64xf32>
    %cst_32 = arith.constant dense<0.000000e+00> : vector<16x64xf32>
    %47 = tpu.matmul %36, %46, %cst_32 {dimension_numbers = #tpu.dot_dimension_numbers<[1], [0], [0], [1], [0, 0, 1, 1], [], []>} : vector<16x64xf32>, vector<64x64xf32>, vector<16x64xf32> -> vector<16x64xf32>
    %48 = arith.addf %45, %47 : vector<16x64xf32>
    %c0_33 = arith.constant 0 : index
    %c0_34 = arith.constant 0 : index
    %49 = vector.load %arg11[%c0_33, %c0_34] : memref<32x64xf32, #tpu.memory_space<vmem>>, vector<32x64xf32>
    %cst_35 = arith.constant dense<0.000000e+00> : vector<16x64xf32>
    %50 = tpu.matmul %27, %49, %cst_35 {dimension_numbers = #tpu.dot_dimension_numbers<[1], [0], [0], [1], [0, 0, 1, 1], [], []>} : vector<16x32xf32>, vector<32x64xf32>, vector<16x64xf32> -> vector<16x64xf32>
    %51 = arith.addf %48, %50 : vector<16x64xf32>
    %c0_36 = arith.constant 0 : index
    %c0_37 = arith.constant 0 : index
    %52 = vector.load %arg12[%c0_36, %c0_37] : memref<1x64xf32, #tpu.memory_space<vmem>>, vector<1x64xf32>
    %53 = vector.broadcast %52 : vector<1x64xf32> to vector<16x64xf32>
    %54 = arith.addf %51, %53 : vector<16x64xf32>
    %cst_38 = arith.constant 0.000000e+00 : f32
    %55 = vector.broadcast %cst_38 : f32 to vector<16x64xf32>
    %56 = arith.maximumf %54, %55 : vector<16x64xf32>
    %c0_39 = arith.constant 0 : index
    %c0_40 = arith.constant 0 : index
    %57 = vector.load %arg13[%c0_39, %c0_40] : memref<64x64xf32, #tpu.memory_space<vmem>>, vector<64x64xf32>
    %cst_41 = arith.constant dense<0.000000e+00> : vector<16x64xf32>
    %58 = tpu.matmul %56, %57, %cst_41 {dimension_numbers = #tpu.dot_dimension_numbers<[1], [0], [0], [1], [0, 0, 1, 1], [], []>} : vector<16x64xf32>, vector<64x64xf32>, vector<16x64xf32> -> vector<16x64xf32>
    %c0_42 = arith.constant 0 : index
    %c0_43 = arith.constant 0 : index
    %59 = vector.load %arg14[%c0_42, %c0_43] : memref<1x64xf32, #tpu.memory_space<vmem>>, vector<1x64xf32>
    %60 = vector.broadcast %59 : vector<1x64xf32> to vector<16x64xf32>
    %61 = arith.addf %58, %60 : vector<16x64xf32>
    %cst_44 = arith.constant 0.000000e+00 : f32
    %62 = vector.broadcast %cst_44 : f32 to vector<16x64xf32>
    %63 = arith.maximumf %61, %62 : vector<16x64xf32>
    %c0_45 = arith.constant 0 : index
    %c0_46 = arith.constant 0 : index
    %64 = vector.load %arg15[%c0_45, %c0_46] : memref<64x128xf32, #tpu.memory_space<vmem>>, vector<64x128xf32>
    %cst_47 = arith.constant dense<0.000000e+00> : vector<16x128xf32>
    %65 = tpu.matmul %63, %64, %cst_47 {dimension_numbers = #tpu.dot_dimension_numbers<[1], [0], [0], [1], [0, 0, 1, 1], [], []>} : vector<16x64xf32>, vector<64x128xf32>, vector<16x128xf32> -> vector<16x128xf32>
    %c0_48 = arith.constant 0 : index
    %c0_49 = arith.constant 0 : index
    %66 = vector.load %arg16[%c0_48, %c0_49] : memref<1x128xf32, #tpu.memory_space<vmem>>, vector<1x128xf32>
    %67 = vector.broadcast %66 : vector<1x128xf32> to vector<16x128xf32>
    %68 = arith.addf %65, %67 : vector<16x128xf32>
    %c0_50 = arith.constant 0 : index
    %c0_51 = arith.constant 0 : index
    %69 = vector.load %arg19[%c0_50, %c0_51] : memref<16x128xf32, #tpu.memory_space<vmem>>, vector<16x128xf32>
    tpu.vector_store %arg19[%c0_50, %c0_51], %68 {strides = array<i32>} : memref<16x128xf32, #tpu.memory_space<vmem>>, vector<16x128xf32>,
    %c0_52 = arith.constant 0 : index
    %c0_53 = arith.constant 0 : index
    %70 = vector.load %arg17[%c0_52, %c0_53] : memref<16x128xf32, #tpu.memory_space<vmem>>, vector<16x128xf32>
    %71 = tpu.iota {dimensions = array<i32: 1>} : vector<16x128xi32>
    %c5_i32 = arith.constant 5 : i32
    %72 = vector.broadcast %c5_i32 : i32 to vector<16x128xi32>
    %73 = arith.cmpi slt, %71, %72 : vector<16x128xi32>
    %cst_54 = arith.constant -1.000000e+30 : f32
    %74 = vector.broadcast %cst_54 : f32 to vector<16x128xf32>
    %75 = arith.select %73, %68, %74 : vector<16x128xi1>, vector<16x128xf32>
    %cst_55 = arith.constant dense<0xFF800000> : vector<16xf32>
    %76 = vector.multi_reduction <maximumf>, %75, %cst_55 [1] : vector<16x128xf32> to vector<16xf32>
    %77 = vector.shape_cast %76 : vector<16xf32> to vector<16x1xf32>
    %78 = vector.broadcast %77 : vector<16x1xf32> to vector<16x128xf32>
    %79 = arith.subf %75, %78 : vector<16x128xf32>
    %80 = math.exp %79 : vector<16x128xf32>
    %cst_56 = arith.constant dense<0.000000e+00> : vector<16xf32>
    %81 = vector.multi_reduction <add>, %80, %cst_56 [1] : vector<16x128xf32> to vector<16xf32>
    %82 = vector.shape_cast %81 : vector<16xf32> to vector<16x1xf32>
    %83 = math.log %82 : vector<16x1xf32>
    %84 = arith.addf %83, %77 : vector<16x1xf32>
    %85 = vector.broadcast %84 : vector<16x1xf32> to vector<16x128xf32>
    %86 = arith.subf %75, %85 : vector<16x128xf32>
    %87 = arith.mulf %70, %86 : vector<16x128xf32>
    %88 = vector.shape_cast %87 : vector<16x128xf32> to vector<1x16x128xf32>
    %cst_57 = arith.constant dense<0.000000e+00> : vector<1xf32>
    %89 = vector.multi_reduction <add>, %88, %cst_57 [1, 2] : vector<1x16x128xf32> to vector<1xf32>
    %90 = vector.shape_cast %89 : vector<1xf32> to vector<1x1x1xf32>
    %91 = vector.extract %90[0, 0, 0] : f32 from vector<1x1x1xf32>
    %cst_58 = arith.constant 0.000000e+00 : f32
    %92 = arith.subf %cst_58, %91 : f32
    %cst_59 = arith.constant 0.000000e+00 : f32
    %93 = vector.broadcast %cst_59 : f32 to vector<1x128xf32>
    %94 = vector.broadcast %92 : f32 to vector<1x128xf32>
    %95 = arith.addf %93, %94 : vector<1x128xf32>
    %c0_60 = arith.constant 0 : index
    %c0_61 = arith.constant 0 : index
    %96 = vector.load %arg20[%c0_60, %c0_61] : memref<1x128xf32, #tpu.memory_space<vmem>>, vector<1x128xf32>
    tpu.vector_store %arg20[%c0_60, %c0_61], %95 {strides = array<i32>} : memref<1x128xf32, #tpu.memory_space<vmem>>, vector<1x128xf32>,
    return
  }
}

module attributes {stable_mosaic.version = 11 : i64} {
  func.func @_pair_kernel(%arg0: memref<16x160xf32, #tpu.memory_space<vmem>>, %arg1: memref<160x64xf32, #tpu.memory_space<vmem>>, %arg2: memref<1x64xf32, #tpu.memory_space<vmem>>, %arg3: memref<256x16xf32, #tpu.memory_space<vmem>>, %arg4: memref<128x64xf32, #tpu.memory_space<vmem>>, %arg5: memref<64x16xf32, #tpu.memory_space<vmem>>, %arg6: memref<64x16xf32, #tpu.memory_space<vmem>>, %arg7: memref<64x16xf32, #tpu.memory_space<vmem>>, %arg8: memref<64x16xf32, #tpu.memory_space<vmem>>, %arg9: memref<1x16xf32, #tpu.memory_space<vmem>>, %arg10: memref<16x16xf32, #tpu.memory_space<vmem>>, %arg11: memref<1x16xf32, #tpu.memory_space<vmem>>, %arg12: memref<16x128xf32, #tpu.memory_space<vmem>>, %arg13: memref<1x128xf32, #tpu.memory_space<vmem>>, %arg14: memref<128x128xf32, #tpu.memory_space<vmem>>, %arg15: memref<128x128xf32, #tpu.memory_space<vmem>>, %arg16: memref<1x128xf32, #tpu.memory_space<vmem>>) attributes {dimension_semantics = [], scalar_prefetch = 0 : i64, scratch_operands = 0 : i64, tpu.core_type = #tpu.core_type<tc>} {
    %c0 = arith.constant 0 : index
    %c0_0 = arith.constant 0 : index
    %0 = vector.load %arg0[%c0, %c0_0] : memref<16x160xf32, #tpu.memory_space<vmem>>, vector<16x160xf32>
    %c0_1 = arith.constant 0 : index
    %c0_2 = arith.constant 0 : index
    %1 = vector.load %arg1[%c0_1, %c0_2] : memref<160x64xf32, #tpu.memory_space<vmem>>, vector<160x64xf32>
    %cst = arith.constant dense<0.000000e+00> : vector<16x64xf32>
    %2 = tpu.matmul %0, %1, %cst {dimension_numbers = #tpu.dot_dimension_numbers<[1], [0], [0], [1], [0, 0, 1, 1], [], []>} : vector<16x160xf32>, vector<160x64xf32>, vector<16x64xf32> -> vector<16x64xf32>
    %c0_3 = arith.constant 0 : index
    %c0_4 = arith.constant 0 : index
    %3 = vector.load %arg2[%c0_3, %c0_4] : memref<1x64xf32, #tpu.memory_space<vmem>>, vector<1x64xf32>
    %4 = vector.broadcast %3 : vector<1x64xf32> to vector<16x64xf32>
    %5 = arith.addf %2, %4 : vector<16x64xf32>
    %cst_5 = arith.constant 0.000000e+00 : f32
    %6 = vector.broadcast %cst_5 : f32 to vector<16x64xf32>
    %7 = arith.maximumf %5, %6 : vector<16x64xf32>
    %c0_6 = arith.constant 0 : index
    %c0_7 = arith.constant 0 : index
    %8 = vector.load %arg3[%c0_6, %c0_7] : memref<256x16xf32, #tpu.memory_space<vmem>>, vector<256x16xf32>
    %cst_8 = arith.constant dense<0.000000e+00> : vector<256x64xf32>
    %9 = tpu.matmul %8, %7, %cst_8 {dimension_numbers = #tpu.dot_dimension_numbers<[1], [0], [0], [1], [0, 0, 1, 1], [], []>} : vector<256x16xf32>, vector<16x64xf32>, vector<256x64xf32> -> vector<256x64xf32>
    %10 = vector.extract_strided_slice %9 {offsets = [0, 0], sizes = [128, 64], strides = [1, 1]} : vector<256x64xf32> to vector<128x64xf32>
    %11 = vector.extract_strided_slice %9 {offsets = [128, 0], sizes = [128, 64], strides = [1, 1]} : vector<256x64xf32> to vector<128x64xf32>
    %c0_9 = arith.constant 0 : index
    %c0_10 = arith.constant 0 : index
    %12 = vector.load %arg5[%c0_9, %c0_10] : memref<64x16xf32, #tpu.memory_space<vmem>>, vector<64x16xf32>
    %cst_11 = arith.constant dense<0.000000e+00> : vector<128x16xf32>
    %13 = tpu.matmul %10, %12, %cst_11 {dimension_numbers = #tpu.dot_dimension_numbers<[1], [0], [0], [1], [0, 0, 1, 1], [], []>} : vector<128x64xf32>, vector<64x16xf32>, vector<128x16xf32> -> vector<128x16xf32>
    %c0_12 = arith.constant 0 : index
    %c0_13 = arith.constant 0 : index
    %14 = vector.load %arg6[%c0_12, %c0_13] : memref<64x16xf32, #tpu.memory_space<vmem>>, vector<64x16xf32>
    %cst_14 = arith.constant dense<0.000000e+00> : vector<128x16xf32>
    %15 = tpu.matmul %11, %14, %cst_14 {dimension_numbers = #tpu.dot_dimension_numbers<[1], [0], [0], [1], [0, 0, 1, 1], [], []>} : vector<128x64xf32>, vector<64x16xf32>, vector<128x16xf32> -> vector<128x16xf32>
    %16 = arith.addf %13, %15 : vector<128x16xf32>
    %17 = arith.mulf %10, %11 : vector<128x64xf32>
    %c0_15 = arith.constant 0 : index
    %c0_16 = arith.constant 0 : index
    %18 = vector.load %arg7[%c0_15, %c0_16] : memref<64x16xf32, #tpu.memory_space<vmem>>, vector<64x16xf32>
    %cst_17 = arith.constant dense<0.000000e+00> : vector<128x16xf32>
    %19 = tpu.matmul %17, %18, %cst_17 {dimension_numbers = #tpu.dot_dimension_numbers<[1], [0], [0], [1], [0, 0, 1, 1], [], []>} : vector<128x64xf32>, vector<64x16xf32>, vector<128x16xf32> -> vector<128x16xf32>
    %20 = arith.addf %16, %19 : vector<128x16xf32>
    %c0_18 = arith.constant 0 : index
    %c0_19 = arith.constant 0 : index
    %21 = vector.load %arg4[%c0_18, %c0_19] : memref<128x64xf32, #tpu.memory_space<vmem>>, vector<128x64xf32>
    %c0_20 = arith.constant 0 : index
    %c0_21 = arith.constant 0 : index
    %22 = vector.load %arg8[%c0_20, %c0_21] : memref<64x16xf32, #tpu.memory_space<vmem>>, vector<64x16xf32>
    %cst_22 = arith.constant dense<0.000000e+00> : vector<128x16xf32>
    %23 = tpu.matmul %21, %22, %cst_22 {dimension_numbers = #tpu.dot_dimension_numbers<[1], [0], [0], [1], [0, 0, 1, 1], [], []>} : vector<128x64xf32>, vector<64x16xf32>, vector<128x16xf32> -> vector<128x16xf32>
    %24 = arith.addf %20, %23 : vector<128x16xf32>
    %c0_23 = arith.constant 0 : index
    %c0_24 = arith.constant 0 : index
    %25 = vector.load %arg9[%c0_23, %c0_24] : memref<1x16xf32, #tpu.memory_space<vmem>>, vector<1x16xf32>
    %26 = vector.broadcast %25 : vector<1x16xf32> to vector<128x16xf32>
    %27 = arith.addf %24, %26 : vector<128x16xf32>
    %cst_25 = arith.constant 0.000000e+00 : f32
    %28 = vector.broadcast %cst_25 : f32 to vector<128x16xf32>
    %29 = arith.maximumf %27, %28 : vector<128x16xf32>
    %c0_26 = arith.constant 0 : index
    %c0_27 = arith.constant 0 : index
    %30 = vector.load %arg10[%c0_26, %c0_27] : memref<16x16xf32, #tpu.memory_space<vmem>>, vector<16x16xf32>
    %cst_28 = arith.constant dense<0.000000e+00> : vector<128x16xf32>
    %31 = tpu.matmul %29, %30, %cst_28 {dimension_numbers = #tpu.dot_dimension_numbers<[1], [0], [0], [1], [0, 0, 1, 1], [], []>} : vector<128x16xf32>, vector<16x16xf32>, vector<128x16xf32> -> vector<128x16xf32>
    %c0_29 = arith.constant 0 : index
    %c0_30 = arith.constant 0 : index
    %32 = vector.load %arg11[%c0_29, %c0_30] : memref<1x16xf32, #tpu.memory_space<vmem>>, vector<1x16xf32>
    %33 = vector.broadcast %32 : vector<1x16xf32> to vector<128x16xf32>
    %34 = arith.addf %31, %33 : vector<128x16xf32>
    %cst_31 = arith.constant 0.000000e+00 : f32
    %35 = vector.broadcast %cst_31 : f32 to vector<128x16xf32>
    %36 = arith.maximumf %34, %35 : vector<128x16xf32>
    %c0_32 = arith.constant 0 : index
    %c0_33 = arith.constant 0 : index
    %37 = vector.load %arg12[%c0_32, %c0_33] : memref<16x128xf32, #tpu.memory_space<vmem>>, vector<16x128xf32>
    %cst_34 = arith.constant dense<0.000000e+00> : vector<128x128xf32>
    %38 = tpu.matmul %36, %37, %cst_34 {dimension_numbers = #tpu.dot_dimension_numbers<[1], [0], [0], [1], [0, 0, 1, 1], [], []>} : vector<128x16xf32>, vector<16x128xf32>, vector<128x128xf32> -> vector<128x128xf32>
    %c0_35 = arith.constant 0 : index
    %c0_36 = arith.constant 0 : index
    %39 = vector.load %arg13[%c0_35, %c0_36] : memref<1x128xf32, #tpu.memory_space<vmem>>, vector<1x128xf32>
    %40 = vector.broadcast %39 : vector<1x128xf32> to vector<128x128xf32>
    %41 = arith.addf %38, %40 : vector<128x128xf32>
    %c0_37 = arith.constant 0 : index
    %c0_38 = arith.constant 0 : index
    %42 = vector.load %arg15[%c0_37, %c0_38] : memref<128x128xf32, #tpu.memory_space<vmem>>, vector<128x128xf32>
    tpu.vector_store %arg15[%c0_37, %c0_38], %41 {strides = array<i32>} : memref<128x128xf32, #tpu.memory_space<vmem>>, vector<128x128xf32>,
    %c0_39 = arith.constant 0 : index
    %c0_40 = arith.constant 0 : index
    %43 = vector.load %arg14[%c0_39, %c0_40] : memref<128x128xf32, #tpu.memory_space<vmem>>, vector<128x128xf32>
    %44 = tpu.iota {dimensions = array<i32: 1>} : vector<128x128xi32>
    %c4_i32 = arith.constant 4 : i32
    %45 = vector.broadcast %c4_i32 : i32 to vector<128x128xi32>
    %46 = arith.cmpi slt, %44, %45 : vector<128x128xi32>
    %cst_41 = arith.constant -1.000000e+30 : f32
    %47 = vector.broadcast %cst_41 : f32 to vector<128x128xf32>
    %48 = arith.select %46, %41, %47 : vector<128x128xi1>, vector<128x128xf32>
    %cst_42 = arith.constant dense<0xFF800000> : vector<128xf32>
    %49 = vector.multi_reduction <maximumf>, %48, %cst_42 [1] : vector<128x128xf32> to vector<128xf32>
    %50 = vector.shape_cast %49 : vector<128xf32> to vector<128x1xf32>
    %51 = vector.broadcast %50 : vector<128x1xf32> to vector<128x128xf32>
    %52 = arith.subf %48, %51 : vector<128x128xf32>
    %53 = math.exp %52 : vector<128x128xf32>
    %cst_43 = arith.constant dense<0.000000e+00> : vector<128xf32>
    %54 = vector.multi_reduction <add>, %53, %cst_43 [1] : vector<128x128xf32> to vector<128xf32>
    %55 = vector.shape_cast %54 : vector<128xf32> to vector<128x1xf32>
    %56 = math.log %55 : vector<128x1xf32>
    %57 = arith.addf %56, %50 : vector<128x1xf32>
    %58 = vector.broadcast %57 : vector<128x1xf32> to vector<128x128xf32>
    %59 = arith.subf %48, %58 : vector<128x128xf32>
    %60 = arith.mulf %43, %59 : vector<128x128xf32>
    %61 = vector.shape_cast %60 : vector<128x128xf32> to vector<1x128x128xf32>
    %cst_44 = arith.constant dense<0.000000e+00> : vector<1xf32>
    %62 = vector.multi_reduction <add>, %61, %cst_44 [1, 2] : vector<1x128x128xf32> to vector<1xf32>
    %63 = vector.shape_cast %62 : vector<1xf32> to vector<1x1x1xf32>
    %64 = vector.extract %63[0, 0, 0] : f32 from vector<1x1x1xf32>
    %cst_45 = arith.constant 0.000000e+00 : f32
    %65 = arith.subf %cst_45, %64 : f32
    %cst_46 = arith.constant 0.000000e+00 : f32
    %66 = vector.broadcast %cst_46 : f32 to vector<1x128xf32>
    %67 = vector.broadcast %65 : f32 to vector<1x128xf32>
    %68 = arith.addf %66, %67 : vector<1x128xf32>
    %c0_47 = arith.constant 0 : index
    %c0_48 = arith.constant 0 : index
    %69 = vector.load %arg16[%c0_47, %c0_48] : memref<1x128xf32, #tpu.memory_space<vmem>>, vector<1x128xf32>
    tpu.vector_store %arg16[%c0_47, %c0_48], %68 {strides = array<i32>} : memref<1x128xf32, #tpu.memory_space<vmem>>, vector<1x128xf32>,
    return
  }
}

</mosaic_0001>

<llo_original>
// kernel: eq.1
$region0: #{eq.1}
  %s0 = inlined_call_operand.hbm [shape: s32[2,8], index: 0, kind: input, shape index: {}]
  %s1 = inlined_call_operand.vmem [shape: s32[16], index: 1, kind: output, shape index: {}]
  $region1: #{eq.1} parent=0
    #allocation0 [shape = 'u8[1024]{0}', space=vmem, size = 0x400, scoped, tag = 'operand span for operand 0']
    #allocation1 [shape = 's32[1]{0}', space=sflag, size = 0x4, scoped, tag = 'scoped memory for eq.1']
    #allocation2 [shape = 'u8[4096]{0}', space=vmem, size = 0x1000, scoped, tag = 'scoped mem for output reshape']
    #allocation3 [shape = 'u8[4096]{0}', space=vmem, size = 0x1000, scoped, tag = 'scoped mem for input reshape']
    %2 = vsyncpa [#allocation1], 0
    %4 = vsyncadd [#allocation1], 0
    %s6 = sshll.u32 %s0, 4
    %s7 = int_to_ptr.hbm [resolvable:$true] %s6
    %s8 = sshll.u32 [#allocation0], 4
    %s9 = int_to_ptr.vmem [resolvable:$true] %s8
    %11 = dma.hbm_to_vmem [thread:$0]  %s7, 32, %s9, [#allocation1]
    %13 = dma.done [#allocation1], 32
    %s15 = ssub.s32 4, 1
    %v16 = vld [vmem:[#allocation0] sm:%s15]
    %17 = vst [vmem:[#allocation3] sm:%s15] %v16
    %v18 = vld [vmem:[#allocation3] sm:$0x1]
    %vm19 = vcmask 64512
    %20 = vst.msk [vmem:[#allocation2] sm:$0x1] %vm19, %v18
    %s21 = scalar_lea.vmem [#allocation3], 1
    %v22 = vld [vmem:[%s21] sm:$0x1]
    %23 = vrot.lane.b32.xlu0 %v22, 8
    %v24 = vpop.permute.xlu0 %23
    %vm25 = vcmask 130112
    %26 = vst.msk [vmem:[#allocation2] sm:$0x1] %vm25, %v24
    %s28 = ssub.s32 2, 1
    %v29 = vld [vmem:[#allocation2] sm:%s28]
    %s31 = ssub.s32 2, 1
    %32 = vst [vmem:[%s1] sm:%s31] %v29
    %33 = vsyncpa [#allocation1], 1

// kernel: mul.20
$region0: #{mul.20}
  %s0 = inlined_call_operand.hbm [shape: f32[2,8], index: 0, kind: input, shape index: {}]
  %s1 = inlined_call_operand.vmem [shape: f32[16], index: 1, kind: output, shape index: {}]
  $region1: #{mul.20} parent=0
    #allocation0 [shape = 'u8[1024]{0}', space=vmem, size = 0x400, scoped, tag = 'operand span for operand 0']
    #allocation1 [shape = 's32[1]{0}', space=sflag, size = 0x4, scoped, tag = 'scoped memory for mul.20']
    #allocation2 [shape = 'u8[4096]{0}', space=vmem, size = 0x1000, scoped, tag = 'scoped mem for output reshape']
    #allocation3 [shape = 'u8[4096]{0}', space=vmem, size = 0x1000, scoped, tag = 'scoped mem for input reshape']
    %2 = vsyncpa [#allocation1], 0
    %4 = vsyncadd [#allocation1], 0
    %s6 = sshll.u32 %s0, 4
    %s7 = int_to_ptr.hbm [resolvable:$true] %s6
    %s8 = sshll.u32 [#allocation0], 4
    %s9 = int_to_ptr.vmem [resolvable:$true] %s8
    %11 = dma.hbm_to_vmem [thread:$0]  %s7, 32, %s9, [#allocation1]
    %13 = dma.done [#allocation1], 32
    %s15 = ssub.s32 4, 1
    %v16 = vld [vmem:[#allocation0] sm:%s15]
    %17 = vst [vmem:[#allocation3] sm:%s15] %v16
    %v18 = vld [vmem:[#allocation3] sm:$0x1]
    %vm19 = vcmask 64512
    %20 = vst.msk [vmem:[#allocation2] sm:$0x1] %vm19, %v18
    %s21 = scalar_lea.vmem [#allocation3], 1
    %v22 = vld [vmem:[%s21] sm:$0x1]
    %23 = vrot.lane.b32.xlu0 %v22, 8
    %v24 = vpop.permute.xlu0 %23
    %vm25 = vcmask 130112
    %26 = vst.msk [vmem:[#allocation2] sm:$0x1] %vm25, %v24
    %s28 = ssub.s32 2, 1
    %v29 = vld [vmem:[#allocation2] sm:%s28]
    %s31 = ssub.s32 2, 1
    %32 = vst [vmem:[%s1] sm:%s31] %v29
    %33 = vsyncpa [#allocation1], 1

// kernel: div.9
$region0: #{div.9}
  %s0 = inlined_call_operand.vmem [shape: f32[16], index: 0, kind: input, shape index: {}]
  %s1 = inlined_call_operand.vmem [shape: f32[2,8], index: 1, kind: output, shape index: {}]
  $region1: #{div.9} parent=0
    #allocation0 [shape = 'u8[4096]{0}', space=vmem, size = 0x1000, scoped, tag = 'scoped mem for output reshape']
    #allocation1 [shape = 'u8[4096]{0}', space=vmem, size = 0x1000, scoped, tag = 'scoped mem for input reshape']
    %s3 = ssub.s32 2, 1
    %v4 = vld [vmem:[%s0] sm:%s3]
    %5 = vst [vmem:[#allocation1] sm:%s3] %v4
    %v6 = vld [vmem:[#allocation1] sm:$0x1]
    %vm7 = vcmask 64512
    %8 = vst.msk [vmem:[#allocation0] sm:$0x1] %vm7, %v6
    %v9 = vld [vmem:[#allocation1] sm:$0x1]
    %10 = vrot.lane.b32.xlu0 %v9, 120
    %v11 = vpop.permute.xlu0 %10
    %vm12 = vcmask 64512
    %s13 = scalar_lea.vmem [#allocation0], 1
    %14 = vst.msk [vmem:[%s13] sm:$0x1] %vm12, %v11
    %s16 = ssub.s32 4, 1
    %v17 = vld [vmem:[#allocation0] sm:%s16]
    %s19 = ssub.s32 4, 1
    %20 = vst [vmem:[%s1] sm:%s19] %v17

// kernel: joint_ie_forward.4
$region0: #{joint_ie_forward.4}
  #allocation0 [shape = 'u32[]', space=smem, size = 0x4, offset = 0x4, fixed_abs, tag = 'smem constant byte address 0x4 - core index']
  #allocation1 [shape = 'u32[72,128]{1,0:T(1,128)}', space=vmem, size = 0x9000, scoped, tag = 'internal scratch']
  %s0 = inlined_call_operand.vmem [shape: f32[32,32], index: 0, kind: input, shape index: {}]
  %s1 = inlined_call_operand.vmem [shape: f32[1,32], index: 1, kind: input, shape index: {}]
  %s2 = inlined_call_operand.vmem [shape: s32[16,1], index: 2, kind: input, shape index: {}]
  %s3 = inlined_call_operand.vmem [shape: s32[16,1], index: 3, kind: input, shape index: {}]
  %s4 = inlined_call_operand.vmem [shape: f32[16,1], index: 4, kind: input, shape index: {}]
  %s5 = inlined_call_operand.vmem [shape: f32[16,32], index: 5, kind: input, shape index: {}]
  %s6 = inlined_call_operand.vmem [shape: f32[16,32], index: 6, kind: input, shape index: {}]
  %s7 = inlined_call_operand.vmem [shape: f32[16,64], index: 7, kind: input, shape index: {}]
  %s8 = inlined_call_operand.vmem [shape: f32[32,64], index: 8, kind: input, shape index: {}]
  %s9 = inlined_call_operand.vmem [shape: f32[32,64], index: 9, kind: input, shape index: {}]
  %s10 = inlined_call_operand.vmem [shape: f32[64,64], index: 10, kind: input, shape index: {}]
  %s11 = inlined_call_operand.vmem [shape: f32[32,64], index: 11, kind: input, shape index: {}]
  %s12 = inlined_call_operand.vmem [shape: f32[1,64], index: 12, kind: input, shape index: {}]
  %s13 = inlined_call_operand.vmem [shape: f32[64,64], index: 13, kind: input, shape index: {}]
  %s14 = inlined_call_operand.vmem [shape: f32[1,64], index: 14, kind: input, shape index: {}]
  %s15 = inlined_call_operand.vmem [shape: f32[64,128], index: 15, kind: input, shape index: {}]
  %s16 = inlined_call_operand.vmem [shape: f32[1,128], index: 16, kind: input, shape index: {}]
  %s17 = inlined_call_operand.vmem [shape: f32[16,128], index: 17, kind: input, shape index: {}]
  %s18 = inlined_call_operand.vmem [shape: f32[16,160], index: 18, kind: output, shape index: {0}]
  %s19 = inlined_call_operand.vmem [shape: f32[16,128], index: 19, kind: output, shape index: {1}]
  %s20 = inlined_call_operand.vmem [shape: f32[1,128], index: 20, kind: output, shape index: {2}]
  %21 = xla_tuple %s18, %s19, %s20
  %s22 = sld [smem:[#allocation0]]
  $region98: #{joint_ie_forward.4} parent=0
    _
  %s24 = ssub.s32 1, %s22
  %s25 = scalar_select 0, %s24, %s22
  // Predicated region
  $region2: #{joint_ie_forward.4} parent=0 // pred_check
    _
  $region3: #{joint_ie_forward.4} parent=0 // pred_check_branch
    %27 = sbr.rel (0) target = $region5
  $region4: #{joint_ie_forward.4} parent=0 // pred_region
    _
  $region5: #{joint_ie_forward.4} parent=0 // pred_fallthru
    _
  // Predicated region
  $region6: #{joint_ie_forward.4} parent=0 // pred_check
    _
  $region7: #{joint_ie_forward.4} parent=0 // pred_check_branch
    %29 = sbr.rel (0) target = $region9
  $region8: #{joint_ie_forward.4} parent=0 // pred_region
    _
  $region9: #{joint_ie_forward.4} parent=0 // pred_fallthru
    _
  // Predicated region
  $region10: #{joint_ie_forward.4} parent=0 // pred_check
    _
  $region11: #{joint_ie_forward.4} parent=0 // pred_check_branch
    %31 = sbr.rel (0) target = $region13
  $region12: #{joint_ie_forward.4} parent=0 // pred_region
    _
  $region13: #{joint_ie_forward.4} parent=0 // pred_fallthru
    _
  // Predicated region
  $region14: #{joint_ie_forward.4} parent=0 // pred_check
    _
  $region15: #{joint_ie_forward.4} parent=0 // pred_check_branch
    %33 = sbr.rel (0) target = $region17
  $region16: #{joint_ie_forward.4} parent=0 // pred_region
    _
  $region17: #{joint_ie_forward.4} parent=0 // pred_fallthru
    _
  // Predicated region
  $region18: #{joint_ie_forward.4} parent=0 // pred_check
    _
  $region19: #{joint_ie_forward.4} parent=0 // pred_check_branch
    %35 = sbr.rel (0) target = $region21
  $region20: #{joint_ie_forward.4} parent=0 // pred_region
    _
  $region21: #{joint_ie_forward.4} parent=0 // pred_fallthru
    _
  // Predicated region
  $region22: #{joint_ie_forward.4} parent=0 // pred_check
    _
  $region23: #{joint_ie_forward.4} parent=0 // pred_check_branch
    %37 = sbr.rel (0) target = $region25
  $region24: #{joint_ie_forward.4} parent=0 // pred_region
    _
  $region25: #{joint_ie_forward.4} parent=0 // pred_fallthru
    _
  // Predicated region
  $region26: #{joint_ie_forward.4} parent=0 // pred_check
    _
  $region27: #{joint_ie_forward.4} parent=0 // pred_check_branch
    %39 = sbr.rel (0) target = $region29
  $region28: #{joint_ie_forward.4} parent=0 // pred_region
    _
  $region29: #{joint_ie_forward.4} parent=0 // pred_fallthru
    _
  // Predicated region
  $region30: #{joint_ie_forward.4} parent=0 // pred_check
    _
  $region31: #{joint_ie_forward.4} parent=0 // pred_check_branch
    %41 = sbr.rel (0) target = $region33
  $region32: #{joint_ie_forward.4} parent=0 // pred_region
    _
  $region33: #{joint_ie_forward.4} parent=0 // pred_fallthru
    _
  // Predicated region
  $region34: #{joint_ie_forward.4} parent=0 // pred_check
    _
  $region35: #{joint_ie_forward.4} parent=0 // pred_check_branch
    %43 = sbr.rel (0) target = $region37
  $region36: #{joint_ie_forward.4} parent=0 // pred_region
    _
  $region37: #{joint_ie_forward.4} parent=0 // pred_fallthru
    _
  // Predicated region
  $region38: #{joint_ie_forward.4} parent=0 // pred_check
    _
  $region39: #{joint_ie_forward.4} parent=0 // pred_check_branch
    %45 = sbr.rel (0) target = $region41
  $region40: #{joint_ie_forward.4} parent=0 // pred_region
    _
  $region41: #{joint_ie_forward.4} parent=0 // pred_fallthru
    _
  // Predicated region
  $region42: #{joint_ie_forward.4} parent=0 // pred_check
    _
  $region43: #{joint_ie_forward.4} parent=0 // pred_check_branch
    %47 = sbr.rel (0) target = $region45
  $region44: #{joint_ie_forward.4} parent=0 // pred_region
    _
  $region45: #{joint_ie_forward.4} parent=0 // pred_fallthru
    _
  // Predicated region
  $region46: #{joint_ie_forward.4} parent=0 // pred_check
    _
  $region47: #{joint_ie_forward.4} parent=0 // pred_check_branch
    %49 = sbr.rel (0) target = $region49
  $region48: #{joint_ie_forward.4} parent=0 // pred_region
    _
  $region49: #{joint_ie_forward.4} parent=0 // pred_fallthru
    _
  // Predicated region
  $region50: #{joint_ie_forward.4} parent=0 // pred_check
    _
  $region51: #{joint_ie_forward.4} parent=0 // pred_check_branch
    %51 = sbr.rel (0) target = $region53
  $region52: #{joint_ie_forward.4} parent=0 // pred_region
    _
  $region53: #{joint_ie_forward.4} parent=0 // pred_fallthru
    _
  // Predicated region
  $region54: #{joint_ie_forward.4} parent=0 // pred_check
    _
  $region55: #{joint_ie_forward.4} parent=0 // pred_check_branch
    %53 = sbr.rel (0) target = $region57
  $region56: #{joint_ie_forward.4} parent=0 // pred_region
    _
  $region57: #{joint_ie_forward.4} parent=0 // pred_fallthru
    _
  // Predicated region
  $region58: #{joint_ie_forward.4} parent=0 // pred_check
    _
  $region59: #{joint_ie_forward.4} parent=0 // pred_check_branch
    %55 = sbr.rel (0) target = $region61
  $region60: #{joint_ie_forward.4} parent=0 // pred_region
    _
  $region61: #{joint_ie_forward.4} parent=0 // pred_fallthru
    _
  // Predicated region
  $region62: #{joint_ie_forward.4} parent=0 // pred_check
    _
  $region63: #{joint_ie_forward.4} parent=0 // pred_check_branch
    %57 = sbr.rel (0) target = $region65
  $region64: #{joint_ie_forward.4} parent=0 // pred_region
    _
  $region65: #{joint_ie_forward.4} parent=0 // pred_fallthru
    _
  // Predicated region
  $region66: #{joint_ie_forward.4} parent=0 // pred_check
    _
  $region67: #{joint_ie_forward.4} parent=0 // pred_check_branch
    %59 = sbr.rel (0) target = $region69
  $region68: #{joint_ie_forward.4} parent=0 // pred_region
    _
  $region69: #{joint_ie_forward.4} parent=0 // pred_fallthru
    _
  // Predicated region
  $region70: #{joint_ie_forward.4} parent=0 // pred_check
    _
  $region71: #{joint_ie_forward.4} parent=0 // pred_check_branch
    %61 = sbr.rel (0) target = $region73
  $region72: #{joint_ie_forward.4} parent=0 // pred_region
    _
  $region73: #{joint_ie_forward.4} parent=0 // pred_fallthru
    _
  %v62 = vld [vmem:[%s0] sm:$0xff]
  %v63 = vld [vmem:[%s0 + $0x8] sm:$0xff]
  %v64 = vld [vmem:[%s0 + $0x10] sm:$0xff]
  %v65 = vld [vmem:[%s0 + $0x18] sm:$0xff]
  %v66 = vld [vmem:[%s4] sm:$0xff]
  %v67 = vld [vmem:[%s4 + $0x8] sm:$0xff]
  %v68 = vld [vmem:[%s1] sm:$0x1]
  %vm69 = vcmask 261120
  %v71 = vsel %vm69, %v68, 0
  %v74 = vsel %vm69, %v62, 0
  %v77 = vsel %vm69, %v63, 0
  %v80 = vsel %vm69, %v64, 0
  %v83 = vsel %vm69, %v65, 0
  %85 = vmatpush.xpose.msra.mxu0 0.0
  %86 = vmatpush.xpose.msra.mxu0 0.0
  %87 = vmatpush.xpose.msra.mxu0 0.0
  %88 = vmatpush.xpose.msra.mxu0 0.0
  %89 = vmatpush.xpose.msra.mxu0 0.0
  %90 = vmatpush.xpose.msra.mxu0 0.0
  %91 = vmatpush.xpose.msra.mxu0 0.0
  %92 = vmatpush.xpose.msra.mxu0 0.0
  %93 = vmatpush.xpose.msra.mxu0 0.0
  %94 = vmatpush.xpose.msra.mxu0 0.0
  %95 = vmatpush.xpose.msra.mxu0 0.0
  %96 = vmatpush.xpose.msra.mxu0 0.0
  %97 = vmatpush.xpose.msra.mxu0 %v83
  %98 = vmatpush.xpose.msra.mxu0 %v80
  %99 = vmatpush.xpose.msra.mxu0 %v77
  %100 = vmatpush.xpose.msra.mxu0 %v74
  %101 = vmatmul.f32.gmra.mxu0 %v71
  %v102 = vpop.f32.mrf.mxu0
  %v103 = vadd.f32 0.0, %v102
  %104 = vdwg.mxu0
  %v105 = vlaneseq
  %v106 = vand.u32 %v105, 127
  %v107 = vld [vmem:[%s2] sm:$0xff]
  %v108 = vld [vmem:[%s2 + $0x8] sm:$0xff]
  %109 = vset.pattern.permute.xlu0 0
  %110 = vperm.xlu0 %109, %v107
  %v111 = vpop.permute.xlu0 %110
  %112 = vset.pattern.permute.xlu0 0
  %113 = vperm.xlu0 %112, %v108
  %v114 = vpop.permute.xlu0 %113
  %vm115 = vcmp.ge.s32.totalorder %v106, %v111
  %vm116 = vcmp.ge.s32.totalorder %v106, %v114
  %v117 = vld [vmem:[%s3] sm:$0xff]
  %v118 = vld [vmem:[%s3 + $0x8] sm:$0xff]
  %119 = vset.pattern.permute.xlu0 0
  %120 = vperm.xlu0 %119, %v117
  %v121 = vpop.permute.xlu0 %120
  %122 = vset.pattern.permute.xlu0 0
  %123 = vperm.xlu0 %122, %v118
  %v124 = vpop.permute.xlu0 %123
  %vm125 = vcmp.le.s32.totalorder %v106, %v121
  %vm126 = vcmp.le.s32.totalorder %v106, %v124
  %vm127 = vmand %vm115, %vm125
  %vm128 = vmand %vm116, %vm126
  %v129 = vperm.slane %v103, 0
  %v130 = vsel %vm127, %v129, -1e+30
  %v131 = vsel %vm128, %v129, -1e+30
  %v132 = vsel %vm69, %v130, -inf
  %133 = vmax.xlane.f32.xlu0 %v132
  %v134 = vpop.xlane.xlu0 %133
  %v135 = vsel %vm69, %v131, -inf
  %136 = vmax.xlane.f32.xlu0 %v135
  %v137 = vpop.xlane.xlu0 %136
  %v138 = vsub.f32 %v130, %v134
  %v139 = vsub.f32 %v131, %v137
  %v140 = vmul.f32 %v138, 1.442695
  %v141 = vpow.pop %v140
  %v142 = vmul.f32 %v139, 1.442695
  %v143 = vpow.pop %v142
  %v144 = vsel %vm69, %v141, 0.0
  %145 = vadd.xlane.f32.xlu0 %v144
  %v146 = vpop.xlane.xlu0 %145
  %v147 = vsel %vm69, %v143, 0.0
  %148 = vadd.xlane.f32.xlu0 %v147
  %v149 = vpop.xlane.xlu0 %148
  %v150 = vrcp.pop %v146
  %v151 = vmul.f32 %v146, %v150
  %v152 = vsub.f32 1.0, %v151
  %v153 = vmul.f32 %v150, %v152
  %v154 = vadd.f32 %v150, %v153
  %vm155 = vweird.f32 %v146
  %vm156 = vweird.f32 %v150
  %vm157 = vmor %vm155, %vm156
  %v158 = vsel %vm157, %v150, %v154
  %v159 = vand.u32 2147483647, %v146
  %vm160 = vcmp.eq.f32.partialorder %v159, 8.507059e+37
  %v161 = vand.u32 %v146, 2147483648
  %v162 = vor.u32 1.1754944e-38, %v161
  %v163 = vsel %vm160, %v162, %v158
  %v164 = vmul.f32 %v141, %v163
  %v165 = vrcp.pop %v149
  %v166 = vmul.f32 %v149, %v165
  %v167 = vsub.f32 1.0, %v166
  %v168 = vmul.f32 %v165, %v167
  %v169 = vadd.f32 %v165, %v168
  %vm170 = vweird.f32 %v149
  %vm171 = vweird.f32 %v165
  %vm172 = vmor %vm170, %vm171
  %v173 = vsel %vm172, %v165, %v169
  %v174 = vand.u32 2147483647, %v149
  %vm175 = vcmp.eq.f32.partialorder %v174, 8.507059e+37
  %v176 = vand.u32 %v149, 2147483648
  %v177 = vor.u32 1.1754944e-38, %v176
  %v178 = vsel %vm175, %v177, %v173
  %v179 = vmul.f32 %v143, %v178
  %v181 = vsel %vm69, %v164, 0
  %v184 = vsel %vm69, %v179, 0
  %186 = vmatpush.msra.mxu0 0.0
  %187 = vmatpush.msra.mxu0 0.0
  %188 = vmatpush.msra.mxu0 0.0
  %189 = vmatpush.msra.mxu0 0.0
  %190 = vmatpush.msra.mxu0 0.0
  %191 = vmatpush.msra.mxu0 0.0
  %192 = vmatpush.msra.mxu0 0.0
  %193 = vmatpush.msra.mxu0 0.0
  %194 = vmatpush.msra.mxu0 0.0
  %195 = vmatpush.msra.mxu0 0.0
  %196 = vmatpush.msra.mxu0 0.0
  %197 = vmatpush.msra.mxu0 0.0
  %198 = vmatpush.msra.mxu0 %v65
  %199 = vmatpush.msra.mxu0 %v64
  %200 = vmatpush.msra.mxu0 %v63
  %201 = vmatpush.msra.mxu0 %v62
  %202 = vmatmul.f32.gmra.mxu0 %v181
  %v203 = vpop.f32.mrf.mxu0
  %v204 = vadd.f32 0.0, %v203
  %205 = vmatmul.f32.gmra.mxu0 %v184
  %v206 = vpop.f32.mrf.mxu0
  %v207 = vadd.f32 0.0, %v206
  %208 = vdwg.mxu0
  %210 = vset.pattern.permute.xlu0 0
  %211 = vperm.xlu0 %210, %v66
  %v212 = vpop.permute.xlu0 %211
  %215 = vset.pattern.permute.xlu0 0
  %216 = vperm.xlu0 %215, %v67
  %v217 = vpop.permute.xlu0 %216
  %v219 = vmul.f32 %v204, %v212
  %v220 = vmul.f32 %v207, %v217
  %v221 = vld [vmem:[%s5] sm:$0xff]
  %v222 = vld [vmem:[%s5 + $0x8] sm:$0xff]
  %v223 = vmul.f32 %v221, %v212
  %v224 = vmul.f32 %v222, %v217
  %v225 = vld [vmem:[%s6] sm:$0xff]
  %v226 = vld [vmem:[%s6 + $0x8] sm:$0xff]
  %v227 = vmul.f32 %v225, %v212
  %v228 = vmul.f32 %v226, %v217
  %v229 = vld [vmem:[%s7] sm:$0xff]
  %v230 = vld [vmem:[%s7 + $0x8] sm:$0xff]
  %v231 = vmul.f32 %v229, %v212
  %v232 = vmul.f32 %v230, %v217
  %233 = vst.msk [vmem:[%s18] sm:$0xff] %vm69, %v223
  %234 = vst.msk [vmem:[%s18 + $0x10] sm:$0xff] %vm69, %v224
  %237 = vrot.lane.b32.xlu0 %v227, 32
  %v238 = vpop.permute.xlu0 %237
  %239 = vrot.lane.b32.xlu0 %v228, 32
  %v240 = vpop.permute.xlu0 %239
  %vm243 = vcmask 523520
  %244 = vst.msk [vmem:[%s18] sm:$0xff] %vm243, %v238
  %245 = vst.msk [vmem:[%s18 + $0x10] sm:$0xff] %vm243, %v240
  %248 = vrot.lane.b32.xlu0 %v231, 64
  %v249 = vpop.permute.xlu0 %248
  %250 = vrot.lane.b32.xlu0 %v232, 64
  %v251 = vpop.permute.xlu0 %250
  %vm254 = vcmask 1048064
  %255 = vst.msk [vmem:[%s18] sm:$0xff] %vm254, %v249
  %256 = vst.msk [vmem:[%s18 + $0x10] sm:$0xff] %vm254, %v251
  %257 = vst.msk [vmem:[%s18 + $0x8] sm:$0xff] %vm69, %v219
  %258 = vst.msk [vmem:[%s18 + $0x18] sm:$0xff] %vm69, %v220
  %v259 = vld [vmem:[%s8] sm:$0xff]
  %v260 = vld [vmem:[%s8 + $0x8] sm:$0xff]
  %v261 = vld [vmem:[%s8 + $0x10] sm:$0xff]
  %v262 = vld [vmem:[%s8 + $0x18] sm:$0xff]
  %v263 = vld [vmem:[%s9] sm:$0xff]
  %v264 = vld [vmem:[%s9 + $0x8] sm:$0xff]
  %v265 = vld [vmem:[%s9 + $0x10] sm:$0xff]
  %v266 = vld [vmem:[%s9 + $0x18] sm:$0xff]
  %v267 = vsel %vm69, %v227, 0
  %v269 = vsel %vm69, %v228, 0
  %271 = vmatpush.msra.mxu0 0.0
  %272 = vmatpush.msra.mxu0 0.0
  %273 = vmatpush.msra.mxu0 0.0
  %274 = vmatpush.msra.mxu0 0.0
  %275 = vmatpush.msra.mxu0 0.0
  %276 = vmatpush.msra.mxu0 0.0
  %277 = vmatpush.msra.mxu0 0.0
  %278 = vmatpush.msra.mxu0 0.0
  %279 = vmatpush.msra.mxu0 0.0
  %280 = vmatpush.msra.mxu0 0.0
  %281 = vmatpush.msra.mxu0 0.0
  %282 = vmatpush.msra.mxu0 0.0
  %283 = vmatpush.msra.mxu0 %v266
  %284 = vmatpush.msra.mxu0 %v265
  %285 = vmatpush.msra.mxu0 %v264
  %286 = vmatpush.msra.mxu0 %v263
  %287 = vmatmul.f32.gmra.mxu0 %v267
  %v288 = vpop.f32.mrf.mxu0
  %v289 = vadd.f32 0.0, %v288
  %290 = vmatmul.f32.gmra.mxu0 %v269
  %v291 = vpop.f32.mrf.mxu0
  %v292 = vadd.f32 0.0, %v291
  %293 = vdwg.mxu0
  %v295 = vsel %vm69, %v223, 0
  %v298 = vsel %vm69, %v224, 0
  %300 = vmatpush.msra.mxu0 0.0
  %301 = vmatpush.msra.mxu0 0.0
  %302 = vmatpush.msra.mxu0 0.0
  %303 = vmatpush.msra.mxu0 0.0
  %304 = vmatpush.msra.mxu0 0.0
  %305 = vmatpush.msra.mxu0 0.0
  %306 = vmatpush.msra.mxu0 0.0
  %307 = vmatpush.msra.mxu0 0.0
  %308 = vmatpush.msra.mxu0 0.0
  %309 = vmatpush.msra.mxu0 0.0
  %310 = vmatpush.msra.mxu0 0.0
  %311 = vmatpush.msra.mxu0 0.0
  %312 = vmatpush.msra.mxu0 %v262
  %313 = vmatpush.msra.mxu0 %v261
  %314 = vmatpush.msra.mxu0 %v260
  %315 = vmatpush.msra.mxu0 %v259
  %316 = vmatmul.f32.gmra.mxu0 %v295
  %v317 = vpop.f32.mrf.mxu0
  %v318 = vadd.f32 %v289, %v317
  %319 = vmatmul.f32.gmra.mxu0 %v298
  %v320 = vpop.f32.mrf.mxu0
  %v321 = vadd.f32 %v292, %v320
  %322 = vdwg.mxu0
  %v323 = vld [vmem:[%s10] sm:$0xff]
  %v324 = vld [vmem:[%s10 + $0x8] sm:$0xff]
  %v325 = vld [vmem:[%s10 + $0x10] sm:$0xff]
  %v326 = vld [vmem:[%s10 + $0x18] sm:$0xff]
  %v327 = vld [vmem:[%s10 + $0x20] sm:$0xff]
  %v328 = vld [vmem:[%s10 + $0x28] sm:$0xff]
  %v329 = vld [vmem:[%s10 + $0x30] sm:$0xff]
  %v330 = vld [vmem:[%s10 + $0x38] sm:$0xff]
  %vm331 = vcmask 523264
  %v332 = vsel %vm331, %v231, 0
  %v334 = vsel %vm331, %v232, 0
  %336 = vmatpush.msra.mxu0 0.0
  %337 = vmatpush.msra.mxu0 0.0
  %338 = vmatpush.msra.mxu0 0.0
  %339 = vmatpush.msra.mxu0 0.0
  %340 = vmatpush.msra.mxu0 0.0
  %341 = vmatpush.msra.mxu0 0.0
  %342 = vmatpush.msra.mxu0 0.0
  %343 = vmatpush.msra.mxu0 0.0
  %344 = vmatpush.msra.mxu0 %v330
  %345 = vmatpush.msra.mxu0 %v329
  %346 = vmatpush.msra.mxu0 %v328
  %347 = vmatpush.msra.mxu0 %v327
  %348 = vmatpush.msra.mxu0 %v326
  %349 = vmatpush.msra.mxu0 %v325
  %350 = vmatpush.msra.mxu0 %v324
  %351 = vmatpush.msra.mxu0 %v323
  %352 = vmatmul.f32.gmra.mxu0 %v332
  %v353 = vpop.f32.mrf.mxu0
  %v354 = vadd.f32 0.0, %v353
  %355 = vmatmul.f32.gmra.mxu0 %v334
  %v356 = vpop.f32.mrf.mxu0
  %v357 = vadd.f32 0.0, %v356
  %358 = vdwg.mxu0
  %v359 = vadd.f32 %v318, %v354
  %v360 = vadd.f32 %v321, %v357
  %v361 = vld [vmem:[%s11] sm:$0xff]
  %v362 = vld [vmem:[%s11 + $0x8] sm:$0xff]
  %v363 = vld [vmem:[%s11 + $0x10] sm:$0xff]
  %v364 = vld [vmem:[%s11 + $0x18] sm:$0xff]
  %v366 = vsel %vm69, %v219, 0
  %v369 = vsel %vm69, %v220, 0
  %371 = vmatpush.msra.mxu0 0.0
  %372 = vmatpush.msra.mxu0 0.0
  %373 = vmatpush.msra.mxu0 0.0
  %374 = vmatpush.msra.mxu0 0.0
  %375 = vmatpush.msra.mxu0 0.0
  %376 = vmatpush.msra.mxu0 0.0
  %377 = vmatpush.msra.mxu0 0.0
  %378 = vmatpush.msra.mxu0 0.0
  %379 = vmatpush.msra.mxu0 0.0
  %380 = vmatpush.msra.mxu0 0.0
  %381 = vmatpush.msra.mxu0 0.0
  %382 = vmatpush.msra.mxu0 0.0
  %383 = vmatpush.msra.mxu0 %v364
  %384 = vmatpush.msra.mxu0 %v363
  %385 = vmatpush.msra.mxu0 %v362
  %386 = vmatpush.msra.mxu0 %v361
  %387 = vmatmul.f32.gmra.mxu0 %v366
  %v388 = vpop.f32.mrf.mxu0
  %v389 = vadd.f32 0.0, %v388
  %390 = vmatmul.f32.gmra.mxu0 %v369
  %v391 = vpop.f32.mrf.mxu0
  %v392 = vadd.f32 0.0, %v391
  %393 = vdwg.mxu0
  %v394 = vadd.f32 %v359, %v389
  %v395 = vadd.f32 %v360, %v392
  %v396 = vld [vmem:[%s12] sm:$0x1]
  %v398 = vperm.slane %v396, 0
  %v400 = vadd.f32 %v394, %v398
  %v401 = vadd.f32 %v395, %v398
  %v402 = vmax.f32 %v400, 0.0
  %v403 = vmax.f32 %v401, 0.0
  %v404 = vld [vmem:[%s13] sm:$0xff]
  %v405 = vld [vmem:[%s13 + $0x8] sm:$0xff]
  %v406 = vld [vmem:[%s13 + $0x10] sm:$0xff]
  %v407 = vld [vmem:[%s13 + $0x18] sm:$0xff]
  %v408 = vld [vmem:[%s13 + $0x20] sm:$0xff]
  %v409 = vld [vmem:[%s13 + $0x28] sm:$0xff]
  %v410 = vld [vmem:[%s13 + $0x30] sm:$0xff]
  %v411 = vld [vmem:[%s13 + $0x38] sm:$0xff]
  %v412 = vld [vmem:[%s14] sm:$0x1]
  %v414 = vperm.slane %v412, 0
  %v417 = vsel %vm331, %v402, 0
  %v420 = vsel %vm331, %v403, 0
  %422 = vmatpush.msra.mxu0 0.0
  %423 = vmatpush.msra.mxu0 0.0
  %424 = vmatpush.msra.mxu0 0.0
  %425 = vmatpush.msra.mxu0 0.0
  %426 = vmatpush.msra.mxu0 0.0
  %427 = vmatpush.msra.mxu0 0.0
  %428 = vmatpush.msra.mxu0 0.0
  %429 = vmatpush.msra.mxu0 0.0
  %430 = vmatpush.msra.mxu0 %v411
  %431 = vmatpush.msra.mxu0 %v410
  %432 = vmatpush.msra.mxu0 %v409
  %433 = vmatpush.msra.mxu0 %v408
  %434 = vmatpush.msra.mxu0 %v407
  %435 = vmatpush.msra.mxu0 %v406
  %436 = vmatpush.msra.mxu0 %v405
  %437 = vmatpush.msra.mxu0 %v404
  %438 = vmatmul.f32.gmra.mxu0 %v417
  %v439 = vpop.f32.mrf.mxu0
  %v440 = vadd.f32 %v414, %v439
  %441 = vmatmul.f32.gmra.mxu0 %v420
  %v442 = vpop.f32.mrf.mxu0
  %v443 = vadd.f32 %v414, %v442
  %444 = vdwg.mxu0
  %v445 = vmax.f32 %v440, 0.0
  %v446 = vmax.f32 %v443, 0.0
  %v447 = vld [vmem:[%s15] sm:$0xff]
  %v448 = vld [vmem:[%s15 + $0x8] sm:$0xff]
  %v449 = vld [vmem:[%s15 + $0x10] sm:$0xff]
  %v450 = vld [vmem:[%s15 + $0x18] sm:$0xff]
  %v451 = vld [vmem:[%s15 + $0x20] sm:$0xff]
  %v452 = vld [vmem:[%s15 + $0x28] sm:$0xff]
  %v453 = vld [vmem:[%s15 + $0x30] sm:$0xff]
  %v454 = vld [vmem:[%s15 + $0x38] sm:$0xff]
  %v455 = vld [vmem:[%s16] sm:$0x1]
  %v457 = vperm.slane %v455, 0
  %v460 = vsel %vm331, %v445, 0
  %v463 = vsel %vm331, %v446, 0
  %465 = vmatpush.msra.mxu0 0.0
  %466 = vmatpush.msra.mxu0 0.0
  %467 = vmatpush.msra.mxu0 0.0
  %468 = vmatpush.msra.mxu0 0.0
  %469 = vmatpush.msra.mxu0 0.0
  %470 = vmatpush.msra.mxu0 0.0
  %471 = vmatpush.msra.mxu0 0.0
  %472 = vmatpush.msra.mxu0 0.0
  %473 = vmatpush.msra.mxu0 %v454
  %474 = vmatpush.msra.mxu0 %v453
  %475 = vmatpush.msra.mxu0 %v452
  %476 = vmatpush.msra.mxu0 %v451
  %477 = vmatpush.msra.mxu0 %v450
  %478 = vmatpush.msra.mxu0 %v449
  %479 = vmatpush.msra.mxu0 %v448
  %480 = vmatpush.msra.mxu0 %v447
  %481 = vmatmul.f32.gmra.mxu0 %v460
  %v482 = vpop.f32.mrf.mxu0
  %v483 = vadd.f32 %v457, %v482
  %484 = vmatmul.f32.gmra.mxu0 %v463
  %v485 = vpop.f32.mrf.mxu0
  %v486 = vadd.f32 %v457, %v485
  %487 = vdwg.mxu0
  %488 = vst [vmem:[%s19] sm:$0xff] %v483
  %489 = vst [vmem:[%s19 + $0x8] sm:$0xff] %v486
  %v490 = vld [vmem:[%s17] sm:$0xff]
  %v491 = vld [vmem:[%s17 + $0x8] sm:$0xff]
  %vm492 = vcmp.lt.s32.totalorder %v106, 5
  %v493 = vsel %vm492, %v483, -1e+30
  %v494 = vsel %vm492, %v486, -1e+30
  %495 = vmax.xlane.f32.xlu0 %v493
  %v496 = vpop.xlane.xlu0 %495
  %497 = vmax.xlane.f32.xlu0 %v494
  %v498 = vpop.xlane.xlu0 %497
  %v499 = vsub.f32 %v493, %v496
  %v500 = vsub.f32 %v494, %v498
  %v501 = vmul.f32 %v499, 1.442695
  %v502 = vpow.pop %v501
  %v503 = vmul.f32 %v500, 1.442695
  %v504 = vpow.pop %v503
  %505 = vadd.xlane.f32.xlu0 %v502
  %v506 = vpop.xlane.xlu0 %505
  %507 = vadd.xlane.f32.xlu0 %v504
  %v508 = vpop.xlane.xlu0 %507
  %v509 = vlog2.pop %v506
  %v510 = vmul.f32 %v509, 0.6931472
  %v511 = vlog2.pop %v508
  %v512 = vmul.f32 %v511, 0.6931472
  %v513 = vadd.f32 %v510, %v496
  %v514 = vadd.f32 %v512, %v498
  %v515 = vsub.f32 %v493, %v513
  %v516 = vsub.f32 %v494, %v514
  %v517 = vmul.f32 %v490, %v515
  %v518 = vmul.f32 %v491, %v516
  %v519 = vadd.f32 %v517, %v518
  %520 = vadd.xlane.f32.xlu0 %v519
  %v521 = vpop.xlane.xlu0 %520
  %v522 = vrot.slane %v521, 4
  %v523 = vadd.f32 %v521, %v522
  %v524 = vrot.slane %v523, 2
  %v525 = vadd.f32 %v523, %v524
  %v526 = vrot.slane %v525, 1
  %v527 = vadd.f32 %v525, %v526
  %s528 = vtos %v527
  %s529 = ssub.f32 0.0, %s528
  %v530 = vstv %s529
  %v531 = vadd.f32 %v530, 0.0
  %532 = vst [vmem:[%s20] sm:$0x1] %v531
  // Predicated region
  $region74: #{joint_ie_forward.4} parent=0 // pred_check
    _
  $region75: #{joint_ie_forward.4} parent=0 // pred_check_branch
    %534 = sbr.rel (0) target = $region77
  $region76: #{joint_ie_forward.4} parent=0 // pred_region
    _
  $region77: #{joint_ie_forward.4} parent=0 // pred_fallthru
    _
  // Predicated region
  $region78: #{joint_ie_forward.4} parent=0 // pred_check
    _
  $region79: #{joint_ie_forward.4} parent=0 // pred_check_branch
    %536 = sbr.rel (0) target = $region81
  $region80: #{joint_ie_forward.4} parent=0 // pred_region
    _
  $region81: #{joint_ie_forward.4} parent=0 // pred_fallthru
    _
  // Predicated region
  $region82: #{joint_ie_forward.4} parent=0 // pred_check
    _
  $region83: #{joint_ie_forward.4} parent=0 // pred_check_branch
    %538 = sbr.rel (0) target = $region85
  $region84: #{joint_ie_forward.4} parent=0 // pred_region
    _
  $region85: #{joint_ie_forward.4} parent=0 // pred_fallthru
    _
  // Predicated region
  $region86: #{joint_ie_forward.4} parent=0 // pred_check
    _
  $region87: #{joint_ie_forward.4} parent=0 // pred_check_branch
    %540 = sbr.rel (0) target = $region89
  $region88: #{joint_ie_forward.4} parent=0 // pred_region
    _
  $region89: #{joint_ie_forward.4} parent=0 // pred_fallthru
    _
  // Predicated region
  $region90: #{joint_ie_forward.4} parent=0 // pred_check
    _
  $region91: #{joint_ie_forward.4} parent=0 // pred_check_branch
    %542 = sbr.rel (0) target = $region93
  $region92: #{joint_ie_forward.4} parent=0 // pred_region
    _
  $region93: #{joint_ie_forward.4} parent=0 // pred_fallthru
    _
  // Predicated region
  $region94: #{joint_ie_forward.4} parent=0 // pred_check
    _
  $region95: #{joint_ie_forward.4} parent=0 // pred_check_branch
    %544 = sbr.rel (0) target = $region97
  $region96: #{joint_ie_forward.4} parent=0 // pred_region
    _
  $region97: #{joint_ie_forward.4} parent=0 // pred_fallthru
    _

// kernel: joint_ie_forward.3
$region0: #{joint_ie_forward.3}
  #allocation0 [shape = 'u32[]', space=smem, size = 0x4, offset = 0x4, fixed_abs, tag = 'smem constant byte address 0x4 - core index']
  #allocation1 [shape = 'u32[72,128]{1,0:T(1,128)}', space=vmem, size = 0x9000, scoped, tag = 'internal scratch']
  %s0 = inlined_call_operand.vmem [shape: f32[32,64], index: 0, kind: input, shape index: {}]
  %s1 = inlined_call_operand.vmem [shape: f32[64,128], index: 1, kind: input, shape index: {}]
  %s2 = inlined_call_operand.vmem [shape: f32[32,128], index: 2, kind: input, shape index: {}]
  %s3 = inlined_call_operand.vmem [shape: f32[1,128], index: 3, kind: input, shape index: {}]
  %s4 = inlined_call_operand.vmem [shape: f32[16,2,32], index: 4, kind: output, shape index: {}]
  %s5 = sld [smem:[#allocation0]]
  $region26: #{joint_ie_forward.3} parent=0
    _
  %s7 = ssub.s32 1, %s5
  %s8 = scalar_select 0, %s7, %s5
  // Predicated region
  $region2: #{joint_ie_forward.3} parent=0 // pred_check
    _
  $region3: #{joint_ie_forward.3} parent=0 // pred_check_branch
    %10 = sbr.rel (0) target = $region5
  $region4: #{joint_ie_forward.3} parent=0 // pred_region
    _
  $region5: #{joint_ie_forward.3} parent=0 // pred_fallthru
    _
  // Predicated region
  $region6: #{joint_ie_forward.3} parent=0 // pred_check
    _
  $region7: #{joint_ie_forward.3} parent=0 // pred_check_branch
    %12 = sbr.rel (0) target = $region9
  $region8: #{joint_ie_forward.3} parent=0 // pred_region
    _
  $region9: #{joint_ie_forward.3} parent=0 // pred_fallthru
    _
  // Predicated region
  $region10: #{joint_ie_forward.3} parent=0 // pred_check
    _
  $region11: #{joint_ie_forward.3} parent=0 // pred_check_branch
    %14 = sbr.rel (0) target = $region13
  $region12: #{joint_ie_forward.3} parent=0 // pred_region
    _
  $region13: #{joint_ie_forward.3} parent=0 // pred_fallthru
    _
  // Predicated region
  $region14: #{joint_ie_forward.3} parent=0 // pred_check
    _
  $region15: #{joint_ie_forward.3} parent=0 // pred_check_branch
    %16 = sbr.rel (0) target = $region17
  $region16: #{joint_ie_forward.3} parent=0 // pred_region
    _
  $region17: #{joint_ie_forward.3} parent=0 // pred_fallthru
    _
  %v17 = vld [vmem:[%s0] sm:$0xff]
  %v18 = vld [vmem:[%s0 + $0x8] sm:$0xff]
  %v19 = vld [vmem:[%s0 + $0x10] sm:$0xff]
  %v20 = vld [vmem:[%s0 + $0x18] sm:$0xff]
  %v21 = vld [vmem:[%s1] sm:$0xff]
  %v22 = vld [vmem:[%s1 + $0x8] sm:$0xff]
  %v23 = vld [vmem:[%s1 + $0x10] sm:$0xff]
  %v24 = vld [vmem:[%s1 + $0x18] sm:$0xff]
  %v25 = vld [vmem:[%s1 + $0x20] sm:$0xff]
  %v26 = vld [vmem:[%s1 + $0x28] sm:$0xff]
  %v27 = vld [vmem:[%s1 + $0x30] sm:$0xff]
  %v28 = vld [vmem:[%s1 + $0x38] sm:$0xff]
  %v29 = vld [vmem:[%s3] sm:$0x1]
  %v31 = vperm.slane %v29, 0
  %vm33 = vcmask 523264
  %v35 = vsel %vm33, %v17, 0
  %v38 = vsel %vm33, %v18, 0
  %v41 = vsel %vm33, %v19, 0
  %v44 = vsel %vm33, %v20, 0
  %46 = vmatpush.msra.mxu0 0.0
  %47 = vmatpush.msra.mxu0 0.0
  %48 = vmatpush.msra.mxu0 0.0
  %49 = vmatpush.msra.mxu0 0.0
  %50 = vmatpush.msra.mxu0 0.0
  %51 = vmatpush.msra.mxu0 0.0
  %52 = vmatpush.msra.mxu0 0.0
  %53 = vmatpush.msra.mxu0 0.0
  %54 = vmatpush.msra.mxu0 %v28
  %55 = vmatpush.msra.mxu0 %v27
  %56 = vmatpush.msra.mxu0 %v26
  %57 = vmatpush.msra.mxu0 %v25
  %58 = vmatpush.msra.mxu0 %v24
  %59 = vmatpush.msra.mxu0 %v23
  %60 = vmatpush.msra.mxu0 %v22
  %61 = vmatpush.msra.mxu0 %v21
  %62 = vmatmul.f32.gmra.mxu0 %v35
  %v63 = vpop.f32.mrf.mxu0
  %v64 = vadd.f32 %v31, %v63
  %65 = vmatmul.f32.gmra.mxu0 %v38
  %v66 = vpop.f32.mrf.mxu0
  %v67 = vadd.f32 %v31, %v66
  %68 = vmatmul.f32.gmra.mxu0 %v41
  %v69 = vpop.f32.mrf.mxu0
  %v70 = vadd.f32 %v31, %v69
  %71 = vmatmul.f32.gmra.mxu0 %v44
  %v72 = vpop.f32.mrf.mxu0
  %v73 = vadd.f32 %v31, %v72
  %74 = vdwg.mxu0
  %v75 = vld [vmem:[%s2] sm:$0xff]
  %v76 = vld [vmem:[%s2 + $0x8] sm:$0xff]
  %v77 = vld [vmem:[%s2 + $0x10] sm:$0xff]
  %v78 = vld [vmem:[%s2 + $0x18] sm:$0xff]
  %vm79 = vcmask 261120
  %v81 = vsel %vm79, 0.0, 0
  %83 = vmatpush.msra.mxu0 0.0
  %84 = vmatpush.msra.mxu0 0.0
  %85 = vmatpush.msra.mxu0 0.0
  %86 = vmatpush.msra.mxu0 0.0
  %87 = vmatpush.msra.mxu0 0.0
  %88 = vmatpush.msra.mxu0 0.0
  %89 = vmatpush.msra.mxu0 0.0
  %90 = vmatpush.msra.mxu0 0.0
  %91 = vmatpush.msra.mxu0 0.0
  %92 = vmatpush.msra.mxu0 0.0
  %93 = vmatpush.msra.mxu0 0.0
  %94 = vmatpush.msra.mxu0 0.0
  %95 = vmatpush.msra.mxu0 %v78
  %96 = vmatpush.msra.mxu0 %v77
  %97 = vmatpush.msra.mxu0 %v76
  %98 = vmatpush.msra.mxu0 %v75
  %99 = vmatmul.f32.gmra.mxu0 %v81
  %v100 = vpop.f32.mrf.mxu0
  %v101 = vadd.f32 0.0, %v100
  %102 = vdwg.mxu0
  %v103 = vadd.f32 %v64, %v101
  %v104 = vxor.u32 %v103, 2147483648
  %v105 = vmul.f32 %v104, 1.442695
  %v106 = vpow.pop %v105
  %v107 = vadd.f32 %v106, 1.0
  %v108 = vrcp.pop %v107
  %v109 = vmul.f32 %v107, %v108
  %v110 = vsub.f32 1.0, %v109
  %v111 = vmul.f32 %v108, %v110
  %v112 = vadd.f32 %v108, %v111
  %vm113 = vweird.f32 %v107
  %vm114 = vweird.f32 %v108
  %vm115 = vmor %vm113, %vm114
  %v116 = vsel %vm115, %v108, %v112
  %v117 = vand.u32 2147483647, %v107
  %vm118 = vcmp.eq.f32.partialorder %v117, 8.507059e+37
  %v119 = vand.u32 %v107, 2147483648
  %v120 = vor.u32 1.1754944e-38, %v119
  %v121 = vsel %vm118, %v120, %v116
  %v122 = vmul.f32 1.0, %v121
  %v123 = vtanh.pop %v103
  %v124 = vmul.f32 %v122, 0.0
  %126 = vrot.lane.b32.xlu0 %v123, 64
  %v127 = vpop.permute.xlu0 %126
  %v129 = vmul.f32 %v122, %v127
  %131 = vrot.lane.b32.xlu0 %v129, 32
  %v132 = vpop.permute.xlu0 %131
  %v134 = vadd.f32 %v124, %v132
  %v135 = vtanh.pop %v134
  %137 = vrot.lane.b32.xlu0 %v135, 64
  %v138 = vpop.permute.xlu0 %137
  %v140 = vmul.f32 %v122, %v138
  %142 = vrot.lane.b32.xlu0 %v140, 32
  %v143 = vpop.permute.xlu0 %142
  %vm145 = vcmask 123904
  %146 = vst.msk [vmem:[%s4] sm:$0x3] %vm145, %v143
  %s147 = scalar_lea.vmem %s4, 30
  %vm148 = vcmask 255104
  %149 = vst.msk [vmem:[%s147] sm:$0x3] %vm148, %v143
  %v150 = vsel %vm79, %v143, 0
  %152 = vmatpush.msra.mxu0 0.0
  %153 = vmatpush.msra.mxu0 0.0
  %154 = vmatpush.msra.mxu0 0.0
  %155 = vmatpush.msra.mxu0 0.0
  %156 = vmatpush.msra.mxu0 0.0
  %157 = vmatpush.msra.mxu0 0.0
  %158 = vmatpush.msra.mxu0 0.0
  %159 = vmatpush.msra.mxu0 0.0
  %160 = vmatpush.msra.mxu0 0.0
  %161 = vmatpush.msra.mxu0 0.0
  %162 = vmatpush.msra.mxu0 0.0
  %163 = vmatpush.msra.mxu0 0.0
  %164 = vmatpush.msra.mxu0 %v78
  %165 = vmatpush.msra.mxu0 %v77
  %166 = vmatpush.msra.mxu0 %v76
  %167 = vmatpush.msra.mxu0 %v75
  %168 = vmatmul.f32.gmra.mxu0 %v150
  %v169 = vpop.f32.mrf.mxu0
  %v170 = vadd.f32 0.0, %v169
  %171 = vdwg.mxu0
  %v173 = vrot.slane %v170, 6
  %v175 = vadd.f32 %v64, %v173
  %v176 = vxor.u32 %v175, 2147483648
  %v177 = vmul.f32 %v176, 1.442695
  %v178 = vpow.pop %v177
  %v179 = vadd.f32 %v178, 1.0
  %v180 = vrcp.pop %v179
  %v181 = vmul.f32 %v179, %v180
  %v182 = vsub.f32 1.0, %v181
  %v183 = vmul.f32 %v180, %v182
  %v184 = vadd.f32 %v180, %v183
  %vm185 = vweird.f32 %v179
  %vm186 = vweird.f32 %v180
  %vm187 = vmor %vm185, %vm186
  %v188 = vsel %vm187, %v180, %v184
  %v189 = vand.u32 2147483647, %v179
  %vm190 = vcmp.eq.f32.partialorder %v189, 8.507059e+37
  %v191 = vand.u32 %v179, 2147483648
  %v192 = vor.u32 1.1754944e-38, %v191
  %v193 = vsel %vm190, %v192, %v188
  %v194 = vmul.f32 1.0, %v193
  %v195 = vtanh.pop %v175
  %v197 = vrot.slane %v134, 6
  %v199 = vmul.f32 %v194, %v197
  %201 = vrot.lane.b32.xlu0 %v195, 64
  %v202 = vpop.permute.xlu0 %201
  %v204 = vmul.f32 %v194, %v202
  %206 = vrot.lane.b32.xlu0 %v204, 32
  %v207 = vpop.permute.xlu0 %206
  %v209 = vadd.f32 %v199, %v207
  %v210 = vtanh.pop %v209
  %212 = vrot.lane.b32.xlu0 %v210, 64
  %v213 = vpop.permute.xlu0 %212
  %v215 = vmul.f32 %v194, %v213
  %217 = vrot.lane.b32.xlu0 %v215, 32
  %v218 = vpop.permute.xlu0 %217
  %s220 = scalar_lea.vmem %s4, 2
  %vm221 = vcmask 125954
  %222 = vst.msk [vmem:[%s220 - $0x2] sm:$0xc] %vm221, %v218
  %s223 = scalar_lea.vmem %s4, 28
  %vm224 = vcmask 257154
  %225 = vst.msk [vmem:[%s223 - $0x2] sm:$0xc] %vm224, %v218
  %v226 = vrot.slane %v215, 2
  %227 = vrot.lane.b32.xlu0 %v226, 32
  %v228 = vpop.permute.xlu0 %227
  %v229 = vsel %vm79, %v228, 0
  %231 = vmatpush.msra.mxu0 0.0
  %232 = vmatpush.msra.mxu0 0.0
  %233 = vmatpush.msra.mxu0 0.0
  %234 = vmatpush.msra.mxu0 0.0
  %235 = vmatpush.msra.mxu0 0.0
  %236 = vmatpush.msra.mxu0 0.0
  %237 = vmatpush.msra.mxu0 0.0
  %238 = vmatpush.msra.mxu0 0.0
  %239 = vmatpush.msra.mxu0 0.0
  %240 = vmatpush.msra.mxu0 0.0
  %241 = vmatpush.msra.mxu0 0.0
  %242 = vmatpush.msra.mxu0 0.0
  %243 = vmatpush.msra.mxu0 %v78
  %244 = vmatpush.msra.mxu0 %v77
  %245 = vmatpush.msra.mxu0 %v76
  %246 = vmatpush.msra.mxu0 %v75
  %247 = vmatmul.f32.gmra.mxu0 %v229
  %v248 = vpop.f32.mrf.mxu0
  %v249 = vadd.f32 0.0, %v248
  %250 = vdwg.mxu0
  %v252 = vrot.slane %v249, 4
  %v254 = vadd.f32 %v64, %v252
  %v255 = vxor.u32 %v254, 2147483648
  %v256 = vmul.f32 %v255, 1.442695
  %v257 = vpow.pop %v256
  %v258 = vadd.f32 %v257, 1.0
  %v259 = vrcp.pop %v258
  %v260 = vmul.f32 %v258, %v259
  %v261 = vsub.f32 1.0, %v260
  %v262 = vmul.f32 %v259, %v261
  %v263 = vadd.f32 %v259, %v262
  %vm264 = vweird.f32 %v258
  %vm265 = vweird.f32 %v259
  %vm266 = vmor %vm264, %vm265
  %v267 = vsel %vm266, %v259, %v263
  %v268 = vand.u32 2147483647, %v258
  %vm269 = vcmp.eq.f32.partialorder %v268, 8.507059e+37
  %v270 = vand.u32 %v258, 2147483648
  %v271 = vor.u32 1.1754944e-38, %v270
  %v272 = vsel %vm269, %v271, %v267
  %v273 = vmul.f32 1.0, %v272
  %v274 = vtanh.pop %v254
  %v276 = vrot.slane %v209, 6
  %v278 = vmul.f32 %v273, %v276
  %280 = vrot.lane.b32.xlu0 %v274, 64
  %v281 = vpop.permute.xlu0 %280
  %v283 = vmul.f32 %v273, %v281
  %285 = vrot.lane.b32.xlu0 %v283, 32
  %v286 = vpop.permute.xlu0 %285
  %v288 = vadd.f32 %v278, %v286
  %v289 = vtanh.pop %v288
  %291 = vrot.lane.b32.xlu0 %v289, 64
  %v292 = vpop.permute.xlu0 %291
  %v294 = vmul.f32 %v273, %v292
  %296 = vrot.lane.b32.xlu0 %v294, 32
  %v297 = vpop.permute.xlu0 %296
  %s299 = scalar_lea.vmem %s4, 4
  %vm300 = vcmask 128004
  %301 = vst.msk [vmem:[%s299 - $0x4] sm:$0x30] %vm300, %v297
  %s302 = scalar_lea.vmem %s4, 26
  %vm303 = vcmask 259204
  %304 = vst.msk [vmem:[%s302 - $0x4] sm:$0x30] %vm303, %v297
  %v305 = vrot.slane %v294, 4
  %306 = vrot.lane.b32.xlu0 %v305, 32
  %v307 = vpop.permute.xlu0 %306
  %v308 = vsel %vm79, %v307, 0
  %310 = vmatpush.msra.mxu0 0.0
  %311 = vmatpush.msra.mxu0 0.0
  %312 = vmatpush.msra.mxu0 0.0
  %313 = vmatpush.msra.mxu0 0.0
  %314 = vmatpush.msra.mxu0 0.0
  %315 = vmatpush.msra.mxu0 0.0
  %316 = vmatpush.msra.mxu0 0.0
  %317 = vmatpush.msra.mxu0 0.0
  %318 = vmatpush.msra.mxu0 0.0
  %319 = vmatpush.msra.mxu0 0.0
  %320 = vmatpush.msra.mxu0 0.0
  %321 = vmatpush.msra.mxu0 0.0
  %322 = vmatpush.msra.mxu0 %v78
  %323 = vmatpush.msra.mxu0 %v77
  %324 = vmatpush.msra.mxu0 %v76
  %325 = vmatpush.msra.mxu0 %v75
  %326 = vmatmul.f32.gmra.mxu0 %v308
  %v327 = vpop.f32.mrf.mxu0
  %v328 = vadd.f32 0.0, %v327
  %329 = vdwg.mxu0
  %v331 = vrot.slane %v328, 2
  %v333 = vadd.f32 %v64, %v331
  %v334 = vxor.u32 %v333, 2147483648
  %v335 = vmul.f32 %v334, 1.442695
  %v336 = vpow.pop %v335
  %v337 = vadd.f32 %v336, 1.0
  %v338 = vrcp.pop %v337
  %v339 = vmul.f32 %v337, %v338
  %v340 = vsub.f32 1.0, %v339
  %v341 = vmul.f32 %v338, %v340
  %v342 = vadd.f32 %v338, %v341
  %vm343 = vweird.f32 %v337
  %vm344 = vweird.f32 %v338
  %vm345 = vmor %vm343, %vm344
  %v346 = vsel %vm345, %v338, %v342
  %v347 = vand.u32 2147483647, %v337
  %vm348 = vcmp.eq.f32.partialorder %v347, 8.507059e+37
  %v349 = vand.u32 %v337, 2147483648
  %v350 = vor.u32 1.1754944e-38, %v349
  %v351 = vsel %vm348, %v350, %v346
  %v352 = vmul.f32 1.0, %v351
  %v353 = vtanh.pop %v333
  %v355 = vrot.slane %v288, 6
  %v357 = vmul.f32 %v352, %v355
  %359 = vrot.lane.b32.xlu0 %v353, 64
  %v360 = vpop.permute.xlu0 %359
  %v362 = vmul.f32 %v352, %v360
  %364 = vrot.lane.b32.xlu0 %v362, 32
  %v365 = vpop.permute.xlu0 %364
  %v367 = vadd.f32 %v357, %v365
  %v368 = vtanh.pop %v367
  %370 = vrot.lane.b32.xlu0 %v368, 64
  %v371 = vpop.permute.xlu0 %370
  %v373 = vmul.f32 %v352, %v371
  %375 = vrot.lane.b32.xlu0 %v373, 32
  %v376 = vpop.permute.xlu0 %375
  %s378 = scalar_lea.vmem %s4, 6
  %vm379 = vcmask 130054
  %380 = vst.msk [vmem:[%s378 - $0x6] sm:$0xc0] %vm379, %v376
  %s381 = scalar_lea.vmem %s4, 24
  %vm382 = vcmask 261254
  %383 = vst.msk [vmem:[%s381 - $0x6] sm:$0xc0] %vm382, %v376
  %v384 = vrot.slane %v373, 6
  %385 = vrot.lane.b32.xlu0 %v384, 32
  %v386 = vpop.permute.xlu0 %385
  %v387 = vsel %vm79, %v386, 0
  %389 = vmatpush.msra.mxu0 0.0
  %390 = vmatpush.msra.mxu0 0.0
  %391 = vmatpush.msra.mxu0 0.0
  %392 = vmatpush.msra.mxu0 0.0
  %393 = vmatpush.msra.mxu0 0.0
  %394 = vmatpush.msra.mxu0 0.0
  %395 = vmatpush.msra.mxu0 0.0
  %396 = vmatpush.msra.mxu0 0.0
  %397 = vmatpush.msra.mxu0 0.0
  %398 = vmatpush.msra.mxu0 0.0
  %399 = vmatpush.msra.mxu0 0.0
  %400 = vmatpush.msra.mxu0 0.0
  %401 = vmatpush.msra.mxu0 %v78
  %402 = vmatpush.msra.mxu0 %v77
  %403 = vmatpush.msra.mxu0 %v76
  %404 = vmatpush.msra.mxu0 %v75
  %405 = vmatmul.f32.gmra.mxu0 %v387
  %v406 = vpop.f32.mrf.mxu0
  %v407 = vadd.f32 0.0, %v406
  %408 = vdwg.mxu0
  %v409 = vadd.f32 %v67, %v407
  %v410 = vxor.u32 %v409, 2147483648
  %v411 = vmul.f32 %v410, 1.442695
  %v412 = vpow.pop %v411
  %v413 = vadd.f32 %v412, 1.0
  %v414 = vrcp.pop %v413
  %v415 = vmul.f32 %v413, %v414
  %v416 = vsub.f32 1.0, %v415
  %v417 = vmul.f32 %v414, %v416
  %v418 = vadd.f32 %v414, %v417
  %vm419 = vweird.f32 %v413
  %vm420 = vweird.f32 %v414
  %vm421 = vmor %vm419, %vm420
  %v422 = vsel %vm421, %v414, %v418
  %v423 = vand.u32 2147483647, %v413
  %vm424 = vcmp.eq.f32.partialorder %v423, 8.507059e+37
  %v425 = vand.u32 %v413, 2147483648
  %v426 = vor.u32 1.1754944e-38, %v425
  %v427 = vsel %vm424, %v426, %v422
  %v428 = vmul.f32 1.0, %v427
  %v429 = vtanh.pop %v409
  %v431 = vrot.slane %v367, 6
  %v433 = vmul.f32 %v428, %v431
  %435 = vrot.lane.b32.xlu0 %v429, 64
  %v436 = vpop.permute.xlu0 %435
  %v438 = vmul.f32 %v428, %v436
  %440 = vrot.lane.b32.xlu0 %v438, 32
  %v441 = vpop.permute.xlu0 %440
  %v443 = vadd.f32 %v433, %v441
  %v444 = vtanh.pop %v443
  %446 = vrot.lane.b32.xlu0 %v444, 64
  %v447 = vpop.permute.xlu0 %446
  %v449 = vmul.f32 %v428, %v447
  %451 = vrot.lane.b32.xlu0 %v449, 32
  %v452 = vpop.permute.xlu0 %451
  %s454 = scalar_lea.vmem %s4, 8
  %455 = vst.msk [vmem:[%s454] sm:$0x3] %vm145, %v452
  %s456 = scalar_lea.vmem %s4, 22
  %457 = vst.msk [vmem:[%s456] sm:$0x3] %vm148, %v452
  %v458 = vsel %vm79, %v452, 0
  %460 = vmatpush.msra.mxu0 0.0
  %461 = vmatpush.msra.mxu0 0.0
  %462 = vmatpush.msra.mxu0 0.0
  %463 = vmatpush.msra.mxu0 0.0
  %464 = vmatpush.msra.mxu0 0.0
  %465 = vmatpush.msra.mxu0 0.0
  %466 = vmatpush.msra.mxu0 0.0
  %467 = vmatpush.msra.mxu0 0.0
  %468 = vmatpush.msra.mxu0 0.0
  %469 = vmatpush.msra.mxu0 0.0
  %470 = vmatpush.msra.mxu0 0.0
  %471 = vmatpush.msra.mxu0 0.0
  %472 = vmatpush.msra.mxu0 %v78
  %473 = vmatpush.msra.mxu0 %v77
  %474 = vmatpush.msra.mxu0 %v76
  %475 = vmatpush.msra.mxu0 %v75
  %476 = vmatmul.f32.gmra.mxu0 %v458
  %v477 = vpop.f32.mrf.mxu0
  %v478 = vadd.f32 0.0, %v477
  %479 = vdwg.mxu0
  %v481 = vrot.slane %v478, 6
  %v483 = vadd.f32 %v67, %v481
  %v484 = vxor.u32 %v483, 2147483648
  %v485 = vmul.f32 %v484, 1.442695
  %v486 = vpow.pop %v485
  %v487 = vadd.f32 %v486, 1.0
  %v488 = vrcp.pop %v487
  %v489 = vmul.f32 %v487, %v488
  %v490 = vsub.f32 1.0, %v489
  %v491 = vmul.f32 %v488, %v490
  %v492 = vadd.f32 %v488, %v491
  %vm493 = vweird.f32 %v487
  %vm494 = vweird.f32 %v488
  %vm495 = vmor %vm493, %vm494
  %v496 = vsel %vm495, %v488, %v492
  %v497 = vand.u32 2147483647, %v487
  %vm498 = vcmp.eq.f32.partialorder %v497, 8.507059e+37
  %v499 = vand.u32 %v487, 2147483648
  %v500 = vor.u32 1.1754944e-38, %v499
  %v501 = vsel %vm498, %v500, %v496
  %v502 = vmul.f32 1.0, %v501
  %v503 = vtanh.pop %v483
  %v505 = vrot.slane %v443, 6
  %v507 = vmul.f32 %v502, %v505
  %509 = vrot.lane.b32.xlu0 %v503, 64
  %v510 = vpop.permute.xlu0 %509
  %v512 = vmul.f32 %v502, %v510
  %514 = vrot.lane.b32.xlu0 %v512, 32
  %v515 = vpop.permute.xlu0 %514
  %v517 = vadd.f32 %v507, %v515
  %v518 = vtanh.pop %v517
  %520 = vrot.lane.b32.xlu0 %v518, 64
  %v521 = vpop.permute.xlu0 %520
  %v523 = vmul.f32 %v502, %v521
  %525 = vrot.lane.b32.xlu0 %v523, 32
  %v526 = vpop.permute.xlu0 %525
  %s528 = scalar_lea.vmem %s4, 10
  %529 = vst.msk [vmem:[%s528 - $0x2] sm:$0xc] %vm221, %v526
  %s530 = scalar_lea.vmem %s4, 20
  %531 = vst.msk [vmem:[%s530 - $0x2] sm:$0xc] %vm224, %v526
  %v532 = vrot.slane %v523, 2
  %533 = vrot.lane.b32.xlu0 %v532, 32
  %v534 = vpop.permute.xlu0 %533
  %v535 = vsel %vm79, %v534, 0
  %537 = vmatpush.msra.mxu0 0.0
  %538 = vmatpush.msra.mxu0 0.0
  %539 = vmatpush.msra.mxu0 0.0
  %540 = vmatpush.msra.mxu0 0.0
  %541 = vmatpush.msra.mxu0 0.0
  %542 = vmatpush.msra.mxu0 0.0
  %543 = vmatpush.msra.mxu0 0.0
  %544 = vmatpush.msra.mxu0 0.0
  %545 = vmatpush.msra.mxu0 0.0
  %546 = vmatpush.msra.mxu0 0.0
  %547 = vmatpush.msra.mxu0 0.0
  %548 = vmatpush.msra.mxu0 0.0
  %549 = vmatpush.msra.mxu0 %v78
  %550 = vmatpush.msra.mxu0 %v77
  %551 = vmatpush.msra.mxu0 %v76
  %552 = vmatpush.msra.mxu0 %v75
  %553 = vmatmul.f32.gmra.mxu0 %v535
  %v554 = vpop.f32.mrf.mxu0
  %v555 = vadd.f32 0.0, %v554
  %556 = vdwg.mxu0
  %v558 = vrot.slane %v555, 4
  %v560 = vadd.f32 %v67, %v558
  %v561 = vxor.u32 %v560, 2147483648
  %v562 = vmul.f32 %v561, 1.442695
  %v563 = vpow.pop %v562
  %v564 = vadd.f32 %v563, 1.0
  %v565 = vrcp.pop %v564
  %v566 = vmul.f32 %v564, %v565
  %v567 = vsub.f32 1.0, %v566
  %v568 = vmul.f32 %v565, %v567
  %v569 = vadd.f32 %v565, %v568
  %vm570 = vweird.f32 %v564
  %vm571 = vweird.f32 %v565
  %vm572 = vmor %vm570, %vm571
  %v573 = vsel %vm572, %v565, %v569
  %v574 = vand.u32 2147483647, %v564
  %vm575 = vcmp.eq.f32.partialorder %v574, 8.507059e+37
  %v576 = vand.u32 %v564, 2147483648
  %v577 = vor.u32 1.1754944e-38, %v576
  %v578 = vsel %vm575, %v577, %v573
  %v579 = vmul.f32 1.0, %v578
  %v580 = vtanh.pop %v560
  %v582 = vrot.slane %v517, 6
  %v584 = vmul.f32 %v579, %v582
  %586 = vrot.lane.b32.xlu0 %v580, 64
  %v587 = vpop.permute.xlu0 %586
  %v589 = vmul.f32 %v579, %v587
  %591 = vrot.lane.b32.xlu0 %v589, 32
  %v592 = vpop.permute.xlu0 %591
  %v594 = vadd.f32 %v584, %v592
  %v595 = vtanh.pop %v594
  %597 = vrot.lane.b32.xlu0 %v595, 64
  %v598 = vpop.permute.xlu0 %597
  %v600 = vmul.f32 %v579, %v598
  %602 = vrot.lane.b32.xlu0 %v600, 32
  %v603 = vpop.permute.xlu0 %602
  %s605 = scalar_lea.vmem %s4, 12
  %606 = vst.msk [vmem:[%s605 - $0x4] sm:$0x30] %vm300, %v603
  %s607 = scalar_lea.vmem %s4, 18
  %608 = vst.msk [vmem:[%s607 - $0x4] sm:$0x30] %vm303, %v603
  %v609 = vrot.slane %v600, 4
  %610 = vrot.lane.b32.xlu0 %v609, 32
  %v611 = vpop.permute.xlu0 %610
  %v612 = vsel %vm79, %v611, 0
  %614 = vmatpush.msra.mxu0 0.0
  %615 = vmatpush.msra.mxu0 0.0
  %616 = vmatpush.msra.mxu0 0.0
  %617 = vmatpush.msra.mxu0 0.0
  %618 = vmatpush.msra.mxu0 0.0
  %619 = vmatpush.msra.mxu0 0.0
  %620 = vmatpush.msra.mxu0 0.0
  %621 = vmatpush.msra.mxu0 0.0
  %622 = vmatpush.msra.mxu0 0.0
  %623 = vmatpush.msra.mxu0 0.0
  %624 = vmatpush.msra.mxu0 0.0
  %625 = vmatpush.msra.mxu0 0.0
  %626 = vmatpush.msra.mxu0 %v78
  %627 = vmatpush.msra.mxu0 %v77
  %628 = vmatpush.msra.mxu0 %v76
  %629 = vmatpush.msra.mxu0 %v75
  %630 = vmatmul.f32.gmra.mxu0 %v612
  %v631 = vpop.f32.mrf.mxu0
  %v632 = vadd.f32 0.0, %v631
  %633 = vdwg.mxu0
  %v635 = vrot.slane %v632, 2
  %v637 = vadd.f32 %v67, %v635
  %v638 = vxor.u32 %v637, 2147483648
  %v639 = vmul.f32 %v638, 1.442695
  %v640 = vpow.pop %v639
  %v641 = vadd.f32 %v640, 1.0
  %v642 = vrcp.pop %v641
  %v643 = vmul.f32 %v641, %v642
  %v644 = vsub.f32 1.0, %v643
  %v645 = vmul.f32 %v642, %v644
  %v646 = vadd.f32 %v642, %v645
  %vm647 = vweird.f32 %v641
  %vm648 = vweird.f32 %v642
  %vm649 = vmor %vm647, %vm648
  %v650 = vsel %vm649, %v642, %v646
  %v651 = vand.u32 2147483647, %v641
  %vm652 = vcmp.eq.f32.partialorder %v651, 8.507059e+37
  %v653 = vand.u32 %v641, 2147483648
  %v654 = vor.u32 1.1754944e-38, %v653
  %v655 = vsel %vm652, %v654, %v650
  %v656 = vmul.f32 1.0, %v655
  %v657 = vtanh.pop %v637
  %v659 = vrot.slane %v594, 6
  %v661 = vmul.f32 %v656, %v659
  %663 = vrot.lane.b32.xlu0 %v657, 64
  %v664 = vpop.permute.xlu0 %663
  %v666 = vmul.f32 %v656, %v664
  %668 = vrot.lane.b32.xlu0 %v666, 32
  %v669 = vpop.permute.xlu0 %668
  %v671 = vadd.f32 %v661, %v669
  %v672 = vtanh.pop %v671
  %674 = vrot.lane.b32.xlu0 %v672, 64
  %v675 = vpop.permute.xlu0 %674
  %v677 = vmul.f32 %v656, %v675
  %679 = vrot.lane.b32.xlu0 %v677, 32
  %v680 = vpop.permute.xlu0 %679
  %s682 = scalar_lea.vmem %s4, 14
  %683 = vst.msk [vmem:[%s682 - $0x6] sm:$0xc0] %vm379, %v680
  %s684 = scalar_lea.vmem %s4, 16
  %685 = vst.msk [vmem:[%s684 - $0x6] sm:$0xc0] %vm382, %v680
  %v686 = vrot.slane %v677, 6
  %687 = vrot.lane.b32.xlu0 %v686, 32
  %v688 = vpop.permute.xlu0 %687
  %v689 = vsel %vm79, %v688, 0
  %691 = vmatpush.msra.mxu0 0.0
  %692 = vmatpush.msra.mxu0 0.0
  %693 = vmatpush.msra.mxu0 0.0
  %694 = vmatpush.msra.mxu0 0.0
  %695 = vmatpush.msra.mxu0 0.0
  %696 = vmatpush.msra.mxu0 0.0
  %697 = vmatpush.msra.mxu0 0.0
  %698 = vmatpush.msra.mxu0 0.0
  %699 = vmatpush.msra.mxu0 0.0
  %700 = vmatpush.msra.mxu0 0.0
  %701 = vmatpush.msra.mxu0 0.0
  %702 = vmatpush.msra.mxu0 0.0
  %703 = vmatpush.msra.mxu0 %v78
  %704 = vmatpush.msra.mxu0 %v77
  %705 = vmatpush.msra.mxu0 %v76
  %706 = vmatpush.msra.mxu0 %v75
  %707 = vmatmul.f32.gmra.mxu0 %v689
  %v708 = vpop.f32.mrf.mxu0
  %v709 = vadd.f32 0.0, %v708
  %710 = vdwg.mxu0
  %v711 = vadd.f32 %v70, %v709
  %v712 = vxor.u32 %v711, 2147483648
  %v713 = vmul.f32 %v712, 1.442695
  %v714 = vpow.pop %v713
  %v715 = vadd.f32 %v714, 1.0
  %v716 = vrcp.pop %v715
  %v717 = vmul.f32 %v715, %v716
  %v718 = vsub.f32 1.0, %v717
  %v719 = vmul.f32 %v716, %v718
  %v720 = vadd.f32 %v716, %v719
  %vm721 = vweird.f32 %v715
  %vm722 = vweird.f32 %v716
  %vm723 = vmor %vm721, %vm722
  %v724 = vsel %vm723, %v716, %v720
  %v725 = vand.u32 2147483647, %v715
  %vm726 = vcmp.eq.f32.partialorder %v725, 8.507059e+37
  %v727 = vand.u32 %v715, 2147483648
  %v728 = vor.u32 1.1754944e-38, %v727
  %v729 = vsel %vm726, %v728, %v724
  %v730 = vmul.f32 1.0, %v729
  %v731 = vtanh.pop %v711
  %v733 = vrot.slane %v671, 6
  %v735 = vmul.f32 %v730, %v733
  %737 = vrot.lane.b32.xlu0 %v731, 64
  %v738 = vpop.permute.xlu0 %737
  %v740 = vmul.f32 %v730, %v738
  %742 = vrot.lane.b32.xlu0 %v740, 32
  %v743 = vpop.permute.xlu0 %742
  %v745 = vadd.f32 %v735, %v743
  %v746 = vtanh.pop %v745
  %748 = vrot.lane.b32.xlu0 %v746, 64
  %v749 = vpop.permute.xlu0 %748
  %v751 = vmul.f32 %v730, %v749
  %753 = vrot.lane.b32.xlu0 %v751, 32
  %v754 = vpop.permute.xlu0 %753
  %756 = vst.msk [vmem:[%s684] sm:$0x3] %vm145, %v754
  %757 = vst.msk [vmem:[%s682] sm:$0x3] %vm148, %v754
  %v758 = vsel %vm79, %v754, 0
  %760 = vmatpush.msra.mxu0 0.0
  %761 = vmatpush.msra.mxu0 0.0
  %762 = vmatpush.msra.mxu0 0.0
  %763 = vmatpush.msra.mxu0 0.0
  %764 = vmatpush.msra.mxu0 0.0
  %765 = vmatpush.msra.mxu0 0.0
  %766 = vmatpush.msra.mxu0 0.0
  %767 = vmatpush.msra.mxu0 0.0
  %768 = vmatpush.msra.mxu0 0.0
  %769 = vmatpush.msra.mxu0 0.0
  %770 = vmatpush.msra.mxu0 0.0
  %771 = vmatpush.msra.mxu0 0.0
  %772 = vmatpush.msra.mxu0 %v78
  %773 = vmatpush.msra.mxu0 %v77
  %774 = vmatpush.msra.mxu0 %v76
  %775 = vmatpush.msra.mxu0 %v75
  %776 = vmatmul.f32.gmra.mxu0 %v758
  %v777 = vpop.f32.mrf.mxu0
  %v778 = vadd.f32 0.0, %v777
  %779 = vdwg.mxu0
  %v781 = vrot.slane %v778, 6
  %v783 = vadd.f32 %v70, %v781
  %v784 = vxor.u32 %v783, 2147483648
  %v785 = vmul.f32 %v784, 1.442695
  %v786 = vpow.pop %v785
  %v787 = vadd.f32 %v786, 1.0
  %v788 = vrcp.pop %v787
  %v789 = vmul.f32 %v787, %v788
  %v790 = vsub.f32 1.0, %v789
  %v791 = vmul.f32 %v788, %v790
  %v792 = vadd.f32 %v788, %v791
  %vm793 = vweird.f32 %v787
  %vm794 = vweird.f32 %v788
  %vm795 = vmor %vm793, %vm794
  %v796 = vsel %vm795, %v788, %v792
  %v797 = vand.u32 2147483647, %v787
  %vm798 = vcmp.eq.f32.partialorder %v797, 8.507059e+37
  %v799 = vand.u32 %v787, 2147483648
  %v800 = vor.u32 1.1754944e-38, %v799
  %v801 = vsel %vm798, %v800, %v796
  %v802 = vmul.f32 1.0, %v801
  %v803 = vtanh.pop %v783
  %v805 = vrot.slane %v745, 6
  %v807 = vmul.f32 %v802, %v805
  %809 = vrot.lane.b32.xlu0 %v803, 64
  %v810 = vpop.permute.xlu0 %809
  %v812 = vmul.f32 %v802, %v810
  %814 = vrot.lane.b32.xlu0 %v812, 32
  %v815 = vpop.permute.xlu0 %814
  %v817 = vadd.f32 %v807, %v815
  %v818 = vtanh.pop %v817
  %820 = vrot.lane.b32.xlu0 %v818, 64
  %v821 = vpop.permute.xlu0 %820
  %v823 = vmul.f32 %v802, %v821
  %825 = vrot.lane.b32.xlu0 %v823, 32
  %v826 = vpop.permute.xlu0 %825
  %828 = vst.msk [vmem:[%s607 - $0x2] sm:$0xc] %vm221, %v826
  %829 = vst.msk [vmem:[%s605 - $0x2] sm:$0xc] %vm224, %v826
  %v830 = vrot.slane %v823, 2
  %831 = vrot.lane.b32.xlu0 %v830, 32
  %v832 = vpop.permute.xlu0 %831
  %v833 = vsel %vm79, %v832, 0
  %835 = vmatpush.msra.mxu0 0.0
  %836 = vmatpush.msra.mxu0 0.0
  %837 = vmatpush.msra.mxu0 0.0
  %838 = vmatpush.msra.mxu0 0.0
  %839 = vmatpush.msra.mxu0 0.0
  %840 = vmatpush.msra.mxu0 0.0
  %841 = vmatpush.msra.mxu0 0.0
  %842 = vmatpush.msra.mxu0 0.0
  %843 = vmatpush.msra.mxu0 0.0
  %844 = vmatpush.msra.mxu0 0.0
  %845 = vmatpush.msra.mxu0 0.0
  %846 = vmatpush.msra.mxu0 0.0
  %847 = vmatpush.msra.mxu0 %v78
  %848 = vmatpush.msra.mxu0 %v77
  %849 = vmatpush.msra.mxu0 %v76
  %850 = vmatpush.msra.mxu0 %v75
  %851 = vmatmul.f32.gmra.mxu0 %v833
  %v852 = vpop.f32.mrf.mxu0
  %v853 = vadd.f32 0.0, %v852
  %854 = vdwg.mxu0
  %v856 = vrot.slane %v853, 4
  %v858 = vadd.f32 %v70, %v856
  %v859 = vxor.u32 %v858, 2147483648
  %v860 = vmul.f32 %v859, 1.442695
  %v861 = vpow.pop %v860
  %v862 = vadd.f32 %v861, 1.0
  %v863 = vrcp.pop %v862
  %v864 = vmul.f32 %v862, %v863
  %v865 = vsub.f32 1.0, %v864
  %v866 = vmul.f32 %v863, %v865
  %v867 = vadd.f32 %v863, %v866
  %vm868 = vweird.f32 %v862
  %vm869 = vweird.f32 %v863
  %vm870 = vmor %vm868, %vm869
  %v871 = vsel %vm870, %v863, %v867
  %v872 = vand.u32 2147483647, %v862
  %vm873 = vcmp.eq.f32.partialorder %v872, 8.507059e+37
  %v874 = vand.u32 %v862, 2147483648
  %v875 = vor.u32 1.1754944e-38, %v874
  %v876 = vsel %vm873, %v875, %v871
  %v877 = vmul.f32 1.0, %v876
  %v878 = vtanh.pop %v858
  %v880 = vrot.slane %v817, 6
  %v882 = vmul.f32 %v877, %v880
  %884 = vrot.lane.b32.xlu0 %v878, 64
  %v885 = vpop.permute.xlu0 %884
  %v887 = vmul.f32 %v877, %v885
  %889 = vrot.lane.b32.xlu0 %v887, 32
  %v890 = vpop.permute.xlu0 %889
  %v892 = vadd.f32 %v882, %v890
  %v893 = vtanh.pop %v892
  %895 = vrot.lane.b32.xlu0 %v893, 64
  %v896 = vpop.permute.xlu0 %895
  %v898 = vmul.f32 %v877, %v896
  %900 = vrot.lane.b32.xlu0 %v898, 32
  %v901 = vpop.permute.xlu0 %900
  %903 = vst.msk [vmem:[%s530 - $0x4] sm:$0x30] %vm300, %v901
  %904 = vst.msk [vmem:[%s528 - $0x4] sm:$0x30] %vm303, %v901
  %v905 = vrot.slane %v898, 4
  %906 = vrot.lane.b32.xlu0 %v905, 32
  %v907 = vpop.permute.xlu0 %906
  %v908 = vsel %vm79, %v907, 0
  %910 = vmatpush.msra.mxu0 0.0
  %911 = vmatpush.msra.mxu0 0.0
  %912 = vmatpush.msra.mxu0 0.0
  %913 = vmatpush.msra.mxu0 0.0
  %914 = vmatpush.msra.mxu0 0.0
  %915 = vmatpush.msra.mxu0 0.0
  %916 = vmatpush.msra.mxu0 0.0
  %917 = vmatpush.msra.mxu0 0.0
  %918 = vmatpush.msra.mxu0 0.0
  %919 = vmatpush.msra.mxu0 0.0
  %920 = vmatpush.msra.mxu0 0.0
  %921 = vmatpush.msra.mxu0 0.0
  %922 = vmatpush.msra.mxu0 %v78
  %923 = vmatpush.msra.mxu0 %v77
  %924 = vmatpush.msra.mxu0 %v76
  %925 = vmatpush.msra.mxu0 %v75
  %926 = vmatmul.f32.gmra.mxu0 %v908
  %v927 = vpop.f32.mrf.mxu0
  %v928 = vadd.f32 0.0, %v927
  %929 = vdwg.mxu0
  %v931 = vrot.slane %v928, 2
  %v933 = vadd.f32 %v70, %v931
  %v934 = vxor.u32 %v933, 2147483648
  %v935 = vmul.f32 %v934, 1.442695
  %v936 = vpow.pop %v935
  %v937 = vadd.f32 %v936, 1.0
  %v938 = vrcp.pop %v937
  %v939 = vmul.f32 %v937, %v938
  %v940 = vsub.f32 1.0, %v939
  %v941 = vmul.f32 %v938, %v940
  %v942 = vadd.f32 %v938, %v941
  %vm943 = vweird.f32 %v937
  %vm944 = vweird.f32 %v938
  %vm945 = vmor %vm943, %vm944
  %v946 = vsel %vm945, %v938, %v942
  %v947 = vand.u32 2147483647, %v937
  %vm948 = vcmp.eq.f32.partialorder %v947, 8.507059e+37
  %v949 = vand.u32 %v937, 2147483648
  %v950 = vor.u32 1.1754944e-38, %v949
  %v951 = vsel %vm948, %v950, %v946
  %v952 = vmul.f32 1.0, %v951
  %v953 = vtanh.pop %v933
  %v955 = vrot.slane %v892, 6
  %v957 = vmul.f32 %v952, %v955
  %959 = vrot.lane.b32.xlu0 %v953, 64
  %v960 = vpop.permute.xlu0 %959
  %v962 = vmul.f32 %v952, %v960
  %964 = vrot.lane.b32.xlu0 %v962, 32
  %v965 = vpop.permute.xlu0 %964
  %v967 = vadd.f32 %v957, %v965
  %v968 = vtanh.pop %v967
  %970 = vrot.lane.b32.xlu0 %v968, 64
  %v971 = vpop.permute.xlu0 %970
  %v973 = vmul.f32 %v952, %v971
  %975 = vrot.lane.b32.xlu0 %v973, 32
  %v976 = vpop.permute.xlu0 %975
  %978 = vst.msk [vmem:[%s456 - $0x6] sm:$0xc0] %vm379, %v976
  %979 = vst.msk [vmem:[%s454 - $0x6] sm:$0xc0] %vm382, %v976
  %v980 = vrot.slane %v973, 6
  %981 = vrot.lane.b32.xlu0 %v980, 32
  %v982 = vpop.permute.xlu0 %981
  %v983 = vsel %vm79, %v982, 0
  %985 = vmatpush.msra.mxu0 0.0
  %986 = vmatpush.msra.mxu0 0.0
  %987 = vmatpush.msra.mxu0 0.0
  %988 = vmatpush.msra.mxu0 0.0
  %989 = vmatpush.msra.mxu0 0.0
  %990 = vmatpush.msra.mxu0 0.0
  %991 = vmatpush.msra.mxu0 0.0
  %992 = vmatpush.msra.mxu0 0.0
  %993 = vmatpush.msra.mxu0 0.0
  %994 = vmatpush.msra.mxu0 0.0
  %995 = vmatpush.msra.mxu0 0.0
  %996 = vmatpush.msra.mxu0 0.0
  %997 = vmatpush.msra.mxu0 %v78
  %998 = vmatpush.msra.mxu0 %v77
  %999 = vmatpush.msra.mxu0 %v76
  %1000 = vmatpush.msra.mxu0 %v75
  %1001 = vmatmul.f32.gmra.mxu0 %v983
  %v1002 = vpop.f32.mrf.mxu0
  %v1003 = vadd.f32 0.0, %v1002
  %1004 = vdwg.mxu0
  %v1005 = vadd.f32 %v73, %v1003
  %v1006 = vxor.u32 %v1005, 2147483648
  %v1007 = vmul.f32 %v1006, 1.442695
  %v1008 = vpow.pop %v1007
  %v1009 = vadd.f32 %v1008, 1.0
  %v1010 = vrcp.pop %v1009
  %v1011 = vmul.f32 %v1009, %v1010
  %v1012 = vsub.f32 1.0, %v1011
  %v1013 = vmul.f32 %v1010, %v1012
  %v1014 = vadd.f32 %v1010, %v1013
  %vm1015 = vweird.f32 %v1009
  %vm1016 = vweird.f32 %v1010
  %vm1017 = vmor %vm1015, %vm1016
  %v1018 = vsel %vm1017, %v1010, %v1014
  %v1019 = vand.u32 2147483647, %v1009
  %vm1020 = vcmp.eq.f32.partialorder %v1019, 8.507059e+37
  %v1021 = vand.u32 %v1009, 2147483648
  %v1022 = vor.u32 1.1754944e-38, %v1021
  %v1023 = vsel %vm1020, %v1022, %v1018
  %v1024 = vmul.f32 1.0, %v1023
  %v1025 = vtanh.pop %v1005
  %v1027 = vrot.slane %v967, 6
  %v1029 = vmul.f32 %v1024, %v1027
  %1031 = vrot.lane.b32.xlu0 %v1025, 64
  %v1032 = vpop.permute.xlu0 %1031
  %v1034 = vmul.f32 %v1024, %v1032
  %1036 = vrot.lane.b32.xlu0 %v1034, 32
  %v1037 = vpop.permute.xlu0 %1036
  %v1039 = vadd.f32 %v1029, %v1037
  %v1040 = vtanh.pop %v1039
  %1042 = vrot.lane.b32.xlu0 %v1040, 64
  %v1043 = vpop.permute.xlu0 %1042
  %v1045 = vmul.f32 %v1024, %v1043
  %1047 = vrot.lane.b32.xlu0 %v1045, 32
  %v1048 = vpop.permute.xlu0 %1047
  %1050 = vst.msk [vmem:[%s381] sm:$0x3] %vm145, %v1048
  %1051 = vst.msk [vmem:[%s378] sm:$0x3] %vm148, %v1048
  %v1052 = vsel %vm79, %v1048, 0
  %1054 = vmatpush.msra.mxu0 0.0
  %1055 = vmatpush.msra.mxu0 0.0
  %1056 = vmatpush.msra.mxu0 0.0
  %1057 = vmatpush.msra.mxu0 0.0
  %1058 = vmatpush.msra.mxu0 0.0
  %1059 = vmatpush.msra.mxu0 0.0
  %1060 = vmatpush.msra.mxu0 0.0
  %1061 = vmatpush.msra.mxu0 0.0
  %1062 = vmatpush.msra.mxu0 0.0
  %1063 = vmatpush.msra.mxu0 0.0
  %1064 = vmatpush.msra.mxu0 0.0
  %1065 = vmatpush.msra.mxu0 0.0
  %1066 = vmatpush.msra.mxu0 %v78
  %1067 = vmatpush.msra.mxu0 %v77
  %1068 = vmatpush.msra.mxu0 %v76
  %1069 = vmatpush.msra.mxu0 %v75
  %1070 = vmatmul.f32.gmra.mxu0 %v1052
  %v1071 = vpop.f32.mrf.mxu0
  %v1072 = vadd.f32 0.0, %v1071
  %1073 = vdwg.mxu0
  %v1075 = vrot.slane %v1072, 6
  %v1077 = vadd.f32 %v73, %v1075
  %v1078 = vxor.u32 %v1077, 2147483648
  %v1079 = vmul.f32 %v1078, 1.442695
  %v1080 = vpow.pop %v1079
  %v1081 = vadd.f32 %v1080, 1.0
  %v1082 = vrcp.pop %v1081
  %v1083 = vmul.f32 %v1081, %v1082
  %v1084 = vsub.f32 1.0, %v1083
  %v1085 = vmul.f32 %v1082, %v1084
  %v1086 = vadd.f32 %v1082, %v1085
  %vm1087 = vweird.f32 %v1081
  %vm1088 = vweird.f32 %v1082
  %vm1089 = vmor %vm1087, %vm1088
  %v1090 = vsel %vm1089, %v1082, %v1086
  %v1091 = vand.u32 2147483647, %v1081
  %vm1092 = vcmp.eq.f32.partialorder %v1091, 8.507059e+37
  %v1093 = vand.u32 %v1081, 2147483648
  %v1094 = vor.u32 1.1754944e-38, %v1093
  %v1095 = vsel %vm1092, %v1094, %v1090
  %v1096 = vmul.f32 1.0, %v1095
  %v1097 = vtanh.pop %v1077
  %v1099 = vrot.slane %v1039, 6
  %v1101 = vmul.f32 %v1096, %v1099
  %1103 = vrot.lane.b32.xlu0 %v1097, 64
  %v1104 = vpop.permute.xlu0 %1103
  %v1106 = vmul.f32 %v1096, %v1104
  %1108 = vrot.lane.b32.xlu0 %v1106, 32
  %v1109 = vpop.permute.xlu0 %1108
  %v1111 = vadd.f32 %v1101, %v1109
  %v1112 = vtanh.pop %v1111
  %1114 = vrot.lane.b32.xlu0 %v1112, 64
  %v1115 = vpop.permute.xlu0 %1114
  %v1117 = vmul.f32 %v1096, %v1115
  %1119 = vrot.lane.b32.xlu0 %v1117, 32
  %v1120 = vpop.permute.xlu0 %1119
  %1122 = vst.msk [vmem:[%s302 - $0x2] sm:$0xc] %vm221, %v1120
  %1123 = vst.msk [vmem:[%s299 - $0x2] sm:$0xc] %vm224, %v1120
  %v1124 = vrot.slane %v1117, 2
  %1125 = vrot.lane.b32.xlu0 %v1124, 32
  %v1126 = vpop.permute.xlu0 %1125
  %v1127 = vsel %vm79, %v1126, 0
  %1129 = vmatpush.msra.mxu0 0.0
  %1130 = vmatpush.msra.mxu0 0.0
  %1131 = vmatpush.msra.mxu0 0.0
  %1132 = vmatpush.msra.mxu0 0.0
  %1133 = vmatpush.msra.mxu0 0.0
  %1134 = vmatpush.msra.mxu0 0.0
  %1135 = vmatpush.msra.mxu0 0.0
  %1136 = vmatpush.msra.mxu0 0.0
  %1137 = vmatpush.msra.mxu0 0.0
  %1138 = vmatpush.msra.mxu0 0.0
  %1139 = vmatpush.msra.mxu0 0.0
  %1140 = vmatpush.msra.mxu0 0.0
  %1141 = vmatpush.msra.mxu0 %v78
  %1142 = vmatpush.msra.mxu0 %v77
  %1143 = vmatpush.msra.mxu0 %v76
  %1144 = vmatpush.msra.mxu0 %v75
  %1145 = vmatmul.f32.gmra.mxu0 %v1127
  %v1146 = vpop.f32.mrf.mxu0
  %v1147 = vadd.f32 0.0, %v1146
  %1148 = vdwg.mxu0
  %v1150 = vrot.slane %v1147, 4
  %v1152 = vadd.f32 %v73, %v1150
  %v1153 = vxor.u32 %v1152, 2147483648
  %v1154 = vmul.f32 %v1153, 1.442695
  %v1155 = vpow.pop %v1154
  %v1156 = vadd.f32 %v1155, 1.0
  %v1157 = vrcp.pop %v1156
  %v1158 = vmul.f32 %v1156, %v1157
  %v1159 = vsub.f32 1.0, %v1158
  %v1160 = vmul.f32 %v1157, %v1159
  %v1161 = vadd.f32 %v1157, %v1160
  %vm1162 = vweird.f32 %v1156
  %vm1163 = vweird.f32 %v1157
  %vm1164 = vmor %vm1162, %vm1163
  %v1165 = vsel %vm1164, %v1157, %v1161
  %v1166 = vand.u32 2147483647, %v1156
  %vm1167 = vcmp.eq.f32.partialorder %v1166, 8.507059e+37
  %v1168 = vand.u32 %v1156, 2147483648
  %v1169 = vor.u32 1.1754944e-38, %v1168
  %v1170 = vsel %vm1167, %v1169, %v1165
  %v1171 = vmul.f32 1.0, %v1170
  %v1172 = vtanh.pop %v1152
  %v1174 = vrot.slane %v1111, 6
  %v1176 = vmul.f32 %v1171, %v1174
  %1178 = vrot.lane.b32.xlu0 %v1172, 64
  %v1179 = vpop.permute.xlu0 %1178
  %v1181 = vmul.f32 %v1171, %v1179
  %1183 = vrot.lane.b32.xlu0 %v1181, 32
  %v1184 = vpop.permute.xlu0 %1183
  %v1186 = vadd.f32 %v1176, %v1184
  %v1187 = vtanh.pop %v1186
  %1189 = vrot.lane.b32.xlu0 %v1187, 64
  %v1190 = vpop.permute.xlu0 %1189
  %v1192 = vmul.f32 %v1171, %v1190
  %1194 = vrot.lane.b32.xlu0 %v1192, 32
  %v1195 = vpop.permute.xlu0 %1194
  %1197 = vst.msk [vmem:[%s223 - $0x4] sm:$0x30] %vm300, %v1195
  %1198 = vst.msk [vmem:[%s220 - $0x4] sm:$0x30] %vm303, %v1195
  %v1199 = vrot.slane %v1192, 4
  %1200 = vrot.lane.b32.xlu0 %v1199, 32
  %v1201 = vpop.permute.xlu0 %1200
  %v1202 = vsel %vm79, %v1201, 0
  %1204 = vmatpush.msra.mxu0 0.0
  %1205 = vmatpush.msra.mxu0 0.0
  %1206 = vmatpush.msra.mxu0 0.0
  %1207 = vmatpush.msra.mxu0 0.0
  %1208 = vmatpush.msra.mxu0 0.0
  %1209 = vmatpush.msra.mxu0 0.0
  %1210 = vmatpush.msra.mxu0 0.0
  %1211 = vmatpush.msra.mxu0 0.0
  %1212 = vmatpush.msra.mxu0 0.0
  %1213 = vmatpush.msra.mxu0 0.0
  %1214 = vmatpush.msra.mxu0 0.0
  %1215 = vmatpush.msra.mxu0 0.0
  %1216 = vmatpush.msra.mxu0 %v78
  %1217 = vmatpush.msra.mxu0 %v77
  %1218 = vmatpush.msra.mxu0 %v76
  %1219 = vmatpush.msra.mxu0 %v75
  %1220 = vmatmul.f32.gmra.mxu0 %v1202
  %v1221 = vpop.f32.mrf.mxu0
  %v1222 = vadd.f32 0.0, %v1221
  %1223 = vdwg.mxu0
  %v1225 = vrot.slane %v1222, 2
  %v1227 = vadd.f32 %v73, %v1225
  %v1228 = vxor.u32 %v1227, 2147483648
  %v1229 = vmul.f32 %v1228, 1.442695
  %v1230 = vpow.pop %v1229
  %v1231 = vadd.f32 %v1230, 1.0
  %v1232 = vrcp.pop %v1231
  %v1233 = vmul.f32 %v1231, %v1232
  %v1234 = vsub.f32 1.0, %v1233
  %v1235 = vmul.f32 %v1232, %v1234
  %v1236 = vadd.f32 %v1232, %v1235
  %vm1237 = vweird.f32 %v1231
  %vm1238 = vweird.f32 %v1232
  %vm1239 = vmor %vm1237, %vm1238
  %v1240 = vsel %vm1239, %v1232, %v1236
  %v1241 = vand.u32 2147483647, %v1231
  %vm1242 = vcmp.eq.f32.partialorder %v1241, 8.507059e+37
  %v1243 = vand.u32 %v1231, 2147483648
  %v1244 = vor.u32 1.1754944e-38, %v1243
  %v1245 = vsel %vm1242, %v1244, %v1240
  %v1246 = vmul.f32 1.0, %v1245
  %v1247 = vtanh.pop %v1227
  %v1249 = vrot.slane %v1186, 6
  %v1251 = vmul.f32 %v1246, %v1249
  %1253 = vrot.lane.b32.xlu0 %v1247, 64
  %v1254 = vpop.permute.xlu0 %1253
  %v1256 = vmul.f32 %v1246, %v1254
  %1258 = vrot.lane.b32.xlu0 %v1256, 32
  %v1259 = vpop.permute.xlu0 %1258
  %v1261 = vadd.f32 %v1251, %v1259
  %v1262 = vtanh.pop %v1261
  %1264 = vrot.lane.b32.xlu0 %v1262, 64
  %v1265 = vpop.permute.xlu0 %1264
  %v1267 = vmul.f32 %v1246, %v1265
  %1269 = vrot.lane.b32.xlu0 %v1267, 32
  %v1270 = vpop.permute.xlu0 %1269
  %1272 = vst.msk [vmem:[%s147 - $0x6] sm:$0xc0] %vm379, %v1270
  %1273 = vst.msk [vmem:[%s4 - $0x6] sm:$0xc0] %vm382, %v1270
  // Predicated region
  $region18: #{joint_ie_forward.3} parent=0 // pred_check
    _
  $region19: #{joint_ie_forward.3} parent=0 // pred_check_branch
    %1275 = sbr.rel (0) target = $region21
  $region20: #{joint_ie_forward.3} parent=0 // pred_region
    _
  $region21: #{joint_ie_forward.3} parent=0 // pred_fallthru
    _
  // Predicated region
  $region22: #{joint_ie_forward.3} parent=0 // pred_check
    _
  $region23: #{joint_ie_forward.3} parent=0 // pred_check_branch
    %1277 = sbr.rel (0) target = $region25
  $region24: #{joint_ie_forward.3} parent=0 // pred_region
    _
  $region25: #{joint_ie_forward.3} parent=0 // pred_fallthru
    _

// kernel: div.13
$region0: #{div.13}
  %s0 = inlined_call_operand.vmem [shape: f32[128], index: 0, kind: input, shape index: {}]
  %s1 = inlined_call_operand.vmem [shape: f32[2,64], index: 1, kind: output, shape index: {}]
  $region1: #{div.13} parent=0
    #allocation0 [shape = 'u8[4096]{0}', space=vmem, size = 0x1000, scoped, tag = 'scoped mem for output reshape']
    #allocation1 [shape = 'u8[4096]{0}', space=vmem, size = 0x1000, scoped, tag = 'scoped mem for input reshape']
    %s3 = ssub.s32 2, 1
    %v4 = vld [vmem:[%s0] sm:%s3]
    %5 = vst [vmem:[#allocation1] sm:%s3] %v4
    %v6 = vld [vmem:[#allocation1] sm:$0x1]
    %vm7 = vcmask 523264
    %8 = vst.msk [vmem:[#allocation0] sm:$0x1] %vm7, %v6
    %v9 = vld [vmem:[#allocation1] sm:$0x1]
    %10 = vrot.lane.b32.xlu0 %v9, 64
    %v11 = vpop.permute.xlu0 %10
    %vm12 = vcmask 523264
    %s13 = scalar_lea.vmem [#allocation0], 1
    %14 = vst.msk [vmem:[%s13] sm:$0x1] %vm12, %v11
    %s16 = ssub.s32 4, 1
    %v17 = vld [vmem:[#allocation0] sm:%s16]
    %s19 = ssub.s32 4, 1
    %20 = vst [vmem:[%s1] sm:%s19] %v17

// kernel: joint_ie_forward.5
$region0: #{joint_ie_forward.5}
  #allocation0 [shape = 'u32[]', space=smem, size = 0x4, offset = 0x4, fixed_abs, tag = 'smem constant byte address 0x4 - core index']
  #allocation1 [shape = 'u32[72,128]{1,0:T(1,128)}', space=vmem, size = 0x9000, scoped, tag = 'internal scratch']
  %s0 = inlined_call_operand.vmem [shape: f32[16,160], index: 0, kind: input, shape index: {}]
  %s1 = inlined_call_operand.vmem [shape: f32[160,64], index: 1, kind: input, shape index: {}]
  %s2 = inlined_call_operand.vmem [shape: f32[1,64], index: 2, kind: input, shape index: {}]
  %s3 = inlined_call_operand.vmem [shape: f32[256,16], index: 3, kind: input, shape index: {}]
  %s4 = inlined_call_operand.vmem [shape: f32[128,64], index: 4, kind: input, shape index: {}]
  %s5 = inlined_call_operand.vmem [shape: f32[64,16], index: 5, kind: input, shape index: {}]
  %s6 = inlined_call_operand.vmem [shape: f32[64,16], index: 6, kind: input, shape index: {}]
  %s7 = inlined_call_operand.vmem [shape: f32[64,16], index: 7, kind: input, shape index: {}]
  %s8 = inlined_call_operand.vmem [shape: f32[64,16], index: 8, kind: input, shape index: {}]
  %s9 = inlined_call_operand.vmem [shape: f32[1,16], index: 9, kind: input, shape index: {}]
  %s10 = inlined_call_operand.vmem [shape: f32[16,16], index: 10, kind: input, shape index: {}]
  %s11 = inlined_call_operand.vmem [shape: f32[1,16], index: 11, kind: input, shape index: {}]
  %s12 = inlined_call_operand.vmem [shape: f32[16,128], index: 12, kind: input, shape index: {}]
  %s13 = inlined_call_operand.vmem [shape: f32[1,128], index: 13, kind: input, shape index: {}]
  %s14 = inlined_call_operand.vmem [shape: f32[128,128], index: 14, kind: input, shape index: {}]
  %s15 = inlined_call_operand.vmem [shape: f32[128,128], index: 15, kind: output, shape index: {0}]
  %s16 = inlined_call_operand.vmem [shape: f32[1,128], index: 16, kind: output, shape index: {1}]
  %17 = xla_tuple %s15, %s16
  %s18 = sld [smem:[#allocation0]]
  $region78: #{joint_ie_forward.5} parent=0
    _
  %s20 = ssub.s32 1, %s18
  %s21 = scalar_select 0, %s20, %s18
  // Predicated region
  $region2: #{joint_ie_forward.5} parent=0 // pred_check
    _
  $region3: #{joint_ie_forward.5} parent=0 // pred_check_branch
    %23 = sbr.rel (0) target = $region5
  $region4: #{joint_ie_forward.5} parent=0 // pred_region
    _
  $region5: #{joint_ie_forward.5} parent=0 // pred_fallthru
    _
  // Predicated region
  $region6: #{joint_ie_forward.5} parent=0 // pred_check
    _
  $region7: #{joint_ie_forward.5} parent=0 // pred_check_branch
    %25 = sbr.rel (0) target = $region9
  $region8: #{joint_ie_forward.5} parent=0 // pred_region
    _
  $region9: #{joint_ie_forward.5} parent=0 // pred_fallthru
    _
  // Predicated region
  $region10: #{joint_ie_forward.5} parent=0 // pred_check
    _
  $region11: #{joint_ie_forward.5} parent=0 // pred_check_branch
    %27 = sbr.rel (0) target = $region13
  $region12: #{joint_ie_forward.5} parent=0 // pred_region
    _
  $region13: #{joint_ie_forward.5} parent=0 // pred_fallthru
    _
  // Predicated region
  $region14: #{joint_ie_forward.5} parent=0 // pred_check
    _
  $region15: #{joint_ie_forward.5} parent=0 // pred_check_branch
    %29 = sbr.rel (0) target = $region17
  $region16: #{joint_ie_forward.5} parent=0 // pred_region
    _
  $region17: #{joint_ie_forward.5} parent=0 // pred_fallthru
    _
  // Predicated region
  $region18: #{joint_ie_forward.5} parent=0 // pred_check
    _
  $region19: #{joint_ie_forward.5} parent=0 // pred_check_branch
    %31 = sbr.rel (0) target = $region21
  $region20: #{joint_ie_forward.5} parent=0 // pred_region
    _
  $region21: #{joint_ie_forward.5} parent=0 // pred_fallthru
    _
  // Predicated region
  $region22: #{joint_ie_forward.5} parent=0 // pred_check
    _
  $region23: #{joint_ie_forward.5} parent=0 // pred_check_branch
    %33 = sbr.rel (0) target = $region25
  $region24: #{joint_ie_forward.5} parent=0 // pred_region
    _
  $region25: #{joint_ie_forward.5} parent=0 // pred_fallthru
    _
  // Predicated region
  $region26: #{joint_ie_forward.5} parent=0 // pred_check
    _
  $region27: #{joint_ie_forward.5} parent=0 // pred_check_branch
    %35 = sbr.rel (0) target = $region29
  $region28: #{joint_ie_forward.5} parent=0 // pred_region
    _
  $region29: #{joint_ie_forward.5} parent=0 // pred_fallthru
    _
  // Predicated region
  $region30: #{joint_ie_forward.5} parent=0 // pred_check
    _
  $region31: #{joint_ie_forward.5} parent=0 // pred_check_branch
    %37 = sbr.rel (0) target = $region33
  $region32: #{joint_ie_forward.5} parent=0 // pred_region
    _
  $region33: #{joint_ie_forward.5} parent=0 // pred_fallthru
    _
  // Predicated region
  $region34: #{joint_ie_forward.5} parent=0 // pred_check
    _
  $region35: #{joint_ie_forward.5} parent=0 // pred_check_branch
    %39 = sbr.rel (0) target = $region37
  $region36: #{joint_ie_forward.5} parent=0 // pred_region
    _
  $region37: #{joint_ie_forward.5} parent=0 // pred_fallthru
    _
  // Predicated region
  $region38: #{joint_ie_forward.5} parent=0 // pred_check
    _
  $region39: #{joint_ie_forward.5} parent=0 // pred_check_branch
    %41 = sbr.rel (0) target = $region41
  $region40: #{joint_ie_forward.5} parent=0 // pred_region
    _
  $region41: #{joint_ie_forward.5} parent=0 // pred_fallthru
    _
  // Predicated region
  $region42: #{joint_ie_forward.5} parent=0 // pred_check
    _
  $region43: #{joint_ie_forward.5} parent=0 // pred_check_branch
    %43 = sbr.rel (0) target = $region45
  $region44: #{joint_ie_forward.5} parent=0 // pred_region
    _
  $region45: #{joint_ie_forward.5} parent=0 // pred_fallthru
    _
  // Predicated region
  $region46: #{joint_ie_forward.5} parent=0 // pred_check
    _
  $region47: #{joint_ie_forward.5} parent=0 // pred_check_branch
    %45 = sbr.rel (0) target = $region49
  $region48: #{joint_ie_forward.5} parent=0 // pred_region
    _
  $region49: #{joint_ie_forward.5} parent=0 // pred_fallthru
    _
  // Predicated region
  $region50: #{joint_ie_forward.5} parent=0 // pred_check
    _
  $region51: #{joint_ie_forward.5} parent=0 // pred_check_branch
    %47 = sbr.rel (0) target = $region53
  $region52: #{joint_ie_forward.5} parent=0 // pred_region
    _
  $region53: #{joint_ie_forward.5} parent=0 // pred_fallthru
    _
  // Predicated region
  $region54: #{joint_ie_forward.5} parent=0 // pred_check
    _
  $region55: #{joint_ie_forward.5} parent=0 // pred_check_branch
    %49 = sbr.rel (0) target = $region57
  $region56: #{joint_ie_forward.5} parent=0 // pred_region
    _
  $region57: #{joint_ie_forward.5} parent=0 // pred_fallthru
    _
  // Predicated region
  $region58: #{joint_ie_forward.5} parent=0 // pred_check
    _
  $region59: #{joint_ie_forward.5} parent=0 // pred_check_branch
    %51 = sbr.rel (0) target = $region61
  $region60: #{joint_ie_forward.5} parent=0 // pred_region
    _
  $region61: #{joint_ie_forward.5} parent=0 // pred_fallthru
    _
  %v52 = vld [vmem:[%s0] sm:$0xff]
  %v53 = vld [vmem:[%s0 + $0x8] sm:$0xff]
  %v54 = vld [vmem:[%s0 + $0x10] sm:$0xff]
  %v55 = vld [vmem:[%s0 + $0x18] sm:$0xff]
  %v56 = vld [vmem:[%s1] sm:$0xff]
  %v57 = vld [vmem:[%s1 + $0x8] sm:$0xff]
  %v58 = vld [vmem:[%s1 + $0x10] sm:$0xff]
  %v59 = vld [vmem:[%s1 + $0x18] sm:$0xff]
  %v60 = vld [vmem:[%s1 + $0x20] sm:$0xff]
  %v61 = vld [vmem:[%s1 + $0x28] sm:$0xff]
  %v62 = vld [vmem:[%s1 + $0x30] sm:$0xff]
  %v63 = vld [vmem:[%s1 + $0x38] sm:$0xff]
  %v64 = vld [vmem:[%s1 + $0x40] sm:$0xff]
  %v65 = vld [vmem:[%s1 + $0x48] sm:$0xff]
  %v66 = vld [vmem:[%s1 + $0x50] sm:$0xff]
  %v67 = vld [vmem:[%s1 + $0x58] sm:$0xff]
  %v68 = vld [vmem:[%s1 + $0x60] sm:$0xff]
  %v69 = vld [vmem:[%s1 + $0x68] sm:$0xff]
  %v70 = vld [vmem:[%s1 + $0x70] sm:$0xff]
  %v71 = vld [vmem:[%s1 + $0x78] sm:$0xff]
  %v72 = vld [vmem:[%s1 + $0x80] sm:$0xff]
  %v73 = vld [vmem:[%s1 + $0x88] sm:$0xff]
  %v74 = vld [vmem:[%s1 + $0x90] sm:$0xff]
  %v75 = vld [vmem:[%s1 + $0x98] sm:$0xff]
  %v76 = vld [vmem:[%s2] sm:$0x1]
  %v78 = vperm.slane %v76, 0
  %vm80 = vcmask 261120
  %v82 = vsel %vm80, %v53, 0
  %v85 = vsel %vm80, %v55, 0
  %87 = vmatpush.msra.mxu0 %v71
  %88 = vmatpush.msra.mxu0 %v70
  %89 = vmatpush.msra.mxu0 %v69
  %90 = vmatpush.msra.mxu0 %v68
  %91 = vmatpush.msra.mxu0 %v67
  %92 = vmatpush.msra.mxu0 %v66
  %93 = vmatpush.msra.mxu0 %v65
  %94 = vmatpush.msra.mxu0 %v64
  %95 = vmatpush.msra.mxu0 %v63
  %96 = vmatpush.msra.mxu0 %v62
  %97 = vmatpush.msra.mxu0 %v61
  %98 = vmatpush.msra.mxu0 %v60
  %99 = vmatpush.msra.mxu0 %v59
  %100 = vmatpush.msra.mxu0 %v58
  %101 = vmatpush.msra.mxu0 %v57
  %102 = vmatpush.msra.mxu0 %v56
  %103 = vmatmul.f32.gmra.mxu0 %v52
  %v104 = vpop.f32.mrf.mxu0
  %v105 = vadd.f32 %v78, %v104
  %106 = vmatmul.f32.gmra.mxu0 %v54
  %v107 = vpop.f32.mrf.mxu0
  %v108 = vadd.f32 %v78, %v107
  %109 = vdwg.mxu0
  %110 = vmatpush.msra.mxu0 0.0
  %111 = vmatpush.msra.mxu0 0.0
  %112 = vmatpush.msra.mxu0 0.0
  %113 = vmatpush.msra.mxu0 0.0
  %114 = vmatpush.msra.mxu0 0.0
  %115 = vmatpush.msra.mxu0 0.0
  %116 = vmatpush.msra.mxu0 0.0
  %117 = vmatpush.msra.mxu0 0.0
  %118 = vmatpush.msra.mxu0 0.0
  %119 = vmatpush.msra.mxu0 0.0
  %120 = vmatpush.msra.mxu0 0.0
  %121 = vmatpush.msra.mxu0 0.0
  %122 = vmatpush.msra.mxu0 %v75
  %123 = vmatpush.msra.mxu0 %v74
  %124 = vmatpush.msra.mxu0 %v73
  %125 = vmatpush.msra.mxu0 %v72
  %126 = vmatmul.f32.gmra.mxu0 %v82
  %v127 = vpop.f32.mrf.mxu0
  %v128 = vadd.f32 %v105, %v127
  %129 = vmatmul.f32.gmra.mxu0 %v85
  %v130 = vpop.f32.mrf.mxu0
  %v131 = vadd.f32 %v108, %v130
  %132 = vdwg.mxu0
  %v133 = vmax.f32 %v128, 0.0
  %v134 = vmax.f32 %v131, 0.0
  %v135 = vld [vmem:[%s3] sm:$0xff]
  %v136 = vld [vmem:[%s3 + $0x8] sm:$0xff]
  %v137 = vld [vmem:[%s3 + $0x10] sm:$0xff]
  %v138 = vld [vmem:[%s3 + $0x18] sm:$0xff]
  %v139 = vld [vmem:[%s3 + $0x20] sm:$0xff]
  %v140 = vld [vmem:[%s3 + $0x28] sm:$0xff]
  %v141 = vld [vmem:[%s3 + $0x30] sm:$0xff]
  %v142 = vld [vmem:[%s3 + $0x38] sm:$0xff]
  %v143 = vld [vmem:[%s3 + $0x40] sm:$0xff]
  %v144 = vld [vmem:[%s3 + $0x48] sm:$0xff]
  %v145 = vld [vmem:[%s3 + $0x50] sm:$0xff]
  %v146 = vld [vmem:[%s3 + $0x58] sm:$0xff]
  %v147 = vld [vmem:[%s3 + $0x60] sm:$0xff]
  %v148 = vld [vmem:[%s3 + $0x68] sm:$0xff]
  %v149 = vld [vmem:[%s3 + $0x70] sm:$0xff]
  %v150 = vld [vmem:[%s3 + $0x78] sm:$0xff]
  %v151 = vld [vmem:[%s3 + $0x80] sm:$0xff]
  %v152 = vld [vmem:[%s3 + $0x88] sm:$0xff]
  %v153 = vld [vmem:[%s3 + $0x90] sm:$0xff]
  %v154 = vld [vmem:[%s3 + $0x98] sm:$0xff]
  %v155 = vld [vmem:[%s3 + $0xa0] sm:$0xff]
  %v156 = vld [vmem:[%s3 + $0xa8] sm:$0xff]
  %v157 = vld [vmem:[%s3 + $0xb0] sm:$0xff]
  %v158 = vld [vmem:[%s3 + $0xb8] sm:$0xff]
  %v159 = vld [vmem:[%s3 + $0xc0] sm:$0xff]
  %v160 = vld [vmem:[%s3 + $0xc8] sm:$0xff]
  %v161 = vld [vmem:[%s3 + $0xd0] sm:$0xff]
  %v162 = vld [vmem:[%s3 + $0xd8] sm:$0xff]
  %v163 = vld [vmem:[%s3 + $0xe0] sm:$0xff]
  %v164 = vld [vmem:[%s3 + $0xe8] sm:$0xff]
  %v165 = vld [vmem:[%s3 + $0xf0] sm:$0xff]
  %v166 = vld [vmem:[%s3 + $0xf8] sm:$0xff]
  %vm167 = vcmask 130048
  %v169 = vsel %vm167, %v135, 0
  %v172 = vsel %vm167, %v136, 0
  %v175 = vsel %vm167, %v137, 0
  %v178 = vsel %vm167, %v138, 0
  %v181 = vsel %vm167, %v139, 0
  %v184 = vsel %vm167, %v140, 0
  %v187 = vsel %vm167, %v141, 0
  %v190 = vsel %vm167, %v142, 0
  %v193 = vsel %vm167, %v143, 0
  %v196 = vsel %vm167, %v144, 0
  %v199 = vsel %vm167, %v145, 0
  %v202 = vsel %vm167, %v146, 0
  %v205 = vsel %vm167, %v147, 0
  %v208 = vsel %vm167, %v148, 0
  %v211 = vsel %vm167, %v149, 0
  %v214 = vsel %vm167, %v150, 0
  %v217 = vsel %vm167, %v151, 0
  %v220 = vsel %vm167, %v152, 0
  %v223 = vsel %vm167, %v153, 0
  %v226 = vsel %vm167, %v154, 0
  %v229 = vsel %vm167, %v155, 0
  %v232 = vsel %vm167, %v156, 0
  %v235 = vsel %vm167, %v157, 0
  %v238 = vsel %vm167, %v158, 0
  %v241 = vsel %vm167, %v159, 0
  %v244 = vsel %vm167, %v160, 0
  %v247 = vsel %vm167, %v161, 0
  %v250 = vsel %vm167, %v162, 0
  %v253 = vsel %vm167, %v163, 0
  %v256 = vsel %vm167, %v164, 0
  %v259 = vsel %vm167, %v165, 0
  %v262 = vsel %vm167, %v166, 0
  %264 = vmatpush.msra.mxu0 0.0
  %265 = vmatpush.msra.mxu0 0.0
  %266 = vmatpush.msra.mxu0 0.0
  %267 = vmatpush.msra.mxu0 0.0
  %268 = vmatpush.msra.mxu0 0.0
  %269 = vmatpush.msra.mxu0 0.0
  %270 = vmatpush.msra.mxu0 0.0
  %271 = vmatpush.msra.mxu0 0.0
  %272 = vmatpush.msra.mxu0 0.0
  %273 = vmatpush.msra.mxu0 0.0
  %274 = vmatpush.msra.mxu0 0.0
  %275 = vmatpush.msra.mxu0 0.0
  %276 = vmatpush.msra.mxu0 0.0
  %277 = vmatpush.msra.mxu0 0.0
  %278 = vmatpush.msra.mxu0 %v134
  %279 = vmatpush.msra.mxu0 %v133
  %280 = vmatmul.f32.gmra.mxu0 %v169
  %v281 = vpop.f32.mrf.mxu0
  %v282 = vadd.f32 0.0, %v281
  %283 = vmatmul.f32.gmra.mxu0 %v172
  %v284 = vpop.f32.mrf.mxu0
  %v285 = vadd.f32 0.0, %v284
  %286 = vmatmul.f32.gmra.mxu0 %v175
  %v287 = vpop.f32.mrf.mxu0
  %v288 = vadd.f32 0.0, %v287
  %289 = vmatmul.f32.gmra.mxu0 %v178
  %v290 = vpop.f32.mrf.mxu0
  %v291 = vadd.f32 0.0, %v290
  %292 = vmatmul.f32.gmra.mxu0 %v181
  %v293 = vpop.f32.mrf.mxu0
  %v294 = vadd.f32 0.0, %v293
  %295 = vmatmul.f32.gmra.mxu0 %v184
  %v296 = vpop.f32.mrf.mxu0
  %v297 = vadd.f32 0.0, %v296
  %298 = vmatmul.f32.gmra.mxu0 %v187
  %v299 = vpop.f32.mrf.mxu0
  %v300 = vadd.f32 0.0, %v299
  %301 = vmatmul.f32.gmra.mxu0 %v190
  %v302 = vpop.f32.mrf.mxu0
  %v303 = vadd.f32 0.0, %v302
  %304 = vmatmul.f32.gmra.mxu0 %v193
  %v305 = vpop.f32.mrf.mxu0
  %v306 = vadd.f32 0.0, %v305
  %307 = vmatmul.f32.gmra.mxu0 %v196
  %v308 = vpop.f32.mrf.mxu0
  %v309 = vadd.f32 0.0, %v308
  %310 = vmatmul.f32.gmra.mxu0 %v199
  %v311 = vpop.f32.mrf.mxu0
  %v312 = vadd.f32 0.0, %v311
  %313 = vmatmul.f32.gmra.mxu0 %v202
  %v314 = vpop.f32.mrf.mxu0
  %v315 = vadd.f32 0.0, %v314
  %316 = vmatmul.f32.gmra.mxu0 %v205
  %v317 = vpop.f32.mrf.mxu0
  %v318 = vadd.f32 0.0, %v317
  %319 = vmatmul.f32.gmra.mxu0 %v208
  %v320 = vpop.f32.mrf.mxu0
  %v321 = vadd.f32 0.0, %v320
  %322 = vmatmul.f32.gmra.mxu0 %v211
  %v323 = vpop.f32.mrf.mxu0
  %v324 = vadd.f32 0.0, %v323
  %325 = vmatmul.f32.gmra.mxu0 %v214
  %v326 = vpop.f32.mrf.mxu0
  %v327 = vadd.f32 0.0, %v326
  %328 = vmatmul.f32.gmra.mxu0 %v217
  %v329 = vpop.f32.mrf.mxu0
  %v330 = vadd.f32 0.0, %v329
  %331 = vmatmul.f32.gmra.mxu0 %v220
  %v332 = vpop.f32.mrf.mxu0
  %v333 = vadd.f32 0.0, %v332
  %334 = vmatmul.f32.gmra.mxu0 %v223
  %v335 = vpop.f32.mrf.mxu0
  %v336 = vadd.f32 0.0, %v335
  %337 = vmatmul.f32.gmra.mxu0 %v226
  %v338 = vpop.f32.mrf.mxu0
  %v339 = vadd.f32 0.0, %v338
  %340 = vmatmul.f32.gmra.mxu0 %v229
  %v341 = vpop.f32.mrf.mxu0
  %v342 = vadd.f32 0.0, %v341
  %343 = vmatmul.f32.gmra.mxu0 %v232
  %v344 = vpop.f32.mrf.mxu0
  %v345 = vadd.f32 0.0, %v344
  %346 = vmatmul.f32.gmra.mxu0 %v235
  %v347 = vpop.f32.mrf.mxu0
  %v348 = vadd.f32 0.0, %v347
  %349 = vmatmul.f32.gmra.mxu0 %v238
  %v350 = vpop.f32.mrf.mxu0
  %v351 = vadd.f32 0.0, %v350
  %352 = vmatmul.f32.gmra.mxu0 %v241
  %v353 = vpop.f32.mrf.mxu0
  %v354 = vadd.f32 0.0, %v353
  %355 = vmatmul.f32.gmra.mxu0 %v244
  %v356 = vpop.f32.mrf.mxu0
  %v357 = vadd.f32 0.0, %v356
  %358 = vmatmul.f32.gmra.mxu0 %v247
  %v359 = vpop.f32.mrf.mxu0
  %v360 = vadd.f32 0.0, %v359
  %361 = vmatmul.f32.gmra.mxu0 %v250
  %v362 = vpop.f32.mrf.mxu0
  %v363 = vadd.f32 0.0, %v362
  %364 = vmatmul.f32.gmra.mxu0 %v253
  %v365 = vpop.f32.mrf.mxu0
  %v366 = vadd.f32 0.0, %v365
  %367 = vmatmul.f32.gmra.mxu0 %v256
  %v368 = vpop.f32.mrf.mxu0
  %v369 = vadd.f32 0.0, %v368
  %370 = vmatmul.f32.gmra.mxu0 %v259
  %v371 = vpop.f32.mrf.mxu0
  %v372 = vadd.f32 0.0, %v371
  %373 = vmatmul.f32.gmra.mxu0 %v262
  %v374 = vpop.f32.mrf.mxu0
  %v375 = vadd.f32 0.0, %v374
  %376 = vdwg.mxu0
  %v377 = vld [vmem:[%s5] sm:$0xff]
  %v378 = vld [vmem:[%s5 + $0x8] sm:$0xff]
  %v379 = vld [vmem:[%s5 + $0x10] sm:$0xff]
  %v380 = vld [vmem:[%s5 + $0x18] sm:$0xff]
  %v381 = vld [vmem:[%s5 + $0x20] sm:$0xff]
  %v382 = vld [vmem:[%s5 + $0x28] sm:$0xff]
  %v383 = vld [vmem:[%s5 + $0x30] sm:$0xff]
  %v384 = vld [vmem:[%s5 + $0x38] sm:$0xff]
  %v385 = vld [vmem:[%s6] sm:$0xff]
  %v386 = vld [vmem:[%s6 + $0x8] sm:$0xff]
  %v387 = vld [vmem:[%s6 + $0x10] sm:$0xff]
  %v388 = vld [vmem:[%s6 + $0x18] sm:$0xff]
  %v389 = vld [vmem:[%s6 + $0x20] sm:$0xff]
  %v390 = vld [vmem:[%s6 + $0x28] sm:$0xff]
  %v391 = vld [vmem:[%s6 + $0x30] sm:$0xff]
  %v392 = vld [vmem:[%s6 + $0x38] sm:$0xff]
  %vm393 = vcmask 523264
  %v395 = vsel %vm393, %v330, 0
  %v398 = vsel %vm393, %v333, 0
  %v401 = vsel %vm393, %v336, 0
  %v404 = vsel %vm393, %v339, 0
  %v407 = vsel %vm393, %v342, 0
  %v410 = vsel %vm393, %v345, 0
  %v413 = vsel %vm393, %v348, 0
  %v416 = vsel %vm393, %v351, 0
  %v419 = vsel %vm393, %v354, 0
  %v422 = vsel %vm393, %v357, 0
  %v425 = vsel %vm393, %v360, 0
  %v428 = vsel %vm393, %v363, 0
  %v431 = vsel %vm393, %v366, 0
  %v434 = vsel %vm393, %v369, 0
  %v437 = vsel %vm393, %v372, 0
  %v440 = vsel %vm393, %v375, 0
  %442 = vmatpush.msra.mxu0 0.0
  %443 = vmatpush.msra.mxu0 0.0
  %444 = vmatpush.msra.mxu0 0.0
  %445 = vmatpush.msra.mxu0 0.0
  %446 = vmatpush.msra.mxu0 0.0
  %447 = vmatpush.msra.mxu0 0.0
  %448 = vmatpush.msra.mxu0 0.0
  %449 = vmatpush.msra.mxu0 0.0
  %450 = vmatpush.msra.mxu0 %v392
  %451 = vmatpush.msra.mxu0 %v391
  %452 = vmatpush.msra.mxu0 %v390
  %453 = vmatpush.msra.mxu0 %v389
  %454 = vmatpush.msra.mxu0 %v388
  %455 = vmatpush.msra.mxu0 %v387
  %456 = vmatpush.msra.mxu0 %v386
  %457 = vmatpush.msra.mxu0 %v385
  %458 = vmatmul.f32.gmra.mxu0 %v395
  %v459 = vpop.f32.mrf.mxu0
  %v460 = vadd.f32 0.0, %v459
  %461 = vmatmul.f32.gmra.mxu0 %v398
  %v462 = vpop.f32.mrf.mxu0
  %v463 = vadd.f32 0.0, %v462
  %464 = vmatmul.f32.gmra.mxu0 %v401
  %v465 = vpop.f32.mrf.mxu0
  %v466 = vadd.f32 0.0, %v465
  %467 = vmatmul.f32.gmra.mxu0 %v404
  %v468 = vpop.f32.mrf.mxu0
  %v469 = vadd.f32 0.0, %v468
  %470 = vmatmul.f32.gmra.mxu0 %v407
  %v471 = vpop.f32.mrf.mxu0
  %v472 = vadd.f32 0.0, %v471
  %473 = vmatmul.f32.gmra.mxu0 %v410
  %v474 = vpop.f32.mrf.mxu0
  %v475 = vadd.f32 0.0, %v474
  %476 = vmatmul.f32.gmra.mxu0 %v413
  %v477 = vpop.f32.mrf.mxu0
  %v478 = vadd.f32 0.0, %v477
  %479 = vmatmul.f32.gmra.mxu0 %v416
  %v480 = vpop.f32.mrf.mxu0
  %v481 = vadd.f32 0.0, %v480
  %482 = vmatmul.f32.gmra.mxu0 %v419
  %v483 = vpop.f32.mrf.mxu0
  %v484 = vadd.f32 0.0, %v483
  %485 = vmatmul.f32.gmra.mxu0 %v422
  %v486 = vpop.f32.mrf.mxu0
  %v487 = vadd.f32 0.0, %v486
  %488 = vmatmul.f32.gmra.mxu0 %v425
  %v489 = vpop.f32.mrf.mxu0
  %v490 = vadd.f32 0.0, %v489
  %491 = vmatmul.f32.gmra.mxu0 %v428
  %v492 = vpop.f32.mrf.mxu0
  %v493 = vadd.f32 0.0, %v492
  %494 = vmatmul.f32.gmra.mxu0 %v431
  %v495 = vpop.f32.mrf.mxu0
  %v496 = vadd.f32 0.0, %v495
  %497 = vmatmul.f32.gmra.mxu0 %v434
  %v498 = vpop.f32.mrf.mxu0
  %v499 = vadd.f32 0.0, %v498
  %500 = vmatmul.f32.gmra.mxu0 %v437
  %v501 = vpop.f32.mrf.mxu0
  %v502 = vadd.f32 0.0, %v501
  %503 = vmatmul.f32.gmra.mxu0 %v440
  %v504 = vpop.f32.mrf.mxu0
  %v505 = vadd.f32 0.0, %v504
  %506 = vdwg.mxu0
  %v508 = vsel %vm393, %v282, 0
  %v511 = vsel %vm393, %v285, 0
  %v514 = vsel %vm393, %v288, 0
  %v517 = vsel %vm393, %v291, 0
  %v520 = vsel %vm393, %v294, 0
  %v523 = vsel %vm393, %v297, 0
  %v526 = vsel %vm393, %v300, 0
  %v529 = vsel %vm393, %v303, 0
  %v532 = vsel %vm393, %v306, 0
  %v535 = vsel %vm393, %v309, 0
  %v538 = vsel %vm393, %v312, 0
  %v541 = vsel %vm393, %v315, 0
  %v544 = vsel %vm393, %v318, 0
  %v547 = vsel %vm393, %v321, 0
  %v550 = vsel %vm393, %v324, 0
  %v553 = vsel %vm393, %v327, 0
  %555 = vmatpush.msra.mxu0 0.0
  %556 = vmatpush.msra.mxu0 0.0
  %557 = vmatpush.msra.mxu0 0.0
  %558 = vmatpush.msra.mxu0 0.0
  %559 = vmatpush.msra.mxu0 0.0
  %560 = vmatpush.msra.mxu0 0.0
  %561 = vmatpush.msra.mxu0 0.0
  %562 = vmatpush.msra.mxu0 0.0
  %563 = vmatpush.msra.mxu0 %v384
  %564 = vmatpush.msra.mxu0 %v383
  %565 = vmatpush.msra.mxu0 %v382
  %566 = vmatpush.msra.mxu0 %v381
  %567 = vmatpush.msra.mxu0 %v380
  %568 = vmatpush.msra.mxu0 %v379
  %569 = vmatpush.msra.mxu0 %v378
  %570 = vmatpush.msra.mxu0 %v377
  %571 = vmatmul.f32.gmra.mxu0 %v508
  %v572 = vpop.f32.mrf.mxu0
  %v573 = vadd.f32 %v460, %v572
  %574 = vmatmul.f32.gmra.mxu0 %v511
  %v575 = vpop.f32.mrf.mxu0
  %v576 = vadd.f32 %v463, %v575
  %577 = vmatmul.f32.gmra.mxu0 %v514
  %v578 = vpop.f32.mrf.mxu0
  %v579 = vadd.f32 %v466, %v578
  %580 = vmatmul.f32.gmra.mxu0 %v517
  %v581 = vpop.f32.mrf.mxu0
  %v582 = vadd.f32 %v469, %v581
  %583 = vmatmul.f32.gmra.mxu0 %v520
  %v584 = vpop.f32.mrf.mxu0
  %v585 = vadd.f32 %v472, %v584
  %586 = vmatmul.f32.gmra.mxu0 %v523
  %v587 = vpop.f32.mrf.mxu0
  %v588 = vadd.f32 %v475, %v587
  %589 = vmatmul.f32.gmra.mxu0 %v526
  %v590 = vpop.f32.mrf.mxu0
  %v591 = vadd.f32 %v478, %v590
  %592 = vmatmul.f32.gmra.mxu0 %v529
  %v593 = vpop.f32.mrf.mxu0
  %v594 = vadd.f32 %v481, %v593
  %595 = vmatmul.f32.gmra.mxu0 %v532
  %v596 = vpop.f32.mrf.mxu0
  %v597 = vadd.f32 %v484, %v596
  %598 = vmatmul.f32.gmra.mxu0 %v535
  %v599 = vpop.f32.mrf.mxu0
  %v600 = vadd.f32 %v487, %v599
  %601 = vmatmul.f32.gmra.mxu0 %v538
  %v602 = vpop.f32.mrf.mxu0
  %v603 = vadd.f32 %v490, %v602
  %604 = vmatmul.f32.gmra.mxu0 %v541
  %v605 = vpop.f32.mrf.mxu0
  %v606 = vadd.f32 %v493, %v605
  %607 = vmatmul.f32.gmra.mxu0 %v544
  %v608 = vpop.f32.mrf.mxu0
  %v609 = vadd.f32 %v496, %v608
  %610 = vmatmul.f32.gmra.mxu0 %v547
  %v611 = vpop.f32.mrf.mxu0
  %v612 = vadd.f32 %v499, %v611
  %613 = vmatmul.f32.gmra.mxu0 %v550
  %v614 = vpop.f32.mrf.mxu0
  %v615 = vadd.f32 %v502, %v614
  %616 = vmatmul.f32.gmra.mxu0 %v553
  %v617 = vpop.f32.mrf.mxu0
  %v618 = vadd.f32 %v505, %v617
  %619 = vdwg.mxu0
  %v620 = vmul.f32 %v282, %v330
  %v621 = vmul.f32 %v285, %v333
  %v622 = vmul.f32 %v288, %v336
  %v623 = vmul.f32 %v291, %v339
  %v624 = vmul.f32 %v294, %v342
  %v625 = vmul.f32 %v297, %v345
  %v626 = vmul.f32 %v300, %v348
  %v627 = vmul.f32 %v303, %v351
  %v628 = vmul.f32 %v306, %v354
  %v629 = vmul.f32 %v309, %v357
  %v630 = vmul.f32 %v312, %v360
  %v631 = vmul.f32 %v315, %v363
  %v632 = vmul.f32 %v318, %v366
  %v633 = vmul.f32 %v321, %v369
  %v634 = vmul.f32 %v324, %v372
  %v635 = vmul.f32 %v327, %v375
  %v636 = vld [vmem:[%s7] sm:$0xff]
  %v637 = vld [vmem:[%s7 + $0x8] sm:$0xff]
  %v638 = vld [vmem:[%s7 + $0x10] sm:$0xff]
  %v639 = vld [vmem:[%s7 + $0x18] sm:$0xff]
  %v640 = vld [vmem:[%s7 + $0x20] sm:$0xff]
  %v641 = vld [vmem:[%s7 + $0x28] sm:$0xff]
  %v642 = vld [vmem:[%s7 + $0x30] sm:$0xff]
  %v643 = vld [vmem:[%s7 + $0x38] sm:$0xff]
  %v645 = vsel %vm393, %v620, 0
  %v648 = vsel %vm393, %v621, 0
  %v651 = vsel %vm393, %v622, 0
  %v654 = vsel %vm393, %v623, 0
  %v657 = vsel %vm393, %v624, 0
  %v660 = vsel %vm393, %v625, 0
  %v663 = vsel %vm393, %v626, 0
  %v666 = vsel %vm393, %v627, 0
  %v669 = vsel %vm393, %v628, 0
  %v672 = vsel %vm393, %v629, 0
  %v675 = vsel %vm393, %v630, 0
  %v678 = vsel %vm393, %v631, 0
  %v681 = vsel %vm393, %v632, 0
  %v684 = vsel %vm393, %v633, 0
  %v687 = vsel %vm393, %v634, 0
  %v690 = vsel %vm393, %v635, 0
  %692 = vmatpush.msra.mxu0 0.0
  %693 = vmatpush.msra.mxu0 0.0
  %694 = vmatpush.msra.mxu0 0.0
  %695 = vmatpush.msra.mxu0 0.0
  %696 = vmatpush.msra.mxu0 0.0
  %697 = vmatpush.msra.mxu0 0.0
  %698 = vmatpush.msra.mxu0 0.0
  %699 = vmatpush.msra.mxu0 0.0
  %700 = vmatpush.msra.mxu0 %v643
  %701 = vmatpush.msra.mxu0 %v642
  %702 = vmatpush.msra.mxu0 %v641
  %703 = vmatpush.msra.mxu0 %v640
  %704 = vmatpush.msra.mxu0 %v639
  %705 = vmatpush.msra.mxu0 %v638
  %706 = vmatpush.msra.mxu0 %v637
  %707 = vmatpush.msra.mxu0 %v636
  %708 = vmatmul.f32.gmra.mxu0 %v645
  %v709 = vpop.f32.mrf.mxu0
  %v710 = vadd.f32 0.0, %v709
  %711 = vmatmul.f32.gmra.mxu0 %v648
  %v712 = vpop.f32.mrf.mxu0
  %v713 = vadd.f32 0.0, %v712
  %714 = vmatmul.f32.gmra.mxu0 %v651
  %v715 = vpop.f32.mrf.mxu0
  %v716 = vadd.f32 0.0, %v715
  %717 = vmatmul.f32.gmra.mxu0 %v654
  %v718 = vpop.f32.mrf.mxu0
  %v719 = vadd.f32 0.0, %v718
  %720 = vmatmul.f32.gmra.mxu0 %v657
  %v721 = vpop.f32.mrf.mxu0
  %v722 = vadd.f32 0.0, %v721
  %723 = vmatmul.f32.gmra.mxu0 %v660
  %v724 = vpop.f32.mrf.mxu0
  %v725 = vadd.f32 0.0, %v724
  %726 = vmatmul.f32.gmra.mxu0 %v663
  %v727 = vpop.f32.mrf.mxu0
  %v728 = vadd.f32 0.0, %v727
  %729 = vmatmul.f32.gmra.mxu0 %v666
  %v730 = vpop.f32.mrf.mxu0
  %v731 = vadd.f32 0.0, %v730
  %732 = vmatmul.f32.gmra.mxu0 %v669
  %v733 = vpop.f32.mrf.mxu0
  %v734 = vadd.f32 0.0, %v733
  %735 = vmatmul.f32.gmra.mxu0 %v672
  %v736 = vpop.f32.mrf.mxu0
  %v737 = vadd.f32 0.0, %v736
  %738 = vmatmul.f32.gmra.mxu0 %v675
  %v739 = vpop.f32.mrf.mxu0
  %v740 = vadd.f32 0.0, %v739
  %741 = vmatmul.f32.gmra.mxu0 %v678
  %v742 = vpop.f32.mrf.mxu0
  %v743 = vadd.f32 0.0, %v742
  %744 = vmatmul.f32.gmra.mxu0 %v681
  %v745 = vpop.f32.mrf.mxu0
  %v746 = vadd.f32 0.0, %v745
  %747 = vmatmul.f32.gmra.mxu0 %v684
  %v748 = vpop.f32.mrf.mxu0
  %v749 = vadd.f32 0.0, %v748
  %750 = vmatmul.f32.gmra.mxu0 %v687
  %v751 = vpop.f32.mrf.mxu0
  %v752 = vadd.f32 0.0, %v751
  %753 = vmatmul.f32.gmra.mxu0 %v690
  %v754 = vpop.f32.mrf.mxu0
  %v755 = vadd.f32 0.0, %v754
  %756 = vdwg.mxu0
  %v757 = vadd.f32 %v573, %v710
  %v758 = vadd.f32 %v576, %v713
  %v759 = vadd.f32 %v579, %v716
  %v760 = vadd.f32 %v582, %v719
  %v761 = vadd.f32 %v585, %v722
  %v762 = vadd.f32 %v588, %v725
  %v763 = vadd.f32 %v591, %v728
  %v764 = vadd.f32 %v594, %v731
  %v765 = vadd.f32 %v597, %v734
  %v766 = vadd.f32 %v600, %v737
  %v767 = vadd.f32 %v603, %v740
  %v768 = vadd.f32 %v606, %v743
  %v769 = vadd.f32 %v609, %v746
  %v770 = vadd.f32 %v612, %v749
  %v771 = vadd.f32 %v615, %v752
  %v772 = vadd.f32 %v618, %v755
  %v773 = vld [vmem:[%s4] sm:$0xff]
  %v774 = vld [vmem:[%s4 + $0x8] sm:$0xff]
  %v775 = vld [vmem:[%s4 + $0x10] sm:$0xff]
  %v776 = vld [vmem:[%s4 + $0x18] sm:$0xff]
  %v777 = vld [vmem:[%s4 + $0x20] sm:$0xff]
  %v778 = vld [vmem:[%s4 + $0x28] sm:$0xff]
  %v779 = vld [vmem:[%s4 + $0x30] sm:$0xff]
  %v780 = vld [vmem:[%s4 + $0x38] sm:$0xff]
  %v781 = vld [vmem:[%s4 + $0x40] sm:$0xff]
  %v782 = vld [vmem:[%s4 + $0x48] sm:$0xff]
  %v783 = vld [vmem:[%s4 + $0x50] sm:$0xff]
  %v784 = vld [vmem:[%s4 + $0x58] sm:$0xff]
  %v785 = vld [vmem:[%s4 + $0x60] sm:$0xff]
  %v786 = vld [vmem:[%s4 + $0x68] sm:$0xff]
  %v787 = vld [vmem:[%s4 + $0x70] sm:$0xff]
  %v788 = vld [vmem:[%s4 + $0x78] sm:$0xff]
  %v789 = vld [vmem:[%s8] sm:$0xff]
  %v790 = vld [vmem:[%s8 + $0x8] sm:$0xff]
  %v791 = vld [vmem:[%s8 + $0x10] sm:$0xff]
  %v792 = vld [vmem:[%s8 + $0x18] sm:$0xff]
  %v793 = vld [vmem:[%s8 + $0x20] sm:$0xff]
  %v794 = vld [vmem:[%s8 + $0x28] sm:$0xff]
  %v795 = vld [vmem:[%s8 + $0x30] sm:$0xff]
  %v796 = vld [vmem:[%s8 + $0x38] sm:$0xff]
  %v798 = vsel %vm393, %v773, 0
  %v801 = vsel %vm393, %v774, 0
  %v804 = vsel %vm393, %v775, 0
  %v807 = vsel %vm393, %v776, 0
  %v810 = vsel %vm393, %v777, 0
  %v813 = vsel %vm393, %v778, 0
  %v816 = vsel %vm393, %v779, 0
  %v819 = vsel %vm393, %v780, 0
  %v822 = vsel %vm393, %v781, 0
  %v825 = vsel %vm393, %v782, 0
  %v828 = vsel %vm393, %v783, 0
  %v831 = vsel %vm393, %v784, 0
  %v834 = vsel %vm393, %v785, 0
  %v837 = vsel %vm393, %v786, 0
  %v840 = vsel %vm393, %v787, 0
  %v843 = vsel %vm393, %v788, 0
  %845 = vmatpush.msra.mxu0 0.0
  %846 = vmatpush.msra.mxu0 0.0
  %847 = vmatpush.msra.mxu0 0.0
  %848 = vmatpush.msra.mxu0 0.0
  %849 = vmatpush.msra.mxu0 0.0
  %850 = vmatpush.msra.mxu0 0.0
  %851 = vmatpush.msra.mxu0 0.0
  %852 = vmatpush.msra.mxu0 0.0
  %853 = vmatpush.msra.mxu0 %v796
  %854 = vmatpush.msra.mxu0 %v795
  %855 = vmatpush.msra.mxu0 %v794
  %856 = vmatpush.msra.mxu0 %v793
  %857 = vmatpush.msra.mxu0 %v792
  %858 = vmatpush.msra.mxu0 %v791
  %859 = vmatpush.msra.mxu0 %v790
  %860 = vmatpush.msra.mxu0 %v789
  %861 = vmatmul.f32.gmra.mxu0 %v798
  %v862 = vpop.f32.mrf.mxu0
  %v863 = vadd.f32 0.0, %v862
  %864 = vmatmul.f32.gmra.mxu0 %v801
  %v865 = vpop.f32.mrf.mxu0
  %v866 = vadd.f32 0.0, %v865
  %867 = vmatmul.f32.gmra.mxu0 %v804
  %v868 = vpop.f32.mrf.mxu0
  %v869 = vadd.f32 0.0, %v868
  %870 = vmatmul.f32.gmra.mxu0 %v807
  %v871 = vpop.f32.mrf.mxu0
  %v872 = vadd.f32 0.0, %v871
  %873 = vmatmul.f32.gmra.mxu0 %v810
  %v874 = vpop.f32.mrf.mxu0
  %v875 = vadd.f32 0.0, %v874
  %876 = vmatmul.f32.gmra.mxu0 %v813
  %v877 = vpop.f32.mrf.mxu0
  %v878 = vadd.f32 0.0, %v877
  %879 = vmatmul.f32.gmra.mxu0 %v816
  %v880 = vpop.f32.mrf.mxu0
  %v881 = vadd.f32 0.0, %v880
  %882 = vmatmul.f32.gmra.mxu0 %v819
  %v883 = vpop.f32.mrf.mxu0
  %v884 = vadd.f32 0.0, %v883
  %885 = vmatmul.f32.gmra.mxu0 %v822
  %v886 = vpop.f32.mrf.mxu0
  %v887 = vadd.f32 0.0, %v886
  %888 = vmatmul.f32.gmra.mxu0 %v825
  %v889 = vpop.f32.mrf.mxu0
  %v890 = vadd.f32 0.0, %v889
  %891 = vmatmul.f32.gmra.mxu0 %v828
  %v892 = vpop.f32.mrf.mxu0
  %v893 = vadd.f32 0.0, %v892
  %894 = vmatmul.f32.gmra.mxu0 %v831
  %v895 = vpop.f32.mrf.mxu0
  %v896 = vadd.f32 0.0, %v895
  %897 = vmatmul.f32.gmra.mxu0 %v834
  %v898 = vpop.f32.mrf.mxu0
  %v899 = vadd.f32 0.0, %v898
  %900 = vmatmul.f32.gmra.mxu0 %v837
  %v901 = vpop.f32.mrf.mxu0
  %v902 = vadd.f32 0.0, %v901
  %903 = vmatmul.f32.gmra.mxu0 %v840
  %v904 = vpop.f32.mrf.mxu0
  %v905 = vadd.f32 0.0, %v904
  %906 = vmatmul.f32.gmra.mxu0 %v843
  %v907 = vpop.f32.mrf.mxu0
  %v908 = vadd.f32 0.0, %v907
  %909 = vdwg.mxu0
  %v910 = vadd.f32 %v757, %v863
  %v911 = vadd.f32 %v758, %v866
  %v912 = vadd.f32 %v759, %v869
  %v913 = vadd.f32 %v760, %v872
  %v914 = vadd.f32 %v761, %v875
  %v915 = vadd.f32 %v762, %v878
  %v916 = vadd.f32 %v763, %v881
  %v917 = vadd.f32 %v764, %v884
  %v918 = vadd.f32 %v765, %v887
  %v919 = vadd.f32 %v766, %v890
  %v920 = vadd.f32 %v767, %v893
  %v921 = vadd.f32 %v768, %v896
  %v922 = vadd.f32 %v769, %v899
  %v923 = vadd.f32 %v770, %v902
  %v924 = vadd.f32 %v771, %v905
  %v925 = vadd.f32 %v772, %v908
  %v926 = vld [vmem:[%s9] sm:$0x1]
  %v928 = vperm.slane %v926, 0
  %v930 = vadd.f32 %v910, %v928
  %v931 = vadd.f32 %v911, %v928
  %v932 = vadd.f32 %v912, %v928
  %v933 = vadd.f32 %v913, %v928
  %v934 = vadd.f32 %v914, %v928
  %v935 = vadd.f32 %v915, %v928
  %v936 = vadd.f32 %v916, %v928
  %v937 = vadd.f32 %v917, %v928
  %v938 = vadd.f32 %v918, %v928
  %v939 = vadd.f32 %v919, %v928
  %v940 = vadd.f32 %v920, %v928
  %v941 = vadd.f32 %v921, %v928
  %v942 = vadd.f32 %v922, %v928
  %v943 = vadd.f32 %v923, %v928
  %v944 = vadd.f32 %v924, %v928
  %v945 = vadd.f32 %v925, %v928
  %v946 = vmax.f32 %v930, 0.0
  %v947 = vmax.f32 %v931, 0.0
  %v948 = vmax.f32 %v932, 0.0
  %v949 = vmax.f32 %v933, 0.0
  %v950 = vmax.f32 %v934, 0.0
  %v951 = vmax.f32 %v935, 0.0
  %v952 = vmax.f32 %v936, 0.0
  %v953 = vmax.f32 %v937, 0.0
  %v954 = vmax.f32 %v938, 0.0
  %v955 = vmax.f32 %v939, 0.0
  %v956 = vmax.f32 %v940, 0.0
  %v957 = vmax.f32 %v941, 0.0
  %v958 = vmax.f32 %v942, 0.0
  %v959 = vmax.f32 %v943, 0.0
  %v960 = vmax.f32 %v944, 0.0
  %v961 = vmax.f32 %v945, 0.0
  %v962 = vld [vmem:[%s10] sm:$0xff]
  %v963 = vld [vmem:[%s10 + $0x8] sm:$0xff]
  %v964 = vld [vmem:[%s11] sm:$0x1]
  %v966 = vperm.slane %v964, 0
  %v969 = vsel %vm167, %v946, 0
  %v972 = vsel %vm167, %v947, 0
  %v975 = vsel %vm167, %v948, 0
  %v978 = vsel %vm167, %v949, 0
  %v981 = vsel %vm167, %v950, 0
  %v984 = vsel %vm167, %v951, 0
  %v987 = vsel %vm167, %v952, 0
  %v990 = vsel %vm167, %v953, 0
  %v993 = vsel %vm167, %v954, 0
  %v996 = vsel %vm167, %v955, 0
  %v999 = vsel %vm167, %v956, 0
  %v1002 = vsel %vm167, %v957, 0
  %v1005 = vsel %vm167, %v958, 0
  %v1008 = vsel %vm167, %v959, 0
  %v1011 = vsel %vm167, %v960, 0
  %v1014 = vsel %vm167, %v961, 0
  %1016 = vmatpush.msra.mxu0 0.0
  %1017 = vmatpush.msra.mxu0 0.0
  %1018 = vmatpush.msra.mxu0 0.0
  %1019 = vmatpush.msra.mxu0 0.0
  %1020 = vmatpush.msra.mxu0 0.0
  %1021 = vmatpush.msra.mxu0 0.0
  %1022 = vmatpush.msra.mxu0 0.0
  %1023 = vmatpush.msra.mxu0 0.0
  %1024 = vmatpush.msra.mxu0 0.0
  %1025 = vmatpush.msra.mxu0 0.0
  %1026 = vmatpush.msra.mxu0 0.0
  %1027 = vmatpush.msra.mxu0 0.0
  %1028 = vmatpush.msra.mxu0 0.0
  %1029 = vmatpush.msra.mxu0 0.0
  %1030 = vmatpush.msra.mxu0 %v963
  %1031 = vmatpush.msra.mxu0 %v962
  %1032 = vmatmul.f32.gmra.mxu0 %v969
  %v1033 = vpop.f32.mrf.mxu0
  %v1034 = vadd.f32 %v966, %v1033
  %1035 = vmatmul.f32.gmra.mxu0 %v972
  %v1036 = vpop.f32.mrf.mxu0
  %v1037 = vadd.f32 %v966, %v1036
  %1038 = vmatmul.f32.gmra.mxu0 %v975
  %v1039 = vpop.f32.mrf.mxu0
  %v1040 = vadd.f32 %v966, %v1039
  %1041 = vmatmul.f32.gmra.mxu0 %v978
  %v1042 = vpop.f32.mrf.mxu0
  %v1043 = vadd.f32 %v966, %v1042
  %1044 = vmatmul.f32.gmra.mxu0 %v981
  %v1045 = vpop.f32.mrf.mxu0
  %v1046 = vadd.f32 %v966, %v1045
  %1047 = vmatmul.f32.gmra.mxu0 %v984
  %v1048 = vpop.f32.mrf.mxu0
  %v1049 = vadd.f32 %v966, %v1048
  %1050 = vmatmul.f32.gmra.mxu0 %v987
  %v1051 = vpop.f32.mrf.mxu0
  %v1052 = vadd.f32 %v966, %v1051
  %1053 = vmatmul.f32.gmra.mxu0 %v990
  %v1054 = vpop.f32.mrf.mxu0
  %v1055 = vadd.f32 %v966, %v1054
  %1056 = vmatmul.f32.gmra.mxu0 %v993
  %v1057 = vpop.f32.mrf.mxu0
  %v1058 = vadd.f32 %v966, %v1057
  %1059 = vmatmul.f32.gmra.mxu0 %v996
  %v1060 = vpop.f32.mrf.mxu0
  %v1061 = vadd.f32 %v966, %v1060
  %1062 = vmatmul.f32.gmra.mxu0 %v999
  %v1063 = vpop.f32.mrf.mxu0
  %v1064 = vadd.f32 %v966, %v1063
  %1065 = vmatmul.f32.gmra.mxu0 %v1002
  %v1066 = vpop.f32.mrf.mxu0
  %v1067 = vadd.f32 %v966, %v1066
  %1068 = vmatmul.f32.gmra.mxu0 %v1005
  %v1069 = vpop.f32.mrf.mxu0
  %v1070 = vadd.f32 %v966, %v1069
  %1071 = vmatmul.f32.gmra.mxu0 %v1008
  %v1072 = vpop.f32.mrf.mxu0
  %v1073 = vadd.f32 %v966, %v1072
  %1074 = vmatmul.f32.gmra.mxu0 %v1011
  %v1075 = vpop.f32.mrf.mxu0
  %v1076 = vadd.f32 %v966, %v1075
  %1077 = vmatmul.f32.gmra.mxu0 %v1014
  %v1078 = vpop.f32.mrf.mxu0
  %v1079 = vadd.f32 %v966, %v1078
  %1080 = vdwg.mxu0
  %v1081 = vmax.f32 %v1034, 0.0
  %v1082 = vmax.f32 %v1037, 0.0
  %v1083 = vmax.f32 %v1040, 0.0
  %v1084 = vmax.f32 %v1043, 0.0
  %v1085 = vmax.f32 %v1046, 0.0
  %v1086 = vmax.f32 %v1049, 0.0
  %v1087 = vmax.f32 %v1052, 0.0
  %v1088 = vmax.f32 %v1055, 0.0
  %v1089 = vmax.f32 %v1058, 0.0
  %v1090 = vmax.f32 %v1061, 0.0
  %v1091 = vmax.f32 %v1064, 0.0
  %v1092 = vmax.f32 %v1067, 0.0
  %v1093 = vmax.f32 %v1070, 0.0
  %v1094 = vmax.f32 %v1073, 0.0
  %v1095 = vmax.f32 %v1076, 0.0
  %v1096 = vmax.f32 %v1079, 0.0
  %v1097 = vld [vmem:[%s12] sm:$0xff]
  %v1098 = vld [vmem:[%s12 + $0x8] sm:$0xff]
  %v1099 = vld [vmem:[%s13] sm:$0x1]
  %v1101 = vperm.slane %v1099, 0
  %v1104 = vsel %vm167, %v1081, 0
  %v1107 = vsel %vm167, %v1082, 0
  %v1110 = vsel %vm167, %v1083, 0
  %v1113 = vsel %vm167, %v1084, 0
  %v1116 = vsel %vm167, %v1085, 0
  %v1119 = vsel %vm167, %v1086, 0
  %v1122 = vsel %vm167, %v1087, 0
  %v1125 = vsel %vm167, %v1088, 0
  %v1128 = vsel %vm167, %v1089, 0
  %v1131 = vsel %vm167, %v1090, 0
  %v1134 = vsel %vm167, %v1091, 0
  %v1137 = vsel %vm167, %v1092, 0
  %v1140 = vsel %vm167, %v1093, 0
  %v1143 = vsel %vm167, %v1094, 0
  %v1146 = vsel %vm167, %v1095, 0
  %v1149 = vsel %vm167, %v1096, 0
  %1151 = vmatpush.msra.mxu0 0.0
  %1152 = vmatpush.msra.mxu0 0.0
  %1153 = vmatpush.msra.mxu0 0.0
  %1154 = vmatpush.msra.mxu0 0.0
  %1155 = vmatpush.msra.mxu0 0.0
  %1156 = vmatpush.msra.mxu0 0.0
  %1157 = vmatpush.msra.mxu0 0.0
  %1158 = vmatpush.msra.mxu0 0.0
  %1159 = vmatpush.msra.mxu0 0.0
  %1160 = vmatpush.msra.mxu0 0.0
  %1161 = vmatpush.msra.mxu0 0.0
  %1162 = vmatpush.msra.mxu0 0.0
  %1163 = vmatpush.msra.mxu0 0.0
  %1164 = vmatpush.msra.mxu0 0.0
  %1165 = vmatpush.msra.mxu0 %v1098
  %1166 = vmatpush.msra.mxu0 %v1097
  %1167 = vmatmul.f32.gmra.mxu0 %v1104
  %v1168 = vpop.f32.mrf.mxu0
  %v1169 = vadd.f32 %v1101, %v1168
  %1170 = vmatmul.f32.gmra.mxu0 %v1107
  %v1171 = vpop.f32.mrf.mxu0
  %v1172 = vadd.f32 %v1101, %v1171
  %1173 = vmatmul.f32.gmra.mxu0 %v1110
  %v1174 = vpop.f32.mrf.mxu0
  %v1175 = vadd.f32 %v1101, %v1174
  %1176 = vmatmul.f32.gmra.mxu0 %v1113
  %v1177 = vpop.f32.mrf.mxu0
  %v1178 = vadd.f32 %v1101, %v1177
  %1179 = vmatmul.f32.gmra.mxu0 %v1116
  %v1180 = vpop.f32.mrf.mxu0
  %v1181 = vadd.f32 %v1101, %v1180
  %1182 = vmatmul.f32.gmra.mxu0 %v1119
  %v1183 = vpop.f32.mrf.mxu0
  %v1184 = vadd.f32 %v1101, %v1183
  %1185 = vmatmul.f32.gmra.mxu0 %v1122
  %v1186 = vpop.f32.mrf.mxu0
  %v1187 = vadd.f32 %v1101, %v1186
  %1188 = vmatmul.f32.gmra.mxu0 %v1125
  %v1189 = vpop.f32.mrf.mxu0
  %v1190 = vadd.f32 %v1101, %v1189
  %1191 = vmatmul.f32.gmra.mxu0 %v1128
  %v1192 = vpop.f32.mrf.mxu0
  %v1193 = vadd.f32 %v1101, %v1192
  %1194 = vmatmul.f32.gmra.mxu0 %v1131
  %v1195 = vpop.f32.mrf.mxu0
  %v1196 = vadd.f32 %v1101, %v1195
  %1197 = vmatmul.f32.gmra.mxu0 %v1134
  %v1198 = vpop.f32.mrf.mxu0
  %v1199 = vadd.f32 %v1101, %v1198
  %1200 = vmatmul.f32.gmra.mxu0 %v1137
  %v1201 = vpop.f32.mrf.mxu0
  %v1202 = vadd.f32 %v1101, %v1201
  %1203 = vmatmul.f32.gmra.mxu0 %v1140
  %v1204 = vpop.f32.mrf.mxu0
  %v1205 = vadd.f32 %v1101, %v1204
  %1206 = vmatmul.f32.gmra.mxu0 %v1143
  %v1207 = vpop.f32.mrf.mxu0
  %v1208 = vadd.f32 %v1101, %v1207
  %1209 = vmatmul.f32.gmra.mxu0 %v1146
  %v1210 = vpop.f32.mrf.mxu0
  %v1211 = vadd.f32 %v1101, %v1210
  %1212 = vmatmul.f32.gmra.mxu0 %v1149
  %v1213 = vpop.f32.mrf.mxu0
  %v1214 = vadd.f32 %v1101, %v1213
  %1215 = vdwg.mxu0
  %1216 = vst [vmem:[%s15] sm:$0xff] %v1169
  %1217 = vst [vmem:[%s15 + $0x8] sm:$0xff] %v1172
  %1218 = vst [vmem:[%s15 + $0x10] sm:$0xff] %v1175
  %1219 = vst [vmem:[%s15 + $0x18] sm:$0xff] %v1178
  %1220 = vst [vmem:[%s15 + $0x20] sm:$0xff] %v1181
  %1221 = vst [vmem:[%s15 + $0x28] sm:$0xff] %v1184
  %1222 = vst [vmem:[%s15 + $0x30] sm:$0xff] %v1187
  %1223 = vst [vmem:[%s15 + $0x38] sm:$0xff] %v1190
  %1224 = vst [vmem:[%s15 + $0x40] sm:$0xff] %v1193
  %1225 = vst [vmem:[%s15 + $0x48] sm:$0xff] %v1196
  %1226 = vst [vmem:[%s15 + $0x50] sm:$0xff] %v1199
  %1227 = vst [vmem:[%s15 + $0x58] sm:$0xff] %v1202
  %1228 = vst [vmem:[%s15 + $0x60] sm:$0xff] %v1205
  %1229 = vst [vmem:[%s15 + $0x68] sm:$0xff] %v1208
  %1230 = vst [vmem:[%s15 + $0x70] sm:$0xff] %v1211
  %1231 = vst [vmem:[%s15 + $0x78] sm:$0xff] %v1214
  %v1232 = vld [vmem:[%s14] sm:$0xff]
  %v1233 = vld [vmem:[%s14 + $0x8] sm:$0xff]
  %v1234 = vld [vmem:[%s14 + $0x10] sm:$0xff]
  %v1235 = vld [vmem:[%s14 + $0x18] sm:$0xff]
  %v1236 = vld [vmem:[%s14 + $0x20] sm:$0xff]
  %v1237 = vld [vmem:[%s14 + $0x28] sm:$0xff]
  %v1238 = vld [vmem:[%s14 + $0x30] sm:$0xff]
  %v1239 = vld [vmem:[%s14 + $0x38] sm:$0xff]
  %v1240 = vld [vmem:[%s14 + $0x40] sm:$0xff]
  %v1241 = vld [vmem:[%s14 + $0x48] sm:$0xff]
  %v1242 = vld [vmem:[%s14 + $0x50] sm:$0xff]
  %v1243 = vld [vmem:[%s14 + $0x58] sm:$0xff]
  %v1244 = vld [vmem:[%s14 + $0x60] sm:$0xff]
  %v1245 = vld [vmem:[%s14 + $0x68] sm:$0xff]
  %v1246 = vld [vmem:[%s14 + $0x70] sm:$0xff]
  %v1247 = vld [vmem:[%s14 + $0x78] sm:$0xff]
  %v1248 = vlaneseq
  %v1249 = vand.u32 %v1248, 127
  %vm1250 = vcmp.lt.s32.totalorder %v1249, 4
  %v1251 = vsel %vm1250, %v1169, -1e+30
  %v1252 = vsel %vm1250, %v1172, -1e+30
  %v1253 = vsel %vm1250, %v1175, -1e+30
  %v1254 = vsel %vm1250, %v1178, -1e+30
  %v1255 = vsel %vm1250, %v1181, -1e+30
  %v1256 = vsel %vm1250, %v1184, -1e+30
  %v1257 = vsel %vm1250, %v1187, -1e+30
  %v1258 = vsel %vm1250, %v1190, -1e+30
  %v1259 = vsel %vm1250, %v1193, -1e+30
  %v1260 = vsel %vm1250, %v1196, -1e+30
  %v1261 = vsel %vm1250, %v1199, -1e+30
  %v1262 = vsel %vm1250, %v1202, -1e+30
  %v1263 = vsel %vm1250, %v1205, -1e+30
  %v1264 = vsel %vm1250, %v1208, -1e+30
  %v1265 = vsel %vm1250, %v1211, -1e+30
  %v1266 = vsel %vm1250, %v1214, -1e+30
  %1267 = vmax.xlane.f32.xlu0 %v1251
  %v1268 = vpop.xlane.xlu0 %1267
  %1269 = vmax.xlane.f32.xlu0 %v1252
  %v1270 = vpop.xlane.xlu0 %1269
  %1271 = vmax.xlane.f32.xlu0 %v1253
  %v1272 = vpop.xlane.xlu0 %1271
  %1273 = vmax.xlane.f32.xlu0 %v1254
  %v1274 = vpop.xlane.xlu0 %1273
  %1275 = vmax.xlane.f32.xlu0 %v1255
  %v1276 = vpop.xlane.xlu0 %1275
  %1277 = vmax.xlane.f32.xlu0 %v1256
  %v1278 = vpop.xlane.xlu0 %1277
  %1279 = vmax.xlane.f32.xlu0 %v1257
  %v1280 = vpop.xlane.xlu0 %1279
  %1281 = vmax.xlane.f32.xlu0 %v1258
  %v1282 = vpop.xlane.xlu0 %1281
  %1283 = vmax.xlane.f32.xlu0 %v1259
  %v1284 = vpop.xlane.xlu0 %1283
  %1285 = vmax.xlane.f32.xlu0 %v1260
  %v1286 = vpop.xlane.xlu0 %1285
  %1287 = vmax.xlane.f32.xlu0 %v1261
  %v1288 = vpop.xlane.xlu0 %1287
  %1289 = vmax.xlane.f32.xlu0 %v1262
  %v1290 = vpop.xlane.xlu0 %1289
  %1291 = vmax.xlane.f32.xlu0 %v1263
  %v1292 = vpop.xlane.xlu0 %1291
  %1293 = vmax.xlane.f32.xlu0 %v1264
  %v1294 = vpop.xlane.xlu0 %1293
  %1295 = vmax.xlane.f32.xlu0 %v1265
  %v1296 = vpop.xlane.xlu0 %1295
  %1297 = vmax.xlane.f32.xlu0 %v1266
  %v1298 = vpop.xlane.xlu0 %1297
  %v1299 = vsub.f32 %v1251, %v1268
  %v1300 = vsub.f32 %v1252, %v1270
  %v1301 = vsub.f32 %v1253, %v1272
  %v1302 = vsub.f32 %v1254, %v1274
  %v1303 = vsub.f32 %v1255, %v1276
  %v1304 = vsub.f32 %v1256, %v1278
  %v1305 = vsub.f32 %v1257, %v1280
  %v1306 = vsub.f32 %v1258, %v1282
  %v1307 = vsub.f32 %v1259, %v1284
  %v1308 = vsub.f32 %v1260, %v1286
  %v1309 = vsub.f32 %v1261, %v1288
  %v1310 = vsub.f32 %v1262, %v1290
  %v1311 = vsub.f32 %v1263, %v1292
  %v1312 = vsub.f32 %v1264, %v1294
  %v1313 = vsub.f32 %v1265, %v1296
  %v1314 = vsub.f32 %v1266, %v1298
  %v1315 = vmul.f32 %v1299, 1.442695
  %v1316 = vpow.pop %v1315
  %v1317 = vmul.f32 %v1300, 1.442695
  %v1318 = vpow.pop %v1317
  %v1319 = vmul.f32 %v1301, 1.442695
  %v1320 = vpow.pop %v1319
  %v1321 = vmul.f32 %v1302, 1.442695
  %v1322 = vpow.pop %v1321
  %v1323 = vmul.f32 %v1303, 1.442695
  %v1324 = vpow.pop %v1323
  %v1325 = vmul.f32 %v1304, 1.442695
  %v1326 = vpow.pop %v1325
  %v1327 = vmul.f32 %v1305, 1.442695
  %v1328 = vpow.pop %v1327
  %v1329 = vmul.f32 %v1306, 1.442695
  %v1330 = vpow.pop %v1329
  %v1331 = vmul.f32 %v1307, 1.442695
  %v1332 = vpow.pop %v1331
  %v1333 = vmul.f32 %v1308, 1.442695
  %v1334 = vpow.pop %v1333
  %v1335 = vmul.f32 %v1309, 1.442695
  %v1336 = vpow.pop %v1335
  %v1337 = vmul.f32 %v1310, 1.442695
  %v1338 = vpow.pop %v1337
  %v1339 = vmul.f32 %v1311, 1.442695
  %v1340 = vpow.pop %v1339
  %v1341 = vmul.f32 %v1312, 1.442695
  %v1342 = vpow.pop %v1341
  %v1343 = vmul.f32 %v1313, 1.442695
  %v1344 = vpow.pop %v1343
  %v1345 = vmul.f32 %v1314, 1.442695
  %v1346 = vpow.pop %v1345
  %1347 = vadd.xlane.f32.xlu0 %v1316
  %v1348 = vpop.xlane.xlu0 %1347
  %1349 = vadd.xlane.f32.xlu0 %v1318
  %v1350 = vpop.xlane.xlu0 %1349
  %1351 = vadd.xlane.f32.xlu0 %v1320
  %v1352 = vpop.xlane.xlu0 %1351
  %1353 = vadd.xlane.f32.xlu0 %v1322
  %v1354 = vpop.xlane.xlu0 %1353
  %1355 = vadd.xlane.f32.xlu0 %v1324
  %v1356 = vpop.xlane.xlu0 %1355
  %1357 = vadd.xlane.f32.xlu0 %v1326
  %v1358 = vpop.xlane.xlu0 %1357
  %1359 = vadd.xlane.f32.xlu0 %v1328
  %v1360 = vpop.xlane.xlu0 %1359
  %1361 = vadd.xlane.f32.xlu0 %v1330
  %v1362 = vpop.xlane.xlu0 %1361
  %1363 = vadd.xlane.f32.xlu0 %v1332
  %v1364 = vpop.xlane.xlu0 %1363
  %1365 = vadd.xlane.f32.xlu0 %v1334
  %v1366 = vpop.xlane.xlu0 %1365
  %1367 = vadd.xlane.f32.xlu0 %v1336
  %v1368 = vpop.xlane.xlu0 %1367
  %1369 = vadd.xlane.f32.xlu0 %v1338
  %v1370 = vpop.xlane.xlu0 %1369
  %1371 = vadd.xlane.f32.xlu0 %v1340
  %v1372 = vpop.xlane.xlu0 %1371
  %1373 = vadd.xlane.f32.xlu0 %v1342
  %v1374 = vpop.xlane.xlu0 %1373
  %1375 = vadd.xlane.f32.xlu0 %v1344
  %v1376 = vpop.xlane.xlu0 %1375
  %1377 = vadd.xlane.f32.xlu0 %v1346
  %v1378 = vpop.xlane.xlu0 %1377
  %v1379 = vlog2.pop %v1348
  %v1380 = vmul.f32 %v1379, 0.6931472
  %v1381 = vlog2.pop %v1350
  %v1382 = vmul.f32 %v1381, 0.6931472
  %v1383 = vlog2.pop %v1352
  %v1384 = vmul.f32 %v1383, 0.6931472
  %v1385 = vlog2.pop %v1354
  %v1386 = vmul.f32 %v1385, 0.6931472
  %v1387 = vlog2.pop %v1356
  %v1388 = vmul.f32 %v1387, 0.6931472
  %v1389 = vlog2.pop %v1358
  %v1390 = vmul.f32 %v1389, 0.6931472
  %v1391 = vlog2.pop %v1360
  %v1392 = vmul.f32 %v1391, 0.6931472
  %v1393 = vlog2.pop %v1362
  %v1394 = vmul.f32 %v1393, 0.6931472
  %v1395 = vlog2.pop %v1364
  %v1396 = vmul.f32 %v1395, 0.6931472
  %v1397 = vlog2.pop %v1366
  %v1398 = vmul.f32 %v1397, 0.6931472
  %v1399 = vlog2.pop %v1368
  %v1400 = vmul.f32 %v1399, 0.6931472
  %v1401 = vlog2.pop %v1370
  %v1402 = vmul.f32 %v1401, 0.6931472
  %v1403 = vlog2.pop %v1372
  %v1404 = vmul.f32 %v1403, 0.6931472
  %v1405 = vlog2.pop %v1374
  %v1406 = vmul.f32 %v1405, 0.6931472
  %v1407 = vlog2.pop %v1376
  %v1408 = vmul.f32 %v1407, 0.6931472
  %v1409 = vlog2.pop %v1378
  %v1410 = vmul.f32 %v1409, 0.6931472
  %v1411 = vadd.f32 %v1380, %v1268
  %v1412 = vadd.f32 %v1382, %v1270
  %v1413 = vadd.f32 %v1384, %v1272
  %v1414 = vadd.f32 %v1386, %v1274
  %v1415 = vadd.f32 %v1388, %v1276
  %v1416 = vadd.f32 %v1390, %v1278
  %v1417 = vadd.f32 %v1392, %v1280
  %v1418 = vadd.f32 %v1394, %v1282
  %v1419 = vadd.f32 %v1396, %v1284
  %v1420 = vadd.f32 %v1398, %v1286
  %v1421 = vadd.f32 %v1400, %v1288
  %v1422 = vadd.f32 %v1402, %v1290
  %v1423 = vadd.f32 %v1404, %v1292
  %v1424 = vadd.f32 %v1406, %v1294
  %v1425 = vadd.f32 %v1408, %v1296
  %v1426 = vadd.f32 %v1410, %v1298
  %v1427 = vsub.f32 %v1251, %v1411
  %v1428 = vsub.f32 %v1252, %v1412
  %v1429 = vsub.f32 %v1253, %v1413
  %v1430 = vsub.f32 %v1254, %v1414
  %v1431 = vsub.f32 %v1255, %v1415
  %v1432 = vsub.f32 %v1256, %v1416
  %v1433 = vsub.f32 %v1257, %v1417
  %v1434 = vsub.f32 %v1258, %v1418
  %v1435 = vsub.f32 %v1259, %v1419
  %v1436 = vsub.f32 %v1260, %v1420
  %v1437 = vsub.f32 %v1261, %v1421
  %v1438 = vsub.f32 %v1262, %v1422
  %v1439 = vsub.f32 %v1263, %v1423
  %v1440 = vsub.f32 %v1264, %v1424
  %v1441 = vsub.f32 %v1265, %v1425
  %v1442 = vsub.f32 %v1266, %v1426
  %v1443 = vmul.f32 %v1232, %v1427
  %v1444 = vmul.f32 %v1233, %v1428
  %v1445 = vmul.f32 %v1234, %v1429
  %v1446 = vmul.f32 %v1235, %v1430
  %v1447 = vmul.f32 %v1236, %v1431
  %v1448 = vmul.f32 %v1237, %v1432
  %v1449 = vmul.f32 %v1238, %v1433
  %v1450 = vmul.f32 %v1239, %v1434
  %v1451 = vmul.f32 %v1240, %v1435
  %v1452 = vmul.f32 %v1241, %v1436
  %v1453 = vmul.f32 %v1242, %v1437
  %v1454 = vmul.f32 %v1243, %v1438
  %v1455 = vmul.f32 %v1244, %v1439
  %v1456 = vmul.f32 %v1245, %v1440
  %v1457 = vmul.f32 %v1246, %v1441
  %v1458 = vmul.f32 %v1247, %v1442
  %v1459 = vadd.f32 %v1443, %v1444
  %v1460 = vadd.f32 %v1459, %v1445
  %v1461 = vadd.f32 %v1460, %v1446
  %v1462 = vadd.f32 %v1461, %v1447
  %v1463 = vadd.f32 %v1462, %v1448
  %v1464 = vadd.f32 %v1463, %v1449
  %v1465 = vadd.f32 %v1464, %v1450
  %v1466 = vadd.f32 %v1465, %v1451
  %v1467 = vadd.f32 %v1466, %v1452
  %v1468 = vadd.f32 %v1467, %v1453
  %v1469 = vadd.f32 %v1468, %v1454
  %v1470 = vadd.f32 %v1469, %v1455
  %v1471 = vadd.f32 %v1470, %v1456
  %v1472 = vadd.f32 %v1471, %v1457
  %v1473 = vadd.f32 %v1472, %v1458
  %1474 = vadd.xlane.f32.xlu0 %v1473
  %v1475 = vpop.xlane.xlu0 %1474
  %v1476 = vrot.slane %v1475, 4
  %v1477 = vadd.f32 %v1475, %v1476
  %v1478 = vrot.slane %v1477, 2
  %v1479 = vadd.f32 %v1477, %v1478
  %v1480 = vrot.slane %v1479, 1
  %v1481 = vadd.f32 %v1479, %v1480
  %s1482 = vtos %v1481
  %s1483 = ssub.f32 0.0, %s1482
  %v1484 = vstv %s1483
  %v1485 = vadd.f32 %v1484, 0.0
  %1486 = vst [vmem:[%s16] sm:$0x1] %v1485
  // Predicated region
  $region62: #{joint_ie_forward.5} parent=0 // pred_check
    _
  $region63: #{joint_ie_forward.5} parent=0 // pred_check_branch
    %1488 = sbr.rel (0) target = $region65
  $region64: #{joint_ie_forward.5} parent=0 // pred_region
    _
  $region65: #{joint_ie_forward.5} parent=0 // pred_fallthru
    _
  // Predicated region
  $region66: #{joint_ie_forward.5} parent=0 // pred_check
    _
  $region67: #{joint_ie_forward.5} parent=0 // pred_check_branch
    %1490 = sbr.rel (0) target = $region69
  $region68: #{joint_ie_forward.5} parent=0 // pred_region
    _
  $region69: #{joint_ie_forward.5} parent=0 // pred_fallthru
    _
  // Predicated region
  $region70: #{joint_ie_forward.5} parent=0 // pred_check
    _
  $region71: #{joint_ie_forward.5} parent=0 // pred_check_branch
    %1492 = sbr.rel (0) target = $region73
  $region72: #{joint_ie_forward.5} parent=0 // pred_region
    _
  $region73: #{joint_ie_forward.5} parent=0 // pred_fallthru
    _
  // Predicated region
  $region74: #{joint_ie_forward.5} parent=0 // pred_check
    _
  $region75: #{joint_ie_forward.5} parent=0 // pred_check_branch
    %1494 = sbr.rel (0) target = $region77
  $region76: #{joint_ie_forward.5} parent=0 // pred_region
    _
  $region77: #{joint_ie_forward.5} parent=0 // pred_fallthru
    _

</llo_original>
